<compile_context>
chip_gen: v6e
topology: v6e:2x2x1
jax: 0.10.0
libtpu: 0.0.40
codegen_flags: <defaults>
</compile_context>

<pallas_src>
import jax
import jax.numpy as jnp
from jax.experimental import pallas as pl
from jax.experimental.pallas import tpu as pltpu

B = 8        # batch of trajectories
D = 1        # VdP position dimensionality (state is [z, v] -> 2*D features)
H = 32       # hidden width of the acceleration MLP (the odefunc)
T = 8        # number of integration times
N_SUB = 4    # fixed RK4 sub-steps per integration interval
K_SEL = 3    # rows selected per time step by gather(1, indices)
GW = T * K_SEL * 2 * D   # flattened gather width (= 48)

assert D == 1, "kernel is specialized to the 1-D VdP oscillator state"
# TODO(synk): torchdiffeq's adaptive dopri5 (rtol/atol = args.tol) has no clean
# Pallas equivalent; a fixed-step RK4 integrator is used instead.


def _ode_block_kernel(times_ref,     # (T,) f32 in SMEM
                      packed_ref,    # (8, 128) f32 slab: params + initial state
                      idx_ref,       # (1, GW) int32 gather indices (values in [0, B))
                      out_ref):      # (1, GW) f32 gathered result
    # --- unpack the single parameter/state slab (static VMEM views, 1 DMA) ---
    w1z = packed_ref[0:1, 0:H]          # (1, H)   fc1 weight acting on z
    w1v = packed_ref[1:2, 0:H]          # (1, H)   fc1 weight acting on v
    b1 = packed_ref[2:3, 0:H]           # (1, H)
    w2t = packed_ref[3:4, 0:H]          # (1, H)   fc2 weight (transposed)
    b2 = packed_ref[4:5, 0:1]           # (1, 1)
    z0 = packed_ref[0:B, 120:121]       # (B, 1)   initial position
    v0 = packed_ref[0:B, 121:122]       # (B, 1)   initial velocity

    # --- hoist ALL loop-invariant broadcasts once (JAX does not CSE them) ---
    w1z_b = jnp.broadcast_to(w1z, (B, H))
    w1v_b = jnp.broadcast_to(w1v, (B, H))
    b1_b = jnp.broadcast_to(b1, (B, H))
    w2t_b = jnp.broadcast_to(w2t, (B, H))
    b2_b = jnp.broadcast_to(b2, (B, H))

    def f(zb, vb):
        # SONODE dynamics with the state carried lane-broadcast as (B, H).
        # VPU mul/add + EUP tanh + XLU lane reduce + ONE lane broadcast; the
        # MXU is deliberately unused for these degenerate D=1 contractions.
        h1 = jnp.tanh(zb * w1z_b + vb * w1v_b + b1_b)              # (B, H)
        a = jnp.sum(h1 * w2t_b, axis=-1, keepdims=True)            # (B, 1)
        ab = jnp.broadcast_to(a, (B, H)) + b2_b                    # (B, H)
        return vb, ab                   # dz/dt = v, dv/dt = a

    # State carried lane-broadcast; every lane of a row holds the same value,
    # so lane 0 is the true trajectory value.
    z = jnp.broadcast_to(z0, (B, H))
    v = jnp.broadcast_to(v0, (B, H))

    # Per-time-step [z|v] columns, repeated K_SEL times to line up with the
    # flattened gather index order j = t*(K_SEL*2) + k*2 + s.
    cols = [jnp.concatenate([z0, v0] * K_SEL, axis=1)]             # t = 0

    inv_sub = 1.0 / N_SUB
    for t in range(1, T):                 # fully unrolled: single program
        h = (times_ref[t] - times_ref[t - 1]) * inv_sub
        half_h = 0.5 * h
        sixth_h = h * (1.0 / 6.0)
        for _ in range(N_SUB):            # statically unrolled RK4 sub-steps
            k1z, k1v = f(z, v)
            k2z, k2v = f(z + half_h * k1z, v + half_h * k1v)
            k3z, k3v = f(z + half_h * k2z, v + half_h * k2v)
            k4z, k4v = f(z + h * k3z, v + h * k3v)
            z = z + sixth_h * (k1z + 2.0 * k2z + 2.0 * k3z + k4z)
            v = v + sixth_h * (k1v + 2.0 * k2v + 2.0 * k3v + k4v)
        zc = z[:, 0:1]                    # (B, 1) true position at time t
        vc = v[:, 0:1]                    # (B, 1) true velocity at time t
        cols.append(jnp.concatenate([zc, vc] * K_SEL, axis=1))     # (B, 2*K_SEL)

    # --- fused torch.gather(dim=1): one-hot over batch, single output store ---
    cols_mat = jnp.concatenate(cols, axis=1)                       # (B, GW)
    idx_row = idx_ref[...]                                         # (1, GW)
    b_iota = jax.lax.broadcasted_iota(jnp.int32, (B, GW), 0)       # sublane iota
    onehot = (idx_row == b_iota).astype(jnp.float32)               # (B, GW)
    out_ref[...] = jnp.sum(onehot * cols_mat, axis=0, keepdims=True)


@jax.jit
def ode_block_forward(x, integration_times, indices, params):
    """ODEBlock.forward: odeint(odefunc, x, times) then out.gather(1, indices)."""
    w1z, w1v, b1, w2, b2 = params

    # Pack the 7 tensor inputs into one (8, 128) f32 slab -> one prologue DMA.
    packed = jnp.zeros((8, 128), jnp.float32)
    packed = packed.at[0, :H].set(w1z.reshape(H))
    packed = packed.at[1, :H].set(w1v.reshape(H))
    packed = packed.at[2, :H].set(b1.reshape(H))
    packed = packed.at[3, :H].set(w2.reshape(H))        # == w2.T for D == 1
    packed = packed.at[4, 0].set(b2.reshape(()))
    packed = packed.at[:B, 120].set(x[:, 0])            # z0
    packed = packed.at[:B, 121].set(x[:, 1])            # v0

    idx_flat = indices.reshape(1, GW).astype(jnp.int32)  # row-major (t, k, s)

    vmem = pl.BlockSpec(memory_space=pltpu.MemorySpace.VMEM)
    smem = pl.BlockSpec(memory_space=pltpu.MemorySpace.SMEM)

    res = pl.pallas_call(
        _ode_block_kernel,
        out_shape=jax.ShapeDtypeStruct((1, GW), jnp.float32),
        in_specs=[smem,     # integration times (SMEM scalars)
                  vmem,     # packed params + initial state
                  vmem],    # flattened gather indices
        out_specs=vmem,
    )(integration_times, packed, idx_flat)

    return res.reshape(T, K_SEL, 2 * D)


def _reference(x, times, indices, params):
    """Pure-JAX fixed-step RK4 reference for correctness checking."""
    w1z, w1v, b1, w2, b2 = params
    z, v = x[:, :D], x[:, D:]

    def f(z, v):
        h1 = jnp.tanh(z @ w1z + v @ w1v + b1)
        return v, h1 @ w2 + b2

    outs = [jnp.concatenate([z, v], -1)]
    for i in range(1, T):
        h = (times[i] - times[i - 1]) / N_SUB
        for _ in range(N_SUB):
            k1z, k1v = f(z, v)
            k2z, k2v = f(z + 0.5 * h * k1z, v + 0.5 * h * k1v)
            k3z, k3v = f(z + 0.5 * h * k2z, v + 0.5 * h * k2v)
            k4z, k4v = f(z + h * k3z, v + h * k3v)
            z = z + (h / 6.0) * (k1z + 2.0 * k2z + 2.0 * k3z + k4z)
            v = v + (h / 6.0) * (k1v + 2.0 * k2v + 2.0 * k3v + k4v)
        outs.append(jnp.concatenate([z, v], -1))
    out = jnp.stack(outs, 0)
    return jnp.take_along_axis(out, indices, axis=1)


if __name__ == "__main__":
    key = jax.random.PRNGKey(0)
    ks = jax.random.split(key, 8)

    # initial state x = [z0 | v0], shape (B, 2*D)
    x = jax.random.normal(ks[0], (B, 2 * D), jnp.float32)
    integration_times = jnp.linspace(0.0, 1.0, T).astype(jnp.float32)
    # gather(dim=1) indices, shape (T, K_SEL, 2*D), values in [0, B)
    indices = jax.random.randint(ks[1], (T, K_SEL, 2 * D), 0, B).astype(jnp.int32)

    # deterministic odefunc parameters: fc1 = Linear(2*D, H), fc2 = Linear(H, D)
    bound1 = 1.0 / (2 * D) ** 0.5
    bound2 = 1.0 / H ** 0.5
    w1z = jax.random.uniform(ks[2], (D, H), jnp.float32, -bound1, bound1)
    w1v = jax.random.uniform(ks[3], (D, H), jnp.float32, -bound1, bound1)
    b1 = jax.random.uniform(ks[4], (1, H), jnp.float32, -bound1, bound1)
    w2 = jax.random.uniform(ks[5], (H, D), jnp.float32, -bound2, bound2)
    b2 = jax.random.uniform(ks[6], (1, D), jnp.float32, -bound2, bound2)
    params = (w1z, w1v, b1, w2, b2)

    out = ode_block_forward(x, integration_times, indices, params)
    out = jax.block_until_ready(out)

    ref = _reference(x, integration_times, indices, params)
    assert out.shape == (T, K_SEL, 2 * D)
    assert jnp.allclose(out, ref, atol=1e-4), "Pallas kernel mismatch vs JAX reference"

    print("KERNEL_OK")
</pallas_src>

<mosaic_0001>
module attributes {stable_mosaic.version = 11 : i64} {
  func.func @_ode_block_kernel(%arg0: memref<8xf32, #tpu.memory_space<smem>>, %arg1: memref<8x128xf32, #tpu.memory_space<vmem>>, %arg2: memref<1x48xi32, #tpu.memory_space<vmem>>, %arg3: memref<1x48xf32, #tpu.memory_space<vmem>>) attributes {dimension_semantics = [], scalar_prefetch = 0 : i64, scratch_operands = 0 : i64, tpu.core_type = #tpu.core_type<tc>} {
    %c0 = arith.constant 0 : index
    %c0_0 = arith.constant 0 : index
    %0 = vector.load %arg1[%c0, %c0_0] : memref<8x128xf32, #tpu.memory_space<vmem>>, vector<1x32xf32>
    %c1 = arith.constant 1 : index
    %c0_1 = arith.constant 0 : index
    %1 = vector.load %arg1[%c1, %c0_1] : memref<8x128xf32, #tpu.memory_space<vmem>>, vector<1x32xf32>
    %c2 = arith.constant 2 : index
    %c0_2 = arith.constant 0 : index
    %2 = vector.load %arg1[%c2, %c0_2] : memref<8x128xf32, #tpu.memory_space<vmem>>, vector<1x32xf32>
    %c3 = arith.constant 3 : index
    %c0_3 = arith.constant 0 : index
    %3 = vector.load %arg1[%c3, %c0_3] : memref<8x128xf32, #tpu.memory_space<vmem>>, vector<1x32xf32>
    %c4 = arith.constant 4 : index
    %c0_4 = arith.constant 0 : index
    %4 = vector.load %arg1[%c4, %c0_4] : memref<8x128xf32, #tpu.memory_space<vmem>>, vector<1x1xf32>
    %c0_5 = arith.constant 0 : index
    %c120 = arith.constant 120 : index
    %5 = vector.load %arg1[%c0_5, %c120] : memref<8x128xf32, #tpu.memory_space<vmem>>, vector<8x1xf32>
    %c0_6 = arith.constant 0 : index
    %c121 = arith.constant 121 : index
    %6 = vector.load %arg1[%c0_6, %c121] : memref<8x128xf32, #tpu.memory_space<vmem>>, vector<8x1xf32>
    %7 = vector.shape_cast %0 : vector<1x32xf32> to vector<1x32xf32>
    %8 = vector.broadcast %7 : vector<1x32xf32> to vector<8x32xf32>
    %9 = vector.shape_cast %1 : vector<1x32xf32> to vector<1x32xf32>
    %10 = vector.broadcast %9 : vector<1x32xf32> to vector<8x32xf32>
    %11 = vector.shape_cast %2 : vector<1x32xf32> to vector<1x32xf32>
    %12 = vector.broadcast %11 : vector<1x32xf32> to vector<8x32xf32>
    %13 = vector.shape_cast %3 : vector<1x32xf32> to vector<1x32xf32>
    %14 = vector.broadcast %13 : vector<1x32xf32> to vector<8x32xf32>
    %15 = vector.shape_cast %4 : vector<1x1xf32> to vector<1x1xf32>
    %16 = vector.broadcast %15 : vector<1x1xf32> to vector<8x32xf32>
    %17 = vector.shape_cast %5 : vector<8x1xf32> to vector<8x1xf32>
    %18 = vector.broadcast %17 : vector<8x1xf32> to vector<8x32xf32>
    %19 = vector.shape_cast %6 : vector<8x1xf32> to vector<8x1xf32>
    %20 = vector.broadcast %19 : vector<8x1xf32> to vector<8x32xf32>
    %21 = tpu.concatenate %5, %6, %5, %6, %5, %6 in 1 : vector<8x1xf32>, vector<8x1xf32>, vector<8x1xf32>, vector<8x1xf32>, vector<8x1xf32>, vector<8x1xf32> -> vector<8x6xf32>
    %c1_7 = arith.constant 1 : index
    %22 = memref.load %arg0[%c1_7] : memref<8xf32, #tpu.memory_space<smem>>
    %c0_8 = arith.constant 0 : index
    %23 = memref.load %arg0[%c0_8] : memref<8xf32, #tpu.memory_space<smem>>
    %24 = arith.subf %22, %23 : f32
    %cst = arith.constant 2.500000e-01 : f32
    %25 = arith.mulf %24, %cst : f32
    %cst_9 = arith.constant 5.000000e-01 : f32
    %26 = arith.mulf %cst_9, %25 : f32
    %cst_10 = arith.constant 0.166666672 : f32
    %27 = arith.mulf %25, %cst_10 : f32
    %28 = arith.mulf %18, %8 : vector<8x32xf32>
    %29 = arith.mulf %20, %10 : vector<8x32xf32>
    %30 = arith.addf %28, %29 : vector<8x32xf32>
    %31 = arith.addf %30, %12 : vector<8x32xf32>
    %32 = math.tanh %31 : vector<8x32xf32>
    %33 = arith.mulf %32, %14 : vector<8x32xf32>
    %cst_11 = arith.constant dense<0.000000e+00> : vector<8xf32>
    %34 = vector.multi_reduction <add>, %33, %cst_11 [1] : vector<8x32xf32> to vector<8xf32>
    %35 = vector.shape_cast %34 : vector<8xf32> to vector<8x1xf32>
    %36 = vector.shape_cast %35 : vector<8x1xf32> to vector<8x1xf32>
    %37 = vector.broadcast %36 : vector<8x1xf32> to vector<8x32xf32>
    %38 = arith.addf %37, %16 : vector<8x32xf32>
    %39 = vector.broadcast %26 : f32 to vector<8x32xf32>
    %40 = arith.mulf %39, %20 : vector<8x32xf32>
    %41 = arith.addf %18, %40 : vector<8x32xf32>
    %42 = vector.broadcast %26 : f32 to vector<8x32xf32>
    %43 = arith.mulf %42, %38 : vector<8x32xf32>
    %44 = arith.addf %20, %43 : vector<8x32xf32>
    %45 = arith.mulf %41, %8 : vector<8x32xf32>
    %46 = arith.mulf %44, %10 : vector<8x32xf32>
    %47 = arith.addf %45, %46 : vector<8x32xf32>
    %48 = arith.addf %47, %12 : vector<8x32xf32>
    %49 = math.tanh %48 : vector<8x32xf32>
    %50 = arith.mulf %49, %14 : vector<8x32xf32>
    %cst_12 = arith.constant dense<0.000000e+00> : vector<8xf32>
    %51 = vector.multi_reduction <add>, %50, %cst_12 [1] : vector<8x32xf32> to vector<8xf32>
    %52 = vector.shape_cast %51 : vector<8xf32> to vector<8x1xf32>
    %53 = vector.shape_cast %52 : vector<8x1xf32> to vector<8x1xf32>
    %54 = vector.broadcast %53 : vector<8x1xf32> to vector<8x32xf32>
    %55 = arith.addf %54, %16 : vector<8x32xf32>
    %56 = vector.broadcast %26 : f32 to vector<8x32xf32>
    %57 = arith.mulf %56, %44 : vector<8x32xf32>
    %58 = arith.addf %18, %57 : vector<8x32xf32>
    %59 = vector.broadcast %26 : f32 to vector<8x32xf32>
    %60 = arith.mulf %59, %55 : vector<8x32xf32>
    %61 = arith.addf %20, %60 : vector<8x32xf32>
    %62 = arith.mulf %58, %8 : vector<8x32xf32>
    %63 = arith.mulf %61, %10 : vector<8x32xf32>
    %64 = arith.addf %62, %63 : vector<8x32xf32>
    %65 = arith.addf %64, %12 : vector<8x32xf32>
    %66 = math.tanh %65 : vector<8x32xf32>
    %67 = arith.mulf %66, %14 : vector<8x32xf32>
    %cst_13 = arith.constant dense<0.000000e+00> : vector<8xf32>
    %68 = vector.multi_reduction <add>, %67, %cst_13 [1] : vector<8x32xf32> to vector<8xf32>
    %69 = vector.shape_cast %68 : vector<8xf32> to vector<8x1xf32>
    %70 = vector.shape_cast %69 : vector<8x1xf32> to vector<8x1xf32>
    %71 = vector.broadcast %70 : vector<8x1xf32> to vector<8x32xf32>
    %72 = arith.addf %71, %16 : vector<8x32xf32>
    %73 = vector.broadcast %25 : f32 to vector<8x32xf32>
    %74 = arith.mulf %73, %61 : vector<8x32xf32>
    %75 = arith.addf %18, %74 : vector<8x32xf32>
    %76 = vector.broadcast %25 : f32 to vector<8x32xf32>
    %77 = arith.mulf %76, %72 : vector<8x32xf32>
    %78 = arith.addf %20, %77 : vector<8x32xf32>
    %79 = arith.mulf %75, %8 : vector<8x32xf32>
    %80 = arith.mulf %78, %10 : vector<8x32xf32>
    %81 = arith.addf %79, %80 : vector<8x32xf32>
    %82 = arith.addf %81, %12 : vector<8x32xf32>
    %83 = math.tanh %82 : vector<8x32xf32>
    %84 = arith.mulf %83, %14 : vector<8x32xf32>
    %cst_14 = arith.constant dense<0.000000e+00> : vector<8xf32>
    %85 = vector.multi_reduction <add>, %84, %cst_14 [1] : vector<8x32xf32> to vector<8xf32>
    %86 = vector.shape_cast %85 : vector<8xf32> to vector<8x1xf32>
    %87 = vector.shape_cast %86 : vector<8x1xf32> to vector<8x1xf32>
    %88 = vector.broadcast %87 : vector<8x1xf32> to vector<8x32xf32>
    %89 = arith.addf %88, %16 : vector<8x32xf32>
    %cst_15 = arith.constant 2.000000e+00 : f32
    %90 = vector.broadcast %cst_15 : f32 to vector<8x32xf32>
    %91 = arith.mulf %90, %44 : vector<8x32xf32>
    %92 = arith.addf %20, %91 : vector<8x32xf32>
    %cst_16 = arith.constant 2.000000e+00 : f32
    %93 = vector.broadcast %cst_16 : f32 to vector<8x32xf32>
    %94 = arith.mulf %93, %61 : vector<8x32xf32>
    %95 = arith.addf %92, %94 : vector<8x32xf32>
    %96 = arith.addf %95, %78 : vector<8x32xf32>
    %97 = vector.broadcast %27 : f32 to vector<8x32xf32>
    %98 = arith.mulf %97, %96 : vector<8x32xf32>
    %99 = arith.addf %18, %98 : vector<8x32xf32>
    %cst_17 = arith.constant 2.000000e+00 : f32
    %100 = vector.broadcast %cst_17 : f32 to vector<8x32xf32>
    %101 = arith.mulf %100, %55 : vector<8x32xf32>
    %102 = arith.addf %38, %101 : vector<8x32xf32>
    %cst_18 = arith.constant 2.000000e+00 : f32
    %103 = vector.broadcast %cst_18 : f32 to vector<8x32xf32>
    %104 = arith.mulf %103, %72 : vector<8x32xf32>
    %105 = arith.addf %102, %104 : vector<8x32xf32>
    %106 = arith.addf %105, %89 : vector<8x32xf32>
    %107 = vector.broadcast %27 : f32 to vector<8x32xf32>
    %108 = arith.mulf %107, %106 : vector<8x32xf32>
    %109 = arith.addf %20, %108 : vector<8x32xf32>
    %110 = arith.mulf %99, %8 : vector<8x32xf32>
    %111 = arith.mulf %109, %10 : vector<8x32xf32>
    %112 = arith.addf %110, %111 : vector<8x32xf32>
    %113 = arith.addf %112, %12 : vector<8x32xf32>
    %114 = math.tanh %113 : vector<8x32xf32>
    %115 = arith.mulf %114, %14 : vector<8x32xf32>
    %cst_19 = arith.constant dense<0.000000e+00> : vector<8xf32>
    %116 = vector.multi_reduction <add>, %115, %cst_19 [1] : vector<8x32xf32> to vector<8xf32>
    %117 = vector.shape_cast %116 : vector<8xf32> to vector<8x1xf32>
    %118 = vector.shape_cast %117 : vector<8x1xf32> to vector<8x1xf32>
    %119 = vector.broadcast %118 : vector<8x1xf32> to vector<8x32xf32>
    %120 = arith.addf %119, %16 : vector<8x32xf32>
    %121 = vector.broadcast %26 : f32 to vector<8x32xf32>
    %122 = arith.mulf %121, %109 : vector<8x32xf32>
    %123 = arith.addf %99, %122 : vector<8x32xf32>
    %124 = vector.broadcast %26 : f32 to vector<8x32xf32>
    %125 = arith.mulf %124, %120 : vector<8x32xf32>
    %126 = arith.addf %109, %125 : vector<8x32xf32>
    %127 = arith.mulf %123, %8 : vector<8x32xf32>
    %128 = arith.mulf %126, %10 : vector<8x32xf32>
    %129 = arith.addf %127, %128 : vector<8x32xf32>
    %130 = arith.addf %129, %12 : vector<8x32xf32>
    %131 = math.tanh %130 : vector<8x32xf32>
    %132 = arith.mulf %131, %14 : vector<8x32xf32>
    %cst_20 = arith.constant dense<0.000000e+00> : vector<8xf32>
    %133 = vector.multi_reduction <add>, %132, %cst_20 [1] : vector<8x32xf32> to vector<8xf32>
    %134 = vector.shape_cast %133 : vector<8xf32> to vector<8x1xf32>
    %135 = vector.shape_cast %134 : vector<8x1xf32> to vector<8x1xf32>
    %136 = vector.broadcast %135 : vector<8x1xf32> to vector<8x32xf32>
    %137 = arith.addf %136, %16 : vector<8x32xf32>
    %138 = vector.broadcast %26 : f32 to vector<8x32xf32>
    %139 = arith.mulf %138, %126 : vector<8x32xf32>
    %140 = arith.addf %99, %139 : vector<8x32xf32>
    %141 = vector.broadcast %26 : f32 to vector<8x32xf32>
    %142 = arith.mulf %141, %137 : vector<8x32xf32>
    %143 = arith.addf %109, %142 : vector<8x32xf32>
    %144 = arith.mulf %140, %8 : vector<8x32xf32>
    %145 = arith.mulf %143, %10 : vector<8x32xf32>
    %146 = arith.addf %144, %145 : vector<8x32xf32>
    %147 = arith.addf %146, %12 : vector<8x32xf32>
    %148 = math.tanh %147 : vector<8x32xf32>
    %149 = arith.mulf %148, %14 : vector<8x32xf32>
    %cst_21 = arith.constant dense<0.000000e+00> : vector<8xf32>
    %150 = vector.multi_reduction <add>, %149, %cst_21 [1] : vector<8x32xf32> to vector<8xf32>
    %151 = vector.shape_cast %150 : vector<8xf32> to vector<8x1xf32>
    %152 = vector.shape_cast %151 : vector<8x1xf32> to vector<8x1xf32>
    %153 = vector.broadcast %152 : vector<8x1xf32> to vector<8x32xf32>
    %154 = arith.addf %153, %16 : vector<8x32xf32>
    %155 = vector.broadcast %25 : f32 to vector<8x32xf32>
    %156 = arith.mulf %155, %143 : vector<8x32xf32>
    %157 = arith.addf %99, %156 : vector<8x32xf32>
    %158 = vector.broadcast %25 : f32 to vector<8x32xf32>
    %159 = arith.mulf %158, %154 : vector<8x32xf32>
    %160 = arith.addf %109, %159 : vector<8x32xf32>
    %161 = arith.mulf %157, %8 : vector<8x32xf32>
    %162 = arith.mulf %160, %10 : vector<8x32xf32>
    %163 = arith.addf %161, %162 : vector<8x32xf32>
    %164 = arith.addf %163, %12 : vector<8x32xf32>
    %165 = math.tanh %164 : vector<8x32xf32>
    %166 = arith.mulf %165, %14 : vector<8x32xf32>
    %cst_22 = arith.constant dense<0.000000e+00> : vector<8xf32>
    %167 = vector.multi_reduction <add>, %166, %cst_22 [1] : vector<8x32xf32> to vector<8xf32>
    %168 = vector.shape_cast %167 : vector<8xf32> to vector<8x1xf32>
    %169 = vector.shape_cast %168 : vector<8x1xf32> to vector<8x1xf32>
    %170 = vector.broadcast %169 : vector<8x1xf32> to vector<8x32xf32>
    %171 = arith.addf %170, %16 : vector<8x32xf32>
    %cst_23 = arith.constant 2.000000e+00 : f32
    %172 = vector.broadcast %cst_23 : f32 to vector<8x32xf32>
    %173 = arith.mulf %172, %126 : vector<8x32xf32>
    %174 = arith.addf %109, %173 : vector<8x32xf32>
    %cst_24 = arith.constant 2.000000e+00 : f32
    %175 = vector.broadcast %cst_24 : f32 to vector<8x32xf32>
    %176 = arith.mulf %175, %143 : vector<8x32xf32>
    %177 = arith.addf %174, %176 : vector<8x32xf32>
    %178 = arith.addf %177, %160 : vector<8x32xf32>
    %179 = vector.broadcast %27 : f32 to vector<8x32xf32>
    %180 = arith.mulf %179, %178 : vector<8x32xf32>
    %181 = arith.addf %99, %180 : vector<8x32xf32>
    %cst_25 = arith.constant 2.000000e+00 : f32
    %182 = vector.broadcast %cst_25 : f32 to vector<8x32xf32>
    %183 = arith.mulf %182, %137 : vector<8x32xf32>
    %184 = arith.addf %120, %183 : vector<8x32xf32>
    %cst_26 = arith.constant 2.000000e+00 : f32
    %185 = vector.broadcast %cst_26 : f32 to vector<8x32xf32>
    %186 = arith.mulf %185, %154 : vector<8x32xf32>
    %187 = arith.addf %184, %186 : vector<8x32xf32>
    %188 = arith.addf %187, %171 : vector<8x32xf32>
    %189 = vector.broadcast %27 : f32 to vector<8x32xf32>
    %190 = arith.mulf %189, %188 : vector<8x32xf32>
    %191 = arith.addf %109, %190 : vector<8x32xf32>
    %192 = arith.mulf %181, %8 : vector<8x32xf32>
    %193 = arith.mulf %191, %10 : vector<8x32xf32>
    %194 = arith.addf %192, %193 : vector<8x32xf32>
    %195 = arith.addf %194, %12 : vector<8x32xf32>
    %196 = math.tanh %195 : vector<8x32xf32>
    %197 = arith.mulf %196, %14 : vector<8x32xf32>
    %cst_27 = arith.constant dense<0.000000e+00> : vector<8xf32>
    %198 = vector.multi_reduction <add>, %197, %cst_27 [1] : vector<8x32xf32> to vector<8xf32>
    %199 = vector.shape_cast %198 : vector<8xf32> to vector<8x1xf32>
    %200 = vector.shape_cast %199 : vector<8x1xf32> to vector<8x1xf32>
    %201 = vector.broadcast %200 : vector<8x1xf32> to vector<8x32xf32>
    %202 = arith.addf %201, %16 : vector<8x32xf32>
    %203 = vector.broadcast %26 : f32 to vector<8x32xf32>
    %204 = arith.mulf %203, %191 : vector<8x32xf32>
    %205 = arith.addf %181, %204 : vector<8x32xf32>
    %206 = vector.broadcast %26 : f32 to vector<8x32xf32>
    %207 = arith.mulf %206, %202 : vector<8x32xf32>
    %208 = arith.addf %191, %207 : vector<8x32xf32>
    %209 = arith.mulf %205, %8 : vector<8x32xf32>
    %210 = arith.mulf %208, %10 : vector<8x32xf32>
    %211 = arith.addf %209, %210 : vector<8x32xf32>
    %212 = arith.addf %211, %12 : vector<8x32xf32>
    %213 = math.tanh %212 : vector<8x32xf32>
    %214 = arith.mulf %213, %14 : vector<8x32xf32>
    %cst_28 = arith.constant dense<0.000000e+00> : vector<8xf32>
    %215 = vector.multi_reduction <add>, %214, %cst_28 [1] : vector<8x32xf32> to vector<8xf32>
    %216 = vector.shape_cast %215 : vector<8xf32> to vector<8x1xf32>
    %217 = vector.shape_cast %216 : vector<8x1xf32> to vector<8x1xf32>
    %218 = vector.broadcast %217 : vector<8x1xf32> to vector<8x32xf32>
    %219 = arith.addf %218, %16 : vector<8x32xf32>
    %220 = vector.broadcast %26 : f32 to vector<8x32xf32>
    %221 = arith.mulf %220, %208 : vector<8x32xf32>
    %222 = arith.addf %181, %221 : vector<8x32xf32>
    %223 = vector.broadcast %26 : f32 to vector<8x32xf32>
    %224 = arith.mulf %223, %219 : vector<8x32xf32>
    %225 = arith.addf %191, %224 : vector<8x32xf32>
    %226 = arith.mulf %222, %8 : vector<8x32xf32>
    %227 = arith.mulf %225, %10 : vector<8x32xf32>
    %228 = arith.addf %226, %227 : vector<8x32xf32>
    %229 = arith.addf %228, %12 : vector<8x32xf32>
    %230 = math.tanh %229 : vector<8x32xf32>
    %231 = arith.mulf %230, %14 : vector<8x32xf32>
    %cst_29 = arith.constant dense<0.000000e+00> : vector<8xf32>
    %232 = vector.multi_reduction <add>, %231, %cst_29 [1] : vector<8x32xf32> to vector<8xf32>
    %233 = vector.shape_cast %232 : vector<8xf32> to vector<8x1xf32>
    %234 = vector.shape_cast %233 : vector<8x1xf32> to vector<8x1xf32>
    %235 = vector.broadcast %234 : vector<8x1xf32> to vector<8x32xf32>
    %236 = arith.addf %235, %16 : vector<8x32xf32>
    %237 = vector.broadcast %25 : f32 to vector<8x32xf32>
    %238 = arith.mulf %237, %225 : vector<8x32xf32>
    %239 = arith.addf %181, %238 : vector<8x32xf32>
    %240 = vector.broadcast %25 : f32 to vector<8x32xf32>
    %241 = arith.mulf %240, %236 : vector<8x32xf32>
    %242 = arith.addf %191, %241 : vector<8x32xf32>
    %243 = arith.mulf %239, %8 : vector<8x32xf32>
    %244 = arith.mulf %242, %10 : vector<8x32xf32>
    %245 = arith.addf %243, %244 : vector<8x32xf32>
    %246 = arith.addf %245, %12 : vector<8x32xf32>
    %247 = math.tanh %246 : vector<8x32xf32>
    %248 = arith.mulf %247, %14 : vector<8x32xf32>
    %cst_30 = arith.constant dense<0.000000e+00> : vector<8xf32>
    %249 = vector.multi_reduction <add>, %248, %cst_30 [1] : vector<8x32xf32> to vector<8xf32>
    %250 = vector.shape_cast %249 : vector<8xf32> to vector<8x1xf32>
    %251 = vector.shape_cast %250 : vector<8x1xf32> to vector<8x1xf32>
    %252 = vector.broadcast %251 : vector<8x1xf32> to vector<8x32xf32>
    %253 = arith.addf %252, %16 : vector<8x32xf32>
    %cst_31 = arith.constant 2.000000e+00 : f32
    %254 = vector.broadcast %cst_31 : f32 to vector<8x32xf32>
    %255 = arith.mulf %254, %208 : vector<8x32xf32>
    %256 = arith.addf %191, %255 : vector<8x32xf32>
    %cst_32 = arith.constant 2.000000e+00 : f32
    %257 = vector.broadcast %cst_32 : f32 to vector<8x32xf32>
    %258 = arith.mulf %257, %225 : vector<8x32xf32>
    %259 = arith.addf %256, %258 : vector<8x32xf32>
    %260 = arith.addf %259, %242 : vector<8x32xf32>
    %261 = vector.broadcast %27 : f32 to vector<8x32xf32>
    %262 = arith.mulf %261, %260 : vector<8x32xf32>
    %263 = arith.addf %181, %262 : vector<8x32xf32>
    %cst_33 = arith.constant 2.000000e+00 : f32
    %264 = vector.broadcast %cst_33 : f32 to vector<8x32xf32>
    %265 = arith.mulf %264, %219 : vector<8x32xf32>
    %266 = arith.addf %202, %265 : vector<8x32xf32>
    %cst_34 = arith.constant 2.000000e+00 : f32
    %267 = vector.broadcast %cst_34 : f32 to vector<8x32xf32>
    %268 = arith.mulf %267, %236 : vector<8x32xf32>
    %269 = arith.addf %266, %268 : vector<8x32xf32>
    %270 = arith.addf %269, %253 : vector<8x32xf32>
    %271 = vector.broadcast %27 : f32 to vector<8x32xf32>
    %272 = arith.mulf %271, %270 : vector<8x32xf32>
    %273 = arith.addf %191, %272 : vector<8x32xf32>
    %274 = arith.mulf %263, %8 : vector<8x32xf32>
    %275 = arith.mulf %273, %10 : vector<8x32xf32>
    %276 = arith.addf %274, %275 : vector<8x32xf32>
    %277 = arith.addf %276, %12 : vector<8x32xf32>
    %278 = math.tanh %277 : vector<8x32xf32>
    %279 = arith.mulf %278, %14 : vector<8x32xf32>
    %cst_35 = arith.constant dense<0.000000e+00> : vector<8xf32>
    %280 = vector.multi_reduction <add>, %279, %cst_35 [1] : vector<8x32xf32> to vector<8xf32>
    %281 = vector.shape_cast %280 : vector<8xf32> to vector<8x1xf32>
    %282 = vector.shape_cast %281 : vector<8x1xf32> to vector<8x1xf32>
    %283 = vector.broadcast %282 : vector<8x1xf32> to vector<8x32xf32>
    %284 = arith.addf %283, %16 : vector<8x32xf32>
    %285 = vector.broadcast %26 : f32 to vector<8x32xf32>
    %286 = arith.mulf %285, %273 : vector<8x32xf32>
    %287 = arith.addf %263, %286 : vector<8x32xf32>
    %288 = vector.broadcast %26 : f32 to vector<8x32xf32>
    %289 = arith.mulf %288, %284 : vector<8x32xf32>
    %290 = arith.addf %273, %289 : vector<8x32xf32>
    %291 = arith.mulf %287, %8 : vector<8x32xf32>
    %292 = arith.mulf %290, %10 : vector<8x32xf32>
    %293 = arith.addf %291, %292 : vector<8x32xf32>
    %294 = arith.addf %293, %12 : vector<8x32xf32>
    %295 = math.tanh %294 : vector<8x32xf32>
    %296 = arith.mulf %295, %14 : vector<8x32xf32>
    %cst_36 = arith.constant dense<0.000000e+00> : vector<8xf32>
    %297 = vector.multi_reduction <add>, %296, %cst_36 [1] : vector<8x32xf32> to vector<8xf32>
    %298 = vector.shape_cast %297 : vector<8xf32> to vector<8x1xf32>
    %299 = vector.shape_cast %298 : vector<8x1xf32> to vector<8x1xf32>
    %300 = vector.broadcast %299 : vector<8x1xf32> to vector<8x32xf32>
    %301 = arith.addf %300, %16 : vector<8x32xf32>
    %302 = vector.broadcast %26 : f32 to vector<8x32xf32>
    %303 = arith.mulf %302, %290 : vector<8x32xf32>
    %304 = arith.addf %263, %303 : vector<8x32xf32>
    %305 = vector.broadcast %26 : f32 to vector<8x32xf32>
    %306 = arith.mulf %305, %301 : vector<8x32xf32>
    %307 = arith.addf %273, %306 : vector<8x32xf32>
    %308 = arith.mulf %304, %8 : vector<8x32xf32>
    %309 = arith.mulf %307, %10 : vector<8x32xf32>
    %310 = arith.addf %308, %309 : vector<8x32xf32>
    %311 = arith.addf %310, %12 : vector<8x32xf32>
    %312 = math.tanh %311 : vector<8x32xf32>
    %313 = arith.mulf %312, %14 : vector<8x32xf32>
    %cst_37 = arith.constant dense<0.000000e+00> : vector<8xf32>
    %314 = vector.multi_reduction <add>, %313, %cst_37 [1] : vector<8x32xf32> to vector<8xf32>
    %315 = vector.shape_cast %314 : vector<8xf32> to vector<8x1xf32>
    %316 = vector.shape_cast %315 : vector<8x1xf32> to vector<8x1xf32>
    %317 = vector.broadcast %316 : vector<8x1xf32> to vector<8x32xf32>
    %318 = arith.addf %317, %16 : vector<8x32xf32>
    %319 = vector.broadcast %25 : f32 to vector<8x32xf32>
    %320 = arith.mulf %319, %307 : vector<8x32xf32>
    %321 = arith.addf %263, %320 : vector<8x32xf32>
    %322 = vector.broadcast %25 : f32 to vector<8x32xf32>
    %323 = arith.mulf %322, %318 : vector<8x32xf32>
    %324 = arith.addf %273, %323 : vector<8x32xf32>
    %325 = arith.mulf %321, %8 : vector<8x32xf32>
    %326 = arith.mulf %324, %10 : vector<8x32xf32>
    %327 = arith.addf %325, %326 : vector<8x32xf32>
    %328 = arith.addf %327, %12 : vector<8x32xf32>
    %329 = math.tanh %328 : vector<8x32xf32>
    %330 = arith.mulf %329, %14 : vector<8x32xf32>
    %cst_38 = arith.constant dense<0.000000e+00> : vector<8xf32>
    %331 = vector.multi_reduction <add>, %330, %cst_38 [1] : vector<8x32xf32> to vector<8xf32>
    %332 = vector.shape_cast %331 : vector<8xf32> to vector<8x1xf32>
    %333 = vector.shape_cast %332 : vector<8x1xf32> to vector<8x1xf32>
    %334 = vector.broadcast %333 : vector<8x1xf32> to vector<8x32xf32>
    %335 = arith.addf %334, %16 : vector<8x32xf32>
    %cst_39 = arith.constant 2.000000e+00 : f32
    %336 = vector.broadcast %cst_39 : f32 to vector<8x32xf32>
    %337 = arith.mulf %336, %290 : vector<8x32xf32>
    %338 = arith.addf %273, %337 : vector<8x32xf32>
    %cst_40 = arith.constant 2.000000e+00 : f32
    %339 = vector.broadcast %cst_40 : f32 to vector<8x32xf32>
    %340 = arith.mulf %339, %307 : vector<8x32xf32>
    %341 = arith.addf %338, %340 : vector<8x32xf32>
    %342 = arith.addf %341, %324 : vector<8x32xf32>
    %343 = vector.broadcast %27 : f32 to vector<8x32xf32>
    %344 = arith.mulf %343, %342 : vector<8x32xf32>
    %345 = arith.addf %263, %344 : vector<8x32xf32>
    %cst_41 = arith.constant 2.000000e+00 : f32
    %346 = vector.broadcast %cst_41 : f32 to vector<8x32xf32>
    %347 = arith.mulf %346, %301 : vector<8x32xf32>
    %348 = arith.addf %284, %347 : vector<8x32xf32>
    %cst_42 = arith.constant 2.000000e+00 : f32
    %349 = vector.broadcast %cst_42 : f32 to vector<8x32xf32>
    %350 = arith.mulf %349, %318 : vector<8x32xf32>
    %351 = arith.addf %348, %350 : vector<8x32xf32>
    %352 = arith.addf %351, %335 : vector<8x32xf32>
    %353 = vector.broadcast %27 : f32 to vector<8x32xf32>
    %354 = arith.mulf %353, %352 : vector<8x32xf32>
    %355 = arith.addf %273, %354 : vector<8x32xf32>
    %356 = vector.extract_strided_slice %345 {offsets = [0, 0], sizes = [8, 1], strides = [1, 1]} : vector<8x32xf32> to vector<8x1xf32>
    %357 = vector.extract_strided_slice %355 {offsets = [0, 0], sizes = [8, 1], strides = [1, 1]} : vector<8x32xf32> to vector<8x1xf32>
    %358 = tpu.concatenate %356, %357, %356, %357, %356, %357 in 1 : vector<8x1xf32>, vector<8x1xf32>, vector<8x1xf32>, vector<8x1xf32>, vector<8x1xf32>, vector<8x1xf32> -> vector<8x6xf32>
    %c2_43 = arith.constant 2 : index
    %359 = memref.load %arg0[%c2_43] : memref<8xf32, #tpu.memory_space<smem>>
    %c1_44 = arith.constant 1 : index
    %360 = memref.load %arg0[%c1_44] : memref<8xf32, #tpu.memory_space<smem>>
    %361 = arith.subf %359, %360 : f32
    %cst_45 = arith.constant 2.500000e-01 : f32
    %362 = arith.mulf %361, %cst_45 : f32
    %cst_46 = arith.constant 5.000000e-01 : f32
    %363 = arith.mulf %cst_46, %362 : f32
    %cst_47 = arith.constant 0.166666672 : f32
    %364 = arith.mulf %362, %cst_47 : f32
    %365 = arith.mulf %345, %8 : vector<8x32xf32>
    %366 = arith.mulf %355, %10 : vector<8x32xf32>
    %367 = arith.addf %365, %366 : vector<8x32xf32>
    %368 = arith.addf %367, %12 : vector<8x32xf32>
    %369 = math.tanh %368 : vector<8x32xf32>
    %370 = arith.mulf %369, %14 : vector<8x32xf32>
    %cst_48 = arith.constant dense<0.000000e+00> : vector<8xf32>
    %371 = vector.multi_reduction <add>, %370, %cst_48 [1] : vector<8x32xf32> to vector<8xf32>
    %372 = vector.shape_cast %371 : vector<8xf32> to vector<8x1xf32>
    %373 = vector.shape_cast %372 : vector<8x1xf32> to vector<8x1xf32>
    %374 = vector.broadcast %373 : vector<8x1xf32> to vector<8x32xf32>
    %375 = arith.addf %374, %16 : vector<8x32xf32>
    %376 = vector.broadcast %363 : f32 to vector<8x32xf32>
    %377 = arith.mulf %376, %355 : vector<8x32xf32>
    %378 = arith.addf %345, %377 : vector<8x32xf32>
    %379 = vector.broadcast %363 : f32 to vector<8x32xf32>
    %380 = arith.mulf %379, %375 : vector<8x32xf32>
    %381 = arith.addf %355, %380 : vector<8x32xf32>
    %382 = arith.mulf %378, %8 : vector<8x32xf32>
    %383 = arith.mulf %381, %10 : vector<8x32xf32>
    %384 = arith.addf %382, %383 : vector<8x32xf32>
    %385 = arith.addf %384, %12 : vector<8x32xf32>
    %386 = math.tanh %385 : vector<8x32xf32>
    %387 = arith.mulf %386, %14 : vector<8x32xf32>
    %cst_49 = arith.constant dense<0.000000e+00> : vector<8xf32>
    %388 = vector.multi_reduction <add>, %387, %cst_49 [1] : vector<8x32xf32> to vector<8xf32>
    %389 = vector.shape_cast %388 : vector<8xf32> to vector<8x1xf32>
    %390 = vector.shape_cast %389 : vector<8x1xf32> to vector<8x1xf32>
    %391 = vector.broadcast %390 : vector<8x1xf32> to vector<8x32xf32>
    %392 = arith.addf %391, %16 : vector<8x32xf32>
    %393 = vector.broadcast %363 : f32 to vector<8x32xf32>
    %394 = arith.mulf %393, %381 : vector<8x32xf32>
    %395 = arith.addf %345, %394 : vector<8x32xf32>
    %396 = vector.broadcast %363 : f32 to vector<8x32xf32>
    %397 = arith.mulf %396, %392 : vector<8x32xf32>
    %398 = arith.addf %355, %397 : vector<8x32xf32>
    %399 = arith.mulf %395, %8 : vector<8x32xf32>
    %400 = arith.mulf %398, %10 : vector<8x32xf32>
    %401 = arith.addf %399, %400 : vector<8x32xf32>
    %402 = arith.addf %401, %12 : vector<8x32xf32>
    %403 = math.tanh %402 : vector<8x32xf32>
    %404 = arith.mulf %403, %14 : vector<8x32xf32>
    %cst_50 = arith.constant dense<0.000000e+00> : vector<8xf32>
    %405 = vector.multi_reduction <add>, %404, %cst_50 [1] : vector<8x32xf32> to vector<8xf32>
    %406 = vector.shape_cast %405 : vector<8xf32> to vector<8x1xf32>
    %407 = vector.shape_cast %406 : vector<8x1xf32> to vector<8x1xf32>
    %408 = vector.broadcast %407 : vector<8x1xf32> to vector<8x32xf32>
    %409 = arith.addf %408, %16 : vector<8x32xf32>
    %410 = vector.broadcast %362 : f32 to vector<8x32xf32>
    %411 = arith.mulf %410, %398 : vector<8x32xf32>
    %412 = arith.addf %345, %411 : vector<8x32xf32>
    %413 = vector.broadcast %362 : f32 to vector<8x32xf32>
    %414 = arith.mulf %413, %409 : vector<8x32xf32>
    %415 = arith.addf %355, %414 : vector<8x32xf32>
    %416 = arith.mulf %412, %8 : vector<8x32xf32>
    %417 = arith.mulf %415, %10 : vector<8x32xf32>
    %418 = arith.addf %416, %417 : vector<8x32xf32>
    %419 = arith.addf %418, %12 : vector<8x32xf32>
    %420 = math.tanh %419 : vector<8x32xf32>
    %421 = arith.mulf %420, %14 : vector<8x32xf32>
    %cst_51 = arith.constant dense<0.000000e+00> : vector<8xf32>
    %422 = vector.multi_reduction <add>, %421, %cst_51 [1] : vector<8x32xf32> to vector<8xf32>
    %423 = vector.shape_cast %422 : vector<8xf32> to vector<8x1xf32>
    %424 = vector.shape_cast %423 : vector<8x1xf32> to vector<8x1xf32>
    %425 = vector.broadcast %424 : vector<8x1xf32> to vector<8x32xf32>
    %426 = arith.addf %425, %16 : vector<8x32xf32>
    %cst_52 = arith.constant 2.000000e+00 : f32
    %427 = vector.broadcast %cst_52 : f32 to vector<8x32xf32>
    %428 = arith.mulf %427, %381 : vector<8x32xf32>
    %429 = arith.addf %355, %428 : vector<8x32xf32>
    %cst_53 = arith.constant 2.000000e+00 : f32
    %430 = vector.broadcast %cst_53 : f32 to vector<8x32xf32>
    %431 = arith.mulf %430, %398 : vector<8x32xf32>
    %432 = arith.addf %429, %431 : vector<8x32xf32>
    %433 = arith.addf %432, %415 : vector<8x32xf32>
    %434 = vector.broadcast %364 : f32 to vector<8x32xf32>
    %435 = arith.mulf %434, %433 : vector<8x32xf32>
    %436 = arith.addf %345, %435 : vector<8x32xf32>
    %cst_54 = arith.constant 2.000000e+00 : f32
    %437 = vector.broadcast %cst_54 : f32 to vector<8x32xf32>
    %438 = arith.mulf %437, %392 : vector<8x32xf32>
    %439 = arith.addf %375, %438 : vector<8x32xf32>
    %cst_55 = arith.constant 2.000000e+00 : f32
    %440 = vector.broadcast %cst_55 : f32 to vector<8x32xf32>
    %441 = arith.mulf %440, %409 : vector<8x32xf32>
    %442 = arith.addf %439, %441 : vector<8x32xf32>
    %443 = arith.addf %442, %426 : vector<8x32xf32>
    %444 = vector.broadcast %364 : f32 to vector<8x32xf32>
    %445 = arith.mulf %444, %443 : vector<8x32xf32>
    %446 = arith.addf %355, %445 : vector<8x32xf32>
    %447 = arith.mulf %436, %8 : vector<8x32xf32>
    %448 = arith.mulf %446, %10 : vector<8x32xf32>
    %449 = arith.addf %447, %448 : vector<8x32xf32>
    %450 = arith.addf %449, %12 : vector<8x32xf32>
    %451 = math.tanh %450 : vector<8x32xf32>
    %452 = arith.mulf %451, %14 : vector<8x32xf32>
    %cst_56 = arith.constant dense<0.000000e+00> : vector<8xf32>
    %453 = vector.multi_reduction <add>, %452, %cst_56 [1] : vector<8x32xf32> to vector<8xf32>
    %454 = vector.shape_cast %453 : vector<8xf32> to vector<8x1xf32>
    %455 = vector.shape_cast %454 : vector<8x1xf32> to vector<8x1xf32>
    %456 = vector.broadcast %455 : vector<8x1xf32> to vector<8x32xf32>
    %457 = arith.addf %456, %16 : vector<8x32xf32>
    %458 = vector.broadcast %363 : f32 to vector<8x32xf32>
    %459 = arith.mulf %458, %446 : vector<8x32xf32>
    %460 = arith.addf %436, %459 : vector<8x32xf32>
    %461 = vector.broadcast %363 : f32 to vector<8x32xf32>
    %462 = arith.mulf %461, %457 : vector<8x32xf32>
    %463 = arith.addf %446, %462 : vector<8x32xf32>
    %464 = arith.mulf %460, %8 : vector<8x32xf32>
    %465 = arith.mulf %463, %10 : vector<8x32xf32>
    %466 = arith.addf %464, %465 : vector<8x32xf32>
    %467 = arith.addf %466, %12 : vector<8x32xf32>
    %468 = math.tanh %467 : vector<8x32xf32>
    %469 = arith.mulf %468, %14 : vector<8x32xf32>
    %cst_57 = arith.constant dense<0.000000e+00> : vector<8xf32>
    %470 = vector.multi_reduction <add>, %469, %cst_57 [1] : vector<8x32xf32> to vector<8xf32>
    %471 = vector.shape_cast %470 : vector<8xf32> to vector<8x1xf32>
    %472 = vector.shape_cast %471 : vector<8x1xf32> to vector<8x1xf32>
    %473 = vector.broadcast %472 : vector<8x1xf32> to vector<8x32xf32>
    %474 = arith.addf %473, %16 : vector<8x32xf32>
    %475 = vector.broadcast %363 : f32 to vector<8x32xf32>
    %476 = arith.mulf %475, %463 : vector<8x32xf32>
    %477 = arith.addf %436, %476 : vector<8x32xf32>
    %478 = vector.broadcast %363 : f32 to vector<8x32xf32>
    %479 = arith.mulf %478, %474 : vector<8x32xf32>
    %480 = arith.addf %446, %479 : vector<8x32xf32>
    %481 = arith.mulf %477, %8 : vector<8x32xf32>
    %482 = arith.mulf %480, %10 : vector<8x32xf32>
    %483 = arith.addf %481, %482 : vector<8x32xf32>
    %484 = arith.addf %483, %12 : vector<8x32xf32>
    %485 = math.tanh %484 : vector<8x32xf32>
    %486 = arith.mulf %485, %14 : vector<8x32xf32>
    %cst_58 = arith.constant dense<0.000000e+00> : vector<8xf32>
    %487 = vector.multi_reduction <add>, %486, %cst_58 [1] : vector<8x32xf32> to vector<8xf32>
    %488 = vector.shape_cast %487 : vector<8xf32> to vector<8x1xf32>
    %489 = vector.shape_cast %488 : vector<8x1xf32> to vector<8x1xf32>
    %490 = vector.broadcast %489 : vector<8x1xf32> to vector<8x32xf32>
    %491 = arith.addf %490, %16 : vector<8x32xf32>
    %492 = vector.broadcast %362 : f32 to vector<8x32xf32>
    %493 = arith.mulf %492, %480 : vector<8x32xf32>
    %494 = arith.addf %436, %493 : vector<8x32xf32>
    %495 = vector.broadcast %362 : f32 to vector<8x32xf32>
    %496 = arith.mulf %495, %491 : vector<8x32xf32>
    %497 = arith.addf %446, %496 : vector<8x32xf32>
    %498 = arith.mulf %494, %8 : vector<8x32xf32>
    %499 = arith.mulf %497, %10 : vector<8x32xf32>
    %500 = arith.addf %498, %499 : vector<8x32xf32>
    %501 = arith.addf %500, %12 : vector<8x32xf32>
    %502 = math.tanh %501 : vector<8x32xf32>
    %503 = arith.mulf %502, %14 : vector<8x32xf32>
    %cst_59 = arith.constant dense<0.000000e+00> : vector<8xf32>
    %504 = vector.multi_reduction <add>, %503, %cst_59 [1] : vector<8x32xf32> to vector<8xf32>
    %505 = vector.shape_cast %504 : vector<8xf32> to vector<8x1xf32>
    %506 = vector.shape_cast %505 : vector<8x1xf32> to vector<8x1xf32>
    %507 = vector.broadcast %506 : vector<8x1xf32> to vector<8x32xf32>
    %508 = arith.addf %507, %16 : vector<8x32xf32>
    %cst_60 = arith.constant 2.000000e+00 : f32
    %509 = vector.broadcast %cst_60 : f32 to vector<8x32xf32>
    %510 = arith.mulf %509, %463 : vector<8x32xf32>
    %511 = arith.addf %446, %510 : vector<8x32xf32>
    %cst_61 = arith.constant 2.000000e+00 : f32
    %512 = vector.broadcast %cst_61 : f32 to vector<8x32xf32>
    %513 = arith.mulf %512, %480 : vector<8x32xf32>
    %514 = arith.addf %511, %513 : vector<8x32xf32>
    %515 = arith.addf %514, %497 : vector<8x32xf32>
    %516 = vector.broadcast %364 : f32 to vector<8x32xf32>
    %517 = arith.mulf %516, %515 : vector<8x32xf32>
    %518 = arith.addf %436, %517 : vector<8x32xf32>
    %cst_62 = arith.constant 2.000000e+00 : f32
    %519 = vector.broadcast %cst_62 : f32 to vector<8x32xf32>
    %520 = arith.mulf %519, %474 : vector<8x32xf32>
    %521 = arith.addf %457, %520 : vector<8x32xf32>
    %cst_63 = arith.constant 2.000000e+00 : f32
    %522 = vector.broadcast %cst_63 : f32 to vector<8x32xf32>
    %523 = arith.mulf %522, %491 : vector<8x32xf32>
    %524 = arith.addf %521, %523 : vector<8x32xf32>
    %525 = arith.addf %524, %508 : vector<8x32xf32>
    %526 = vector.broadcast %364 : f32 to vector<8x32xf32>
    %527 = arith.mulf %526, %525 : vector<8x32xf32>
    %528 = arith.addf %446, %527 : vector<8x32xf32>
    %529 = arith.mulf %518, %8 : vector<8x32xf32>
    %530 = arith.mulf %528, %10 : vector<8x32xf32>
    %531 = arith.addf %529, %530 : vector<8x32xf32>
    %532 = arith.addf %531, %12 : vector<8x32xf32>
    %533 = math.tanh %532 : vector<8x32xf32>
    %534 = arith.mulf %533, %14 : vector<8x32xf32>
    %cst_64 = arith.constant dense<0.000000e+00> : vector<8xf32>
    %535 = vector.multi_reduction <add>, %534, %cst_64 [1] : vector<8x32xf32> to vector<8xf32>
    %536 = vector.shape_cast %535 : vector<8xf32> to vector<8x1xf32>
    %537 = vector.shape_cast %536 : vector<8x1xf32> to vector<8x1xf32>
    %538 = vector.broadcast %537 : vector<8x1xf32> to vector<8x32xf32>
    %539 = arith.addf %538, %16 : vector<8x32xf32>
    %540 = vector.broadcast %363 : f32 to vector<8x32xf32>
    %541 = arith.mulf %540, %528 : vector<8x32xf32>
    %542 = arith.addf %518, %541 : vector<8x32xf32>
    %543 = vector.broadcast %363 : f32 to vector<8x32xf32>
    %544 = arith.mulf %543, %539 : vector<8x32xf32>
    %545 = arith.addf %528, %544 : vector<8x32xf32>
    %546 = arith.mulf %542, %8 : vector<8x32xf32>
    %547 = arith.mulf %545, %10 : vector<8x32xf32>
    %548 = arith.addf %546, %547 : vector<8x32xf32>
    %549 = arith.addf %548, %12 : vector<8x32xf32>
    %550 = math.tanh %549 : vector<8x32xf32>
    %551 = arith.mulf %550, %14 : vector<8x32xf32>
    %cst_65 = arith.constant dense<0.000000e+00> : vector<8xf32>
    %552 = vector.multi_reduction <add>, %551, %cst_65 [1] : vector<8x32xf32> to vector<8xf32>
    %553 = vector.shape_cast %552 : vector<8xf32> to vector<8x1xf32>
    %554 = vector.shape_cast %553 : vector<8x1xf32> to vector<8x1xf32>
    %555 = vector.broadcast %554 : vector<8x1xf32> to vector<8x32xf32>
    %556 = arith.addf %555, %16 : vector<8x32xf32>
    %557 = vector.broadcast %363 : f32 to vector<8x32xf32>
    %558 = arith.mulf %557, %545 : vector<8x32xf32>
    %559 = arith.addf %518, %558 : vector<8x32xf32>
    %560 = vector.broadcast %363 : f32 to vector<8x32xf32>
    %561 = arith.mulf %560, %556 : vector<8x32xf32>
    %562 = arith.addf %528, %561 : vector<8x32xf32>
    %563 = arith.mulf %559, %8 : vector<8x32xf32>
    %564 = arith.mulf %562, %10 : vector<8x32xf32>
    %565 = arith.addf %563, %564 : vector<8x32xf32>
    %566 = arith.addf %565, %12 : vector<8x32xf32>
    %567 = math.tanh %566 : vector<8x32xf32>
    %568 = arith.mulf %567, %14 : vector<8x32xf32>
    %cst_66 = arith.constant dense<0.000000e+00> : vector<8xf32>
    %569 = vector.multi_reduction <add>, %568, %cst_66 [1] : vector<8x32xf32> to vector<8xf32>
    %570 = vector.shape_cast %569 : vector<8xf32> to vector<8x1xf32>
    %571 = vector.shape_cast %570 : vector<8x1xf32> to vector<8x1xf32>
    %572 = vector.broadcast %571 : vector<8x1xf32> to vector<8x32xf32>
    %573 = arith.addf %572, %16 : vector<8x32xf32>
    %574 = vector.broadcast %362 : f32 to vector<8x32xf32>
    %575 = arith.mulf %574, %562 : vector<8x32xf32>
    %576 = arith.addf %518, %575 : vector<8x32xf32>
    %577 = vector.broadcast %362 : f32 to vector<8x32xf32>
    %578 = arith.mulf %577, %573 : vector<8x32xf32>
    %579 = arith.addf %528, %578 : vector<8x32xf32>
    %580 = arith.mulf %576, %8 : vector<8x32xf32>
    %581 = arith.mulf %579, %10 : vector<8x32xf32>
    %582 = arith.addf %580, %581 : vector<8x32xf32>
    %583 = arith.addf %582, %12 : vector<8x32xf32>
    %584 = math.tanh %583 : vector<8x32xf32>
    %585 = arith.mulf %584, %14 : vector<8x32xf32>
    %cst_67 = arith.constant dense<0.000000e+00> : vector<8xf32>
    %586 = vector.multi_reduction <add>, %585, %cst_67 [1] : vector<8x32xf32> to vector<8xf32>
    %587 = vector.shape_cast %586 : vector<8xf32> to vector<8x1xf32>
    %588 = vector.shape_cast %587 : vector<8x1xf32> to vector<8x1xf32>
    %589 = vector.broadcast %588 : vector<8x1xf32> to vector<8x32xf32>
    %590 = arith.addf %589, %16 : vector<8x32xf32>
    %cst_68 = arith.constant 2.000000e+00 : f32
    %591 = vector.broadcast %cst_68 : f32 to vector<8x32xf32>
    %592 = arith.mulf %591, %545 : vector<8x32xf32>
    %593 = arith.addf %528, %592 : vector<8x32xf32>
    %cst_69 = arith.constant 2.000000e+00 : f32
    %594 = vector.broadcast %cst_69 : f32 to vector<8x32xf32>
    %595 = arith.mulf %594, %562 : vector<8x32xf32>
    %596 = arith.addf %593, %595 : vector<8x32xf32>
    %597 = arith.addf %596, %579 : vector<8x32xf32>
    %598 = vector.broadcast %364 : f32 to vector<8x32xf32>
    %599 = arith.mulf %598, %597 : vector<8x32xf32>
    %600 = arith.addf %518, %599 : vector<8x32xf32>
    %cst_70 = arith.constant 2.000000e+00 : f32
    %601 = vector.broadcast %cst_70 : f32 to vector<8x32xf32>
    %602 = arith.mulf %601, %556 : vector<8x32xf32>
    %603 = arith.addf %539, %602 : vector<8x32xf32>
    %cst_71 = arith.constant 2.000000e+00 : f32
    %604 = vector.broadcast %cst_71 : f32 to vector<8x32xf32>
    %605 = arith.mulf %604, %573 : vector<8x32xf32>
    %606 = arith.addf %603, %605 : vector<8x32xf32>
    %607 = arith.addf %606, %590 : vector<8x32xf32>
    %608 = vector.broadcast %364 : f32 to vector<8x32xf32>
    %609 = arith.mulf %608, %607 : vector<8x32xf32>
    %610 = arith.addf %528, %609 : vector<8x32xf32>
    %611 = arith.mulf %600, %8 : vector<8x32xf32>
    %612 = arith.mulf %610, %10 : vector<8x32xf32>
    %613 = arith.addf %611, %612 : vector<8x32xf32>
    %614 = arith.addf %613, %12 : vector<8x32xf32>
    %615 = math.tanh %614 : vector<8x32xf32>
    %616 = arith.mulf %615, %14 : vector<8x32xf32>
    %cst_72 = arith.constant dense<0.000000e+00> : vector<8xf32>
    %617 = vector.multi_reduction <add>, %616, %cst_72 [1] : vector<8x32xf32> to vector<8xf32>
    %618 = vector.shape_cast %617 : vector<8xf32> to vector<8x1xf32>
    %619 = vector.shape_cast %618 : vector<8x1xf32> to vector<8x1xf32>
    %620 = vector.broadcast %619 : vector<8x1xf32> to vector<8x32xf32>
    %621 = arith.addf %620, %16 : vector<8x32xf32>
    %622 = vector.broadcast %363 : f32 to vector<8x32xf32>
    %623 = arith.mulf %622, %610 : vector<8x32xf32>
    %624 = arith.addf %600, %623 : vector<8x32xf32>
    %625 = vector.broadcast %363 : f32 to vector<8x32xf32>
    %626 = arith.mulf %625, %621 : vector<8x32xf32>
    %627 = arith.addf %610, %626 : vector<8x32xf32>
    %628 = arith.mulf %624, %8 : vector<8x32xf32>
    %629 = arith.mulf %627, %10 : vector<8x32xf32>
    %630 = arith.addf %628, %629 : vector<8x32xf32>
    %631 = arith.addf %630, %12 : vector<8x32xf32>
    %632 = math.tanh %631 : vector<8x32xf32>
    %633 = arith.mulf %632, %14 : vector<8x32xf32>
    %cst_73 = arith.constant dense<0.000000e+00> : vector<8xf32>
    %634 = vector.multi_reduction <add>, %633, %cst_73 [1] : vector<8x32xf32> to vector<8xf32>
    %635 = vector.shape_cast %634 : vector<8xf32> to vector<8x1xf32>
    %636 = vector.shape_cast %635 : vector<8x1xf32> to vector<8x1xf32>
    %637 = vector.broadcast %636 : vector<8x1xf32> to vector<8x32xf32>
    %638 = arith.addf %637, %16 : vector<8x32xf32>
    %639 = vector.broadcast %363 : f32 to vector<8x32xf32>
    %640 = arith.mulf %639, %627 : vector<8x32xf32>
    %641 = arith.addf %600, %640 : vector<8x32xf32>
    %642 = vector.broadcast %363 : f32 to vector<8x32xf32>
    %643 = arith.mulf %642, %638 : vector<8x32xf32>
    %644 = arith.addf %610, %643 : vector<8x32xf32>
    %645 = arith.mulf %641, %8 : vector<8x32xf32>
    %646 = arith.mulf %644, %10 : vector<8x32xf32>
    %647 = arith.addf %645, %646 : vector<8x32xf32>
    %648 = arith.addf %647, %12 : vector<8x32xf32>
    %649 = math.tanh %648 : vector<8x32xf32>
    %650 = arith.mulf %649, %14 : vector<8x32xf32>
    %cst_74 = arith.constant dense<0.000000e+00> : vector<8xf32>
    %651 = vector.multi_reduction <add>, %650, %cst_74 [1] : vector<8x32xf32> to vector<8xf32>
    %652 = vector.shape_cast %651 : vector<8xf32> to vector<8x1xf32>
    %653 = vector.shape_cast %652 : vector<8x1xf32> to vector<8x1xf32>
    %654 = vector.broadcast %653 : vector<8x1xf32> to vector<8x32xf32>
    %655 = arith.addf %654, %16 : vector<8x32xf32>
    %656 = vector.broadcast %362 : f32 to vector<8x32xf32>
    %657 = arith.mulf %656, %644 : vector<8x32xf32>
    %658 = arith.addf %600, %657 : vector<8x32xf32>
    %659 = vector.broadcast %362 : f32 to vector<8x32xf32>
    %660 = arith.mulf %659, %655 : vector<8x32xf32>
    %661 = arith.addf %610, %660 : vector<8x32xf32>
    %662 = arith.mulf %658, %8 : vector<8x32xf32>
    %663 = arith.mulf %661, %10 : vector<8x32xf32>
    %664 = arith.addf %662, %663 : vector<8x32xf32>
    %665 = arith.addf %664, %12 : vector<8x32xf32>
    %666 = math.tanh %665 : vector<8x32xf32>
    %667 = arith.mulf %666, %14 : vector<8x32xf32>
    %cst_75 = arith.constant dense<0.000000e+00> : vector<8xf32>
    %668 = vector.multi_reduction <add>, %667, %cst_75 [1] : vector<8x32xf32> to vector<8xf32>
    %669 = vector.shape_cast %668 : vector<8xf32> to vector<8x1xf32>
    %670 = vector.shape_cast %669 : vector<8x1xf32> to vector<8x1xf32>
    %671 = vector.broadcast %670 : vector<8x1xf32> to vector<8x32xf32>
    %672 = arith.addf %671, %16 : vector<8x32xf32>
    %cst_76 = arith.constant 2.000000e+00 : f32
    %673 = vector.broadcast %cst_76 : f32 to vector<8x32xf32>
    %674 = arith.mulf %673, %627 : vector<8x32xf32>
    %675 = arith.addf %610, %674 : vector<8x32xf32>
    %cst_77 = arith.constant 2.000000e+00 : f32
    %676 = vector.broadcast %cst_77 : f32 to vector<8x32xf32>
    %677 = arith.mulf %676, %644 : vector<8x32xf32>
    %678 = arith.addf %675, %677 : vector<8x32xf32>
    %679 = arith.addf %678, %661 : vector<8x32xf32>
    %680 = vector.broadcast %364 : f32 to vector<8x32xf32>
    %681 = arith.mulf %680, %679 : vector<8x32xf32>
    %682 = arith.addf %600, %681 : vector<8x32xf32>
    %cst_78 = arith.constant 2.000000e+00 : f32
    %683 = vector.broadcast %cst_78 : f32 to vector<8x32xf32>
    %684 = arith.mulf %683, %638 : vector<8x32xf32>
    %685 = arith.addf %621, %684 : vector<8x32xf32>
    %cst_79 = arith.constant 2.000000e+00 : f32
    %686 = vector.broadcast %cst_79 : f32 to vector<8x32xf32>
    %687 = arith.mulf %686, %655 : vector<8x32xf32>
    %688 = arith.addf %685, %687 : vector<8x32xf32>
    %689 = arith.addf %688, %672 : vector<8x32xf32>
    %690 = vector.broadcast %364 : f32 to vector<8x32xf32>
    %691 = arith.mulf %690, %689 : vector<8x32xf32>
    %692 = arith.addf %610, %691 : vector<8x32xf32>
    %693 = vector.extract_strided_slice %682 {offsets = [0, 0], sizes = [8, 1], strides = [1, 1]} : vector<8x32xf32> to vector<8x1xf32>
    %694 = vector.extract_strided_slice %692 {offsets = [0, 0], sizes = [8, 1], strides = [1, 1]} : vector<8x32xf32> to vector<8x1xf32>
    %695 = tpu.concatenate %693, %694, %693, %694, %693, %694 in 1 : vector<8x1xf32>, vector<8x1xf32>, vector<8x1xf32>, vector<8x1xf32>, vector<8x1xf32>, vector<8x1xf32> -> vector<8x6xf32>
    %c3_80 = arith.constant 3 : index
    %696 = memref.load %arg0[%c3_80] : memref<8xf32, #tpu.memory_space<smem>>
    %c2_81 = arith.constant 2 : index
    %697 = memref.load %arg0[%c2_81] : memref<8xf32, #tpu.memory_space<smem>>
    %698 = arith.subf %696, %697 : f32
    %cst_82 = arith.constant 2.500000e-01 : f32
    %699 = arith.mulf %698, %cst_82 : f32
    %cst_83 = arith.constant 5.000000e-01 : f32
    %700 = arith.mulf %cst_83, %699 : f32
    %cst_84 = arith.constant 0.166666672 : f32
    %701 = arith.mulf %699, %cst_84 : f32
    %702 = arith.mulf %682, %8 : vector<8x32xf32>
    %703 = arith.mulf %692, %10 : vector<8x32xf32>
    %704 = arith.addf %702, %703 : vector<8x32xf32>
    %705 = arith.addf %704, %12 : vector<8x32xf32>
    %706 = math.tanh %705 : vector<8x32xf32>
    %707 = arith.mulf %706, %14 : vector<8x32xf32>
    %cst_85 = arith.constant dense<0.000000e+00> : vector<8xf32>
    %708 = vector.multi_reduction <add>, %707, %cst_85 [1] : vector<8x32xf32> to vector<8xf32>
    %709 = vector.shape_cast %708 : vector<8xf32> to vector<8x1xf32>
    %710 = vector.shape_cast %709 : vector<8x1xf32> to vector<8x1xf32>
    %711 = vector.broadcast %710 : vector<8x1xf32> to vector<8x32xf32>
    %712 = arith.addf %711, %16 : vector<8x32xf32>
    %713 = vector.broadcast %700 : f32 to vector<8x32xf32>
    %714 = arith.mulf %713, %692 : vector<8x32xf32>
    %715 = arith.addf %682, %714 : vector<8x32xf32>
    %716 = vector.broadcast %700 : f32 to vector<8x32xf32>
    %717 = arith.mulf %716, %712 : vector<8x32xf32>
    %718 = arith.addf %692, %717 : vector<8x32xf32>
    %719 = arith.mulf %715, %8 : vector<8x32xf32>
    %720 = arith.mulf %718, %10 : vector<8x32xf32>
    %721 = arith.addf %719, %720 : vector<8x32xf32>
    %722 = arith.addf %721, %12 : vector<8x32xf32>
    %723 = math.tanh %722 : vector<8x32xf32>
    %724 = arith.mulf %723, %14 : vector<8x32xf32>
    %cst_86 = arith.constant dense<0.000000e+00> : vector<8xf32>
    %725 = vector.multi_reduction <add>, %724, %cst_86 [1] : vector<8x32xf32> to vector<8xf32>
    %726 = vector.shape_cast %725 : vector<8xf32> to vector<8x1xf32>
    %727 = vector.shape_cast %726 : vector<8x1xf32> to vector<8x1xf32>
    %728 = vector.broadcast %727 : vector<8x1xf32> to vector<8x32xf32>
    %729 = arith.addf %728, %16 : vector<8x32xf32>
    %730 = vector.broadcast %700 : f32 to vector<8x32xf32>
    %731 = arith.mulf %730, %718 : vector<8x32xf32>
    %732 = arith.addf %682, %731 : vector<8x32xf32>
    %733 = vector.broadcast %700 : f32 to vector<8x32xf32>
    %734 = arith.mulf %733, %729 : vector<8x32xf32>
    %735 = arith.addf %692, %734 : vector<8x32xf32>
    %736 = arith.mulf %732, %8 : vector<8x32xf32>
    %737 = arith.mulf %735, %10 : vector<8x32xf32>
    %738 = arith.addf %736, %737 : vector<8x32xf32>
    %739 = arith.addf %738, %12 : vector<8x32xf32>
    %740 = math.tanh %739 : vector<8x32xf32>
    %741 = arith.mulf %740, %14 : vector<8x32xf32>
    %cst_87 = arith.constant dense<0.000000e+00> : vector<8xf32>
    %742 = vector.multi_reduction <add>, %741, %cst_87 [1] : vector<8x32xf32> to vector<8xf32>
    %743 = vector.shape_cast %742 : vector<8xf32> to vector<8x1xf32>
    %744 = vector.shape_cast %743 : vector<8x1xf32> to vector<8x1xf32>
    %745 = vector.broadcast %744 : vector<8x1xf32> to vector<8x32xf32>
    %746 = arith.addf %745, %16 : vector<8x32xf32>
    %747 = vector.broadcast %699 : f32 to vector<8x32xf32>
    %748 = arith.mulf %747, %735 : vector<8x32xf32>
    %749 = arith.addf %682, %748 : vector<8x32xf32>
    %750 = vector.broadcast %699 : f32 to vector<8x32xf32>
    %751 = arith.mulf %750, %746 : vector<8x32xf32>
    %752 = arith.addf %692, %751 : vector<8x32xf32>
    %753 = arith.mulf %749, %8 : vector<8x32xf32>
    %754 = arith.mulf %752, %10 : vector<8x32xf32>
    %755 = arith.addf %753, %754 : vector<8x32xf32>
    %756 = arith.addf %755, %12 : vector<8x32xf32>
    %757 = math.tanh %756 : vector<8x32xf32>
    %758 = arith.mulf %757, %14 : vector<8x32xf32>
    %cst_88 = arith.constant dense<0.000000e+00> : vector<8xf32>
    %759 = vector.multi_reduction <add>, %758, %cst_88 [1] : vector<8x32xf32> to vector<8xf32>
    %760 = vector.shape_cast %759 : vector<8xf32> to vector<8x1xf32>
    %761 = vector.shape_cast %760 : vector<8x1xf32> to vector<8x1xf32>
    %762 = vector.broadcast %761 : vector<8x1xf32> to vector<8x32xf32>
    %763 = arith.addf %762, %16 : vector<8x32xf32>
    %cst_89 = arith.constant 2.000000e+00 : f32
    %764 = vector.broadcast %cst_89 : f32 to vector<8x32xf32>
    %765 = arith.mulf %764, %718 : vector<8x32xf32>
    %766 = arith.addf %692, %765 : vector<8x32xf32>
    %cst_90 = arith.constant 2.000000e+00 : f32
    %767 = vector.broadcast %cst_90 : f32 to vector<8x32xf32>
    %768 = arith.mulf %767, %735 : vector<8x32xf32>
    %769 = arith.addf %766, %768 : vector<8x32xf32>
    %770 = arith.addf %769, %752 : vector<8x32xf32>
    %771 = vector.broadcast %701 : f32 to vector<8x32xf32>
    %772 = arith.mulf %771, %770 : vector<8x32xf32>
    %773 = arith.addf %682, %772 : vector<8x32xf32>
    %cst_91 = arith.constant 2.000000e+00 : f32
    %774 = vector.broadcast %cst_91 : f32 to vector<8x32xf32>
    %775 = arith.mulf %774, %729 : vector<8x32xf32>
    %776 = arith.addf %712, %775 : vector<8x32xf32>
    %cst_92 = arith.constant 2.000000e+00 : f32
    %777 = vector.broadcast %cst_92 : f32 to vector<8x32xf32>
    %778 = arith.mulf %777, %746 : vector<8x32xf32>
    %779 = arith.addf %776, %778 : vector<8x32xf32>
    %780 = arith.addf %779, %763 : vector<8x32xf32>
    %781 = vector.broadcast %701 : f32 to vector<8x32xf32>
    %782 = arith.mulf %781, %780 : vector<8x32xf32>
    %783 = arith.addf %692, %782 : vector<8x32xf32>
    %784 = arith.mulf %773, %8 : vector<8x32xf32>
    %785 = arith.mulf %783, %10 : vector<8x32xf32>
    %786 = arith.addf %784, %785 : vector<8x32xf32>
    %787 = arith.addf %786, %12 : vector<8x32xf32>
    %788 = math.tanh %787 : vector<8x32xf32>
    %789 = arith.mulf %788, %14 : vector<8x32xf32>
    %cst_93 = arith.constant dense<0.000000e+00> : vector<8xf32>
    %790 = vector.multi_reduction <add>, %789, %cst_93 [1] : vector<8x32xf32> to vector<8xf32>
    %791 = vector.shape_cast %790 : vector<8xf32> to vector<8x1xf32>
    %792 = vector.shape_cast %791 : vector<8x1xf32> to vector<8x1xf32>
    %793 = vector.broadcast %792 : vector<8x1xf32> to vector<8x32xf32>
    %794 = arith.addf %793, %16 : vector<8x32xf32>
    %795 = vector.broadcast %700 : f32 to vector<8x32xf32>
    %796 = arith.mulf %795, %783 : vector<8x32xf32>
    %797 = arith.addf %773, %796 : vector<8x32xf32>
    %798 = vector.broadcast %700 : f32 to vector<8x32xf32>
    %799 = arith.mulf %798, %794 : vector<8x32xf32>
    %800 = arith.addf %783, %799 : vector<8x32xf32>
    %801 = arith.mulf %797, %8 : vector<8x32xf32>
    %802 = arith.mulf %800, %10 : vector<8x32xf32>
    %803 = arith.addf %801, %802 : vector<8x32xf32>
    %804 = arith.addf %803, %12 : vector<8x32xf32>
    %805 = math.tanh %804 : vector<8x32xf32>
    %806 = arith.mulf %805, %14 : vector<8x32xf32>
    %cst_94 = arith.constant dense<0.000000e+00> : vector<8xf32>
    %807 = vector.multi_reduction <add>, %806, %cst_94 [1] : vector<8x32xf32> to vector<8xf32>
    %808 = vector.shape_cast %807 : vector<8xf32> to vector<8x1xf32>
    %809 = vector.shape_cast %808 : vector<8x1xf32> to vector<8x1xf32>
    %810 = vector.broadcast %809 : vector<8x1xf32> to vector<8x32xf32>
    %811 = arith.addf %810, %16 : vector<8x32xf32>
    %812 = vector.broadcast %700 : f32 to vector<8x32xf32>
    %813 = arith.mulf %812, %800 : vector<8x32xf32>
    %814 = arith.addf %773, %813 : vector<8x32xf32>
    %815 = vector.broadcast %700 : f32 to vector<8x32xf32>
    %816 = arith.mulf %815, %811 : vector<8x32xf32>
    %817 = arith.addf %783, %816 : vector<8x32xf32>
    %818 = arith.mulf %814, %8 : vector<8x32xf32>
    %819 = arith.mulf %817, %10 : vector<8x32xf32>
    %820 = arith.addf %818, %819 : vector<8x32xf32>
    %821 = arith.addf %820, %12 : vector<8x32xf32>
    %822 = math.tanh %821 : vector<8x32xf32>
    %823 = arith.mulf %822, %14 : vector<8x32xf32>
    %cst_95 = arith.constant dense<0.000000e+00> : vector<8xf32>
    %824 = vector.multi_reduction <add>, %823, %cst_95 [1] : vector<8x32xf32> to vector<8xf32>
    %825 = vector.shape_cast %824 : vector<8xf32> to vector<8x1xf32>
    %826 = vector.shape_cast %825 : vector<8x1xf32> to vector<8x1xf32>
    %827 = vector.broadcast %826 : vector<8x1xf32> to vector<8x32xf32>
    %828 = arith.addf %827, %16 : vector<8x32xf32>
    %829 = vector.broadcast %699 : f32 to vector<8x32xf32>
    %830 = arith.mulf %829, %817 : vector<8x32xf32>
    %831 = arith.addf %773, %830 : vector<8x32xf32>
    %832 = vector.broadcast %699 : f32 to vector<8x32xf32>
    %833 = arith.mulf %832, %828 : vector<8x32xf32>
    %834 = arith.addf %783, %833 : vector<8x32xf32>
    %835 = arith.mulf %831, %8 : vector<8x32xf32>
    %836 = arith.mulf %834, %10 : vector<8x32xf32>
    %837 = arith.addf %835, %836 : vector<8x32xf32>
    %838 = arith.addf %837, %12 : vector<8x32xf32>
    %839 = math.tanh %838 : vector<8x32xf32>
    %840 = arith.mulf %839, %14 : vector<8x32xf32>
    %cst_96 = arith.constant dense<0.000000e+00> : vector<8xf32>
    %841 = vector.multi_reduction <add>, %840, %cst_96 [1] : vector<8x32xf32> to vector<8xf32>
    %842 = vector.shape_cast %841 : vector<8xf32> to vector<8x1xf32>
    %843 = vector.shape_cast %842 : vector<8x1xf32> to vector<8x1xf32>
    %844 = vector.broadcast %843 : vector<8x1xf32> to vector<8x32xf32>
    %845 = arith.addf %844, %16 : vector<8x32xf32>
    %cst_97 = arith.constant 2.000000e+00 : f32
    %846 = vector.broadcast %cst_97 : f32 to vector<8x32xf32>
    %847 = arith.mulf %846, %800 : vector<8x32xf32>
    %848 = arith.addf %783, %847 : vector<8x32xf32>
    %cst_98 = arith.constant 2.000000e+00 : f32
    %849 = vector.broadcast %cst_98 : f32 to vector<8x32xf32>
    %850 = arith.mulf %849, %817 : vector<8x32xf32>
    %851 = arith.addf %848, %850 : vector<8x32xf32>
    %852 = arith.addf %851, %834 : vector<8x32xf32>
    %853 = vector.broadcast %701 : f32 to vector<8x32xf32>
    %854 = arith.mulf %853, %852 : vector<8x32xf32>
    %855 = arith.addf %773, %854 : vector<8x32xf32>
    %cst_99 = arith.constant 2.000000e+00 : f32
    %856 = vector.broadcast %cst_99 : f32 to vector<8x32xf32>
    %857 = arith.mulf %856, %811 : vector<8x32xf32>
    %858 = arith.addf %794, %857 : vector<8x32xf32>
    %cst_100 = arith.constant 2.000000e+00 : f32
    %859 = vector.broadcast %cst_100 : f32 to vector<8x32xf32>
    %860 = arith.mulf %859, %828 : vector<8x32xf32>
    %861 = arith.addf %858, %860 : vector<8x32xf32>
    %862 = arith.addf %861, %845 : vector<8x32xf32>
    %863 = vector.broadcast %701 : f32 to vector<8x32xf32>
    %864 = arith.mulf %863, %862 : vector<8x32xf32>
    %865 = arith.addf %783, %864 : vector<8x32xf32>
    %866 = arith.mulf %855, %8 : vector<8x32xf32>
    %867 = arith.mulf %865, %10 : vector<8x32xf32>
    %868 = arith.addf %866, %867 : vector<8x32xf32>
    %869 = arith.addf %868, %12 : vector<8x32xf32>
    %870 = math.tanh %869 : vector<8x32xf32>
    %871 = arith.mulf %870, %14 : vector<8x32xf32>
    %cst_101 = arith.constant dense<0.000000e+00> : vector<8xf32>
    %872 = vector.multi_reduction <add>, %871, %cst_101 [1] : vector<8x32xf32> to vector<8xf32>
    %873 = vector.shape_cast %872 : vector<8xf32> to vector<8x1xf32>
    %874 = vector.shape_cast %873 : vector<8x1xf32> to vector<8x1xf32>
    %875 = vector.broadcast %874 : vector<8x1xf32> to vector<8x32xf32>
    %876 = arith.addf %875, %16 : vector<8x32xf32>
    %877 = vector.broadcast %700 : f32 to vector<8x32xf32>
    %878 = arith.mulf %877, %865 : vector<8x32xf32>
    %879 = arith.addf %855, %878 : vector<8x32xf32>
    %880 = vector.broadcast %700 : f32 to vector<8x32xf32>
    %881 = arith.mulf %880, %876 : vector<8x32xf32>
    %882 = arith.addf %865, %881 : vector<8x32xf32>
    %883 = arith.mulf %879, %8 : vector<8x32xf32>
    %884 = arith.mulf %882, %10 : vector<8x32xf32>
    %885 = arith.addf %883, %884 : vector<8x32xf32>
    %886 = arith.addf %885, %12 : vector<8x32xf32>
    %887 = math.tanh %886 : vector<8x32xf32>
    %888 = arith.mulf %887, %14 : vector<8x32xf32>
    %cst_102 = arith.constant dense<0.000000e+00> : vector<8xf32>
    %889 = vector.multi_reduction <add>, %888, %cst_102 [1] : vector<8x32xf32> to vector<8xf32>
    %890 = vector.shape_cast %889 : vector<8xf32> to vector<8x1xf32>
    %891 = vector.shape_cast %890 : vector<8x1xf32> to vector<8x1xf32>
    %892 = vector.broadcast %891 : vector<8x1xf32> to vector<8x32xf32>
    %893 = arith.addf %892, %16 : vector<8x32xf32>
    %894 = vector.broadcast %700 : f32 to vector<8x32xf32>
    %895 = arith.mulf %894, %882 : vector<8x32xf32>
    %896 = arith.addf %855, %895 : vector<8x32xf32>
    %897 = vector.broadcast %700 : f32 to vector<8x32xf32>
    %898 = arith.mulf %897, %893 : vector<8x32xf32>
    %899 = arith.addf %865, %898 : vector<8x32xf32>
    %900 = arith.mulf %896, %8 : vector<8x32xf32>
    %901 = arith.mulf %899, %10 : vector<8x32xf32>
    %902 = arith.addf %900, %901 : vector<8x32xf32>
    %903 = arith.addf %902, %12 : vector<8x32xf32>
    %904 = math.tanh %903 : vector<8x32xf32>
    %905 = arith.mulf %904, %14 : vector<8x32xf32>
    %cst_103 = arith.constant dense<0.000000e+00> : vector<8xf32>
    %906 = vector.multi_reduction <add>, %905, %cst_103 [1] : vector<8x32xf32> to vector<8xf32>
    %907 = vector.shape_cast %906 : vector<8xf32> to vector<8x1xf32>
    %908 = vector.shape_cast %907 : vector<8x1xf32> to vector<8x1xf32>
    %909 = vector.broadcast %908 : vector<8x1xf32> to vector<8x32xf32>
    %910 = arith.addf %909, %16 : vector<8x32xf32>
    %911 = vector.broadcast %699 : f32 to vector<8x32xf32>
    %912 = arith.mulf %911, %899 : vector<8x32xf32>
    %913 = arith.addf %855, %912 : vector<8x32xf32>
    %914 = vector.broadcast %699 : f32 to vector<8x32xf32>
    %915 = arith.mulf %914, %910 : vector<8x32xf32>
    %916 = arith.addf %865, %915 : vector<8x32xf32>
    %917 = arith.mulf %913, %8 : vector<8x32xf32>
    %918 = arith.mulf %916, %10 : vector<8x32xf32>
    %919 = arith.addf %917, %918 : vector<8x32xf32>
    %920 = arith.addf %919, %12 : vector<8x32xf32>
    %921 = math.tanh %920 : vector<8x32xf32>
    %922 = arith.mulf %921, %14 : vector<8x32xf32>
    %cst_104 = arith.constant dense<0.000000e+00> : vector<8xf32>
    %923 = vector.multi_reduction <add>, %922, %cst_104 [1] : vector<8x32xf32> to vector<8xf32>
    %924 = vector.shape_cast %923 : vector<8xf32> to vector<8x1xf32>
    %925 = vector.shape_cast %924 : vector<8x1xf32> to vector<8x1xf32>
    %926 = vector.broadcast %925 : vector<8x1xf32> to vector<8x32xf32>
    %927 = arith.addf %926, %16 : vector<8x32xf32>
    %cst_105 = arith.constant 2.000000e+00 : f32
    %928 = vector.broadcast %cst_105 : f32 to vector<8x32xf32>
    %929 = arith.mulf %928, %882 : vector<8x32xf32>
    %930 = arith.addf %865, %929 : vector<8x32xf32>
    %cst_106 = arith.constant 2.000000e+00 : f32
    %931 = vector.broadcast %cst_106 : f32 to vector<8x32xf32>
    %932 = arith.mulf %931, %899 : vector<8x32xf32>
    %933 = arith.addf %930, %932 : vector<8x32xf32>
    %934 = arith.addf %933, %916 : vector<8x32xf32>
    %935 = vector.broadcast %701 : f32 to vector<8x32xf32>
    %936 = arith.mulf %935, %934 : vector<8x32xf32>
    %937 = arith.addf %855, %936 : vector<8x32xf32>
    %cst_107 = arith.constant 2.000000e+00 : f32
    %938 = vector.broadcast %cst_107 : f32 to vector<8x32xf32>
    %939 = arith.mulf %938, %893 : vector<8x32xf32>
    %940 = arith.addf %876, %939 : vector<8x32xf32>
    %cst_108 = arith.constant 2.000000e+00 : f32
    %941 = vector.broadcast %cst_108 : f32 to vector<8x32xf32>
    %942 = arith.mulf %941, %910 : vector<8x32xf32>
    %943 = arith.addf %940, %942 : vector<8x32xf32>
    %944 = arith.addf %943, %927 : vector<8x32xf32>
    %945 = vector.broadcast %701 : f32 to vector<8x32xf32>
    %946 = arith.mulf %945, %944 : vector<8x32xf32>
    %947 = arith.addf %865, %946 : vector<8x32xf32>
    %948 = arith.mulf %937, %8 : vector<8x32xf32>
    %949 = arith.mulf %947, %10 : vector<8x32xf32>
    %950 = arith.addf %948, %949 : vector<8x32xf32>
    %951 = arith.addf %950, %12 : vector<8x32xf32>
    %952 = math.tanh %951 : vector<8x32xf32>
    %953 = arith.mulf %952, %14 : vector<8x32xf32>
    %cst_109 = arith.constant dense<0.000000e+00> : vector<8xf32>
    %954 = vector.multi_reduction <add>, %953, %cst_109 [1] : vector<8x32xf32> to vector<8xf32>
    %955 = vector.shape_cast %954 : vector<8xf32> to vector<8x1xf32>
    %956 = vector.shape_cast %955 : vector<8x1xf32> to vector<8x1xf32>
    %957 = vector.broadcast %956 : vector<8x1xf32> to vector<8x32xf32>
    %958 = arith.addf %957, %16 : vector<8x32xf32>
    %959 = vector.broadcast %700 : f32 to vector<8x32xf32>
    %960 = arith.mulf %959, %947 : vector<8x32xf32>
    %961 = arith.addf %937, %960 : vector<8x32xf32>
    %962 = vector.broadcast %700 : f32 to vector<8x32xf32>
    %963 = arith.mulf %962, %958 : vector<8x32xf32>
    %964 = arith.addf %947, %963 : vector<8x32xf32>
    %965 = arith.mulf %961, %8 : vector<8x32xf32>
    %966 = arith.mulf %964, %10 : vector<8x32xf32>
    %967 = arith.addf %965, %966 : vector<8x32xf32>
    %968 = arith.addf %967, %12 : vector<8x32xf32>
    %969 = math.tanh %968 : vector<8x32xf32>
    %970 = arith.mulf %969, %14 : vector<8x32xf32>
    %cst_110 = arith.constant dense<0.000000e+00> : vector<8xf32>
    %971 = vector.multi_reduction <add>, %970, %cst_110 [1] : vector<8x32xf32> to vector<8xf32>
    %972 = vector.shape_cast %971 : vector<8xf32> to vector<8x1xf32>
    %973 = vector.shape_cast %972 : vector<8x1xf32> to vector<8x1xf32>
    %974 = vector.broadcast %973 : vector<8x1xf32> to vector<8x32xf32>
    %975 = arith.addf %974, %16 : vector<8x32xf32>
    %976 = vector.broadcast %700 : f32 to vector<8x32xf32>
    %977 = arith.mulf %976, %964 : vector<8x32xf32>
    %978 = arith.addf %937, %977 : vector<8x32xf32>
    %979 = vector.broadcast %700 : f32 to vector<8x32xf32>
    %980 = arith.mulf %979, %975 : vector<8x32xf32>
    %981 = arith.addf %947, %980 : vector<8x32xf32>
    %982 = arith.mulf %978, %8 : vector<8x32xf32>
    %983 = arith.mulf %981, %10 : vector<8x32xf32>
    %984 = arith.addf %982, %983 : vector<8x32xf32>
    %985 = arith.addf %984, %12 : vector<8x32xf32>
    %986 = math.tanh %985 : vector<8x32xf32>
    %987 = arith.mulf %986, %14 : vector<8x32xf32>
    %cst_111 = arith.constant dense<0.000000e+00> : vector<8xf32>
    %988 = vector.multi_reduction <add>, %987, %cst_111 [1] : vector<8x32xf32> to vector<8xf32>
    %989 = vector.shape_cast %988 : vector<8xf32> to vector<8x1xf32>
    %990 = vector.shape_cast %989 : vector<8x1xf32> to vector<8x1xf32>
    %991 = vector.broadcast %990 : vector<8x1xf32> to vector<8x32xf32>
    %992 = arith.addf %991, %16 : vector<8x32xf32>
    %993 = vector.broadcast %699 : f32 to vector<8x32xf32>
    %994 = arith.mulf %993, %981 : vector<8x32xf32>
    %995 = arith.addf %937, %994 : vector<8x32xf32>
    %996 = vector.broadcast %699 : f32 to vector<8x32xf32>
    %997 = arith.mulf %996, %992 : vector<8x32xf32>
    %998 = arith.addf %947, %997 : vector<8x32xf32>
    %999 = arith.mulf %995, %8 : vector<8x32xf32>
    %1000 = arith.mulf %998, %10 : vector<8x32xf32>
    %1001 = arith.addf %999, %1000 : vector<8x32xf32>
    %1002 = arith.addf %1001, %12 : vector<8x32xf32>
    %1003 = math.tanh %1002 : vector<8x32xf32>
    %1004 = arith.mulf %1003, %14 : vector<8x32xf32>
    %cst_112 = arith.constant dense<0.000000e+00> : vector<8xf32>
    %1005 = vector.multi_reduction <add>, %1004, %cst_112 [1] : vector<8x32xf32> to vector<8xf32>
    %1006 = vector.shape_cast %1005 : vector<8xf32> to vector<8x1xf32>
    %1007 = vector.shape_cast %1006 : vector<8x1xf32> to vector<8x1xf32>
    %1008 = vector.broadcast %1007 : vector<8x1xf32> to vector<8x32xf32>
    %1009 = arith.addf %1008, %16 : vector<8x32xf32>
    %cst_113 = arith.constant 2.000000e+00 : f32
    %1010 = vector.broadcast %cst_113 : f32 to vector<8x32xf32>
    %1011 = arith.mulf %1010, %964 : vector<8x32xf32>
    %1012 = arith.addf %947, %1011 : vector<8x32xf32>
    %cst_114 = arith.constant 2.000000e+00 : f32
    %1013 = vector.broadcast %cst_114 : f32 to vector<8x32xf32>
    %1014 = arith.mulf %1013, %981 : vector<8x32xf32>
    %1015 = arith.addf %1012, %1014 : vector<8x32xf32>
    %1016 = arith.addf %1015, %998 : vector<8x32xf32>
    %1017 = vector.broadcast %701 : f32 to vector<8x32xf32>
    %1018 = arith.mulf %1017, %1016 : vector<8x32xf32>
    %1019 = arith.addf %937, %1018 : vector<8x32xf32>
    %cst_115 = arith.constant 2.000000e+00 : f32
    %1020 = vector.broadcast %cst_115 : f32 to vector<8x32xf32>
    %1021 = arith.mulf %1020, %975 : vector<8x32xf32>
    %1022 = arith.addf %958, %1021 : vector<8x32xf32>
    %cst_116 = arith.constant 2.000000e+00 : f32
    %1023 = vector.broadcast %cst_116 : f32 to vector<8x32xf32>
    %1024 = arith.mulf %1023, %992 : vector<8x32xf32>
    %1025 = arith.addf %1022, %1024 : vector<8x32xf32>
    %1026 = arith.addf %1025, %1009 : vector<8x32xf32>
    %1027 = vector.broadcast %701 : f32 to vector<8x32xf32>
    %1028 = arith.mulf %1027, %1026 : vector<8x32xf32>
    %1029 = arith.addf %947, %1028 : vector<8x32xf32>
    %1030 = vector.extract_strided_slice %1019 {offsets = [0, 0], sizes = [8, 1], strides = [1, 1]} : vector<8x32xf32> to vector<8x1xf32>
    %1031 = vector.extract_strided_slice %1029 {offsets = [0, 0], sizes = [8, 1], strides = [1, 1]} : vector<8x32xf32> to vector<8x1xf32>
    %1032 = tpu.concatenate %1030, %1031, %1030, %1031, %1030, %1031 in 1 : vector<8x1xf32>, vector<8x1xf32>, vector<8x1xf32>, vector<8x1xf32>, vector<8x1xf32>, vector<8x1xf32> -> vector<8x6xf32>
    %c4_117 = arith.constant 4 : index
    %1033 = memref.load %arg0[%c4_117] : memref<8xf32, #tpu.memory_space<smem>>
    %c3_118 = arith.constant 3 : index
    %1034 = memref.load %arg0[%c3_118] : memref<8xf32, #tpu.memory_space<smem>>
    %1035 = arith.subf %1033, %1034 : f32
    %cst_119 = arith.constant 2.500000e-01 : f32
    %1036 = arith.mulf %1035, %cst_119 : f32
    %cst_120 = arith.constant 5.000000e-01 : f32
    %1037 = arith.mulf %cst_120, %1036 : f32
    %cst_121 = arith.constant 0.166666672 : f32
    %1038 = arith.mulf %1036, %cst_121 : f32
    %1039 = arith.mulf %1019, %8 : vector<8x32xf32>
    %1040 = arith.mulf %1029, %10 : vector<8x32xf32>
    %1041 = arith.addf %1039, %1040 : vector<8x32xf32>
    %1042 = arith.addf %1041, %12 : vector<8x32xf32>
    %1043 = math.tanh %1042 : vector<8x32xf32>
    %1044 = arith.mulf %1043, %14 : vector<8x32xf32>
    %cst_122 = arith.constant dense<0.000000e+00> : vector<8xf32>
    %1045 = vector.multi_reduction <add>, %1044, %cst_122 [1] : vector<8x32xf32> to vector<8xf32>
    %1046 = vector.shape_cast %1045 : vector<8xf32> to vector<8x1xf32>
    %1047 = vector.shape_cast %1046 : vector<8x1xf32> to vector<8x1xf32>
    %1048 = vector.broadcast %1047 : vector<8x1xf32> to vector<8x32xf32>
    %1049 = arith.addf %1048, %16 : vector<8x32xf32>
    %1050 = vector.broadcast %1037 : f32 to vector<8x32xf32>
    %1051 = arith.mulf %1050, %1029 : vector<8x32xf32>
    %1052 = arith.addf %1019, %1051 : vector<8x32xf32>
    %1053 = vector.broadcast %1037 : f32 to vector<8x32xf32>
    %1054 = arith.mulf %1053, %1049 : vector<8x32xf32>
    %1055 = arith.addf %1029, %1054 : vector<8x32xf32>
    %1056 = arith.mulf %1052, %8 : vector<8x32xf32>
    %1057 = arith.mulf %1055, %10 : vector<8x32xf32>
    %1058 = arith.addf %1056, %1057 : vector<8x32xf32>
    %1059 = arith.addf %1058, %12 : vector<8x32xf32>
    %1060 = math.tanh %1059 : vector<8x32xf32>
    %1061 = arith.mulf %1060, %14 : vector<8x32xf32>
    %cst_123 = arith.constant dense<0.000000e+00> : vector<8xf32>
    %1062 = vector.multi_reduction <add>, %1061, %cst_123 [1] : vector<8x32xf32> to vector<8xf32>
    %1063 = vector.shape_cast %1062 : vector<8xf32> to vector<8x1xf32>
    %1064 = vector.shape_cast %1063 : vector<8x1xf32> to vector<8x1xf32>
    %1065 = vector.broadcast %1064 : vector<8x1xf32> to vector<8x32xf32>
    %1066 = arith.addf %1065, %16 : vector<8x32xf32>
    %1067 = vector.broadcast %1037 : f32 to vector<8x32xf32>
    %1068 = arith.mulf %1067, %1055 : vector<8x32xf32>
    %1069 = arith.addf %1019, %1068 : vector<8x32xf32>
    %1070 = vector.broadcast %1037 : f32 to vector<8x32xf32>
    %1071 = arith.mulf %1070, %1066 : vector<8x32xf32>
    %1072 = arith.addf %1029, %1071 : vector<8x32xf32>
    %1073 = arith.mulf %1069, %8 : vector<8x32xf32>
    %1074 = arith.mulf %1072, %10 : vector<8x32xf32>
    %1075 = arith.addf %1073, %1074 : vector<8x32xf32>
    %1076 = arith.addf %1075, %12 : vector<8x32xf32>
    %1077 = math.tanh %1076 : vector<8x32xf32>
    %1078 = arith.mulf %1077, %14 : vector<8x32xf32>
    %cst_124 = arith.constant dense<0.000000e+00> : vector<8xf32>
    %1079 = vector.multi_reduction <add>, %1078, %cst_124 [1] : vector<8x32xf32> to vector<8xf32>
    %1080 = vector.shape_cast %1079 : vector<8xf32> to vector<8x1xf32>
    %1081 = vector.shape_cast %1080 : vector<8x1xf32> to vector<8x1xf32>
    %1082 = vector.broadcast %1081 : vector<8x1xf32> to vector<8x32xf32>
    %1083 = arith.addf %1082, %16 : vector<8x32xf32>
    %1084 = vector.broadcast %1036 : f32 to vector<8x32xf32>
    %1085 = arith.mulf %1084, %1072 : vector<8x32xf32>
    %1086 = arith.addf %1019, %1085 : vector<8x32xf32>
    %1087 = vector.broadcast %1036 : f32 to vector<8x32xf32>
    %1088 = arith.mulf %1087, %1083 : vector<8x32xf32>
    %1089 = arith.addf %1029, %1088 : vector<8x32xf32>
    %1090 = arith.mulf %1086, %8 : vector<8x32xf32>
    %1091 = arith.mulf %1089, %10 : vector<8x32xf32>
    %1092 = arith.addf %1090, %1091 : vector<8x32xf32>
    %1093 = arith.addf %1092, %12 : vector<8x32xf32>
    %1094 = math.tanh %1093 : vector<8x32xf32>
    %1095 = arith.mulf %1094, %14 : vector<8x32xf32>
    %cst_125 = arith.constant dense<0.000000e+00> : vector<8xf32>
    %1096 = vector.multi_reduction <add>, %1095, %cst_125 [1] : vector<8x32xf32> to vector<8xf32>
    %1097 = vector.shape_cast %1096 : vector<8xf32> to vector<8x1xf32>
    %1098 = vector.shape_cast %1097 : vector<8x1xf32> to vector<8x1xf32>
    %1099 = vector.broadcast %1098 : vector<8x1xf32> to vector<8x32xf32>
    %1100 = arith.addf %1099, %16 : vector<8x32xf32>
    %cst_126 = arith.constant 2.000000e+00 : f32
    %1101 = vector.broadcast %cst_126 : f32 to vector<8x32xf32>
    %1102 = arith.mulf %1101, %1055 : vector<8x32xf32>
    %1103 = arith.addf %1029, %1102 : vector<8x32xf32>
    %cst_127 = arith.constant 2.000000e+00 : f32
    %1104 = vector.broadcast %cst_127 : f32 to vector<8x32xf32>
    %1105 = arith.mulf %1104, %1072 : vector<8x32xf32>
    %1106 = arith.addf %1103, %1105 : vector<8x32xf32>
    %1107 = arith.addf %1106, %1089 : vector<8x32xf32>
    %1108 = vector.broadcast %1038 : f32 to vector<8x32xf32>
    %1109 = arith.mulf %1108, %1107 : vector<8x32xf32>
    %1110 = arith.addf %1019, %1109 : vector<8x32xf32>
    %cst_128 = arith.constant 2.000000e+00 : f32
    %1111 = vector.broadcast %cst_128 : f32 to vector<8x32xf32>
    %1112 = arith.mulf %1111, %1066 : vector<8x32xf32>
    %1113 = arith.addf %1049, %1112 : vector<8x32xf32>
    %cst_129 = arith.constant 2.000000e+00 : f32
    %1114 = vector.broadcast %cst_129 : f32 to vector<8x32xf32>
    %1115 = arith.mulf %1114, %1083 : vector<8x32xf32>
    %1116 = arith.addf %1113, %1115 : vector<8x32xf32>
    %1117 = arith.addf %1116, %1100 : vector<8x32xf32>
    %1118 = vector.broadcast %1038 : f32 to vector<8x32xf32>
    %1119 = arith.mulf %1118, %1117 : vector<8x32xf32>
    %1120 = arith.addf %1029, %1119 : vector<8x32xf32>
    %1121 = arith.mulf %1110, %8 : vector<8x32xf32>
    %1122 = arith.mulf %1120, %10 : vector<8x32xf32>
    %1123 = arith.addf %1121, %1122 : vector<8x32xf32>
    %1124 = arith.addf %1123, %12 : vector<8x32xf32>
    %1125 = math.tanh %1124 : vector<8x32xf32>
    %1126 = arith.mulf %1125, %14 : vector<8x32xf32>
    %cst_130 = arith.constant dense<0.000000e+00> : vector<8xf32>
    %1127 = vector.multi_reduction <add>, %1126, %cst_130 [1] : vector<8x32xf32> to vector<8xf32>
    %1128 = vector.shape_cast %1127 : vector<8xf32> to vector<8x1xf32>
    %1129 = vector.shape_cast %1128 : vector<8x1xf32> to vector<8x1xf32>
    %1130 = vector.broadcast %1129 : vector<8x1xf32> to vector<8x32xf32>
    %1131 = arith.addf %1130, %16 : vector<8x32xf32>
    %1132 = vector.broadcast %1037 : f32 to vector<8x32xf32>
    %1133 = arith.mulf %1132, %1120 : vector<8x32xf32>
    %1134 = arith.addf %1110, %1133 : vector<8x32xf32>
    %1135 = vector.broadcast %1037 : f32 to vector<8x32xf32>
    %1136 = arith.mulf %1135, %1131 : vector<8x32xf32>
    %1137 = arith.addf %1120, %1136 : vector<8x32xf32>
    %1138 = arith.mulf %1134, %8 : vector<8x32xf32>
    %1139 = arith.mulf %1137, %10 : vector<8x32xf32>
    %1140 = arith.addf %1138, %1139 : vector<8x32xf32>
    %1141 = arith.addf %1140, %12 : vector<8x32xf32>
    %1142 = math.tanh %1141 : vector<8x32xf32>
    %1143 = arith.mulf %1142, %14 : vector<8x32xf32>
    %cst_131 = arith.constant dense<0.000000e+00> : vector<8xf32>
    %1144 = vector.multi_reduction <add>, %1143, %cst_131 [1] : vector<8x32xf32> to vector<8xf32>
    %1145 = vector.shape_cast %1144 : vector<8xf32> to vector<8x1xf32>
    %1146 = vector.shape_cast %1145 : vector<8x1xf32> to vector<8x1xf32>
    %1147 = vector.broadcast %1146 : vector<8x1xf32> to vector<8x32xf32>
    %1148 = arith.addf %1147, %16 : vector<8x32xf32>
    %1149 = vector.broadcast %1037 : f32 to vector<8x32xf32>
    %1150 = arith.mulf %1149, %1137 : vector<8x32xf32>
    %1151 = arith.addf %1110, %1150 : vector<8x32xf32>
    %1152 = vector.broadcast %1037 : f32 to vector<8x32xf32>
    %1153 = arith.mulf %1152, %1148 : vector<8x32xf32>
    %1154 = arith.addf %1120, %1153 : vector<8x32xf32>
    %1155 = arith.mulf %1151, %8 : vector<8x32xf32>
    %1156 = arith.mulf %1154, %10 : vector<8x32xf32>
    %1157 = arith.addf %1155, %1156 : vector<8x32xf32>
    %1158 = arith.addf %1157, %12 : vector<8x32xf32>
    %1159 = math.tanh %1158 : vector<8x32xf32>
    %1160 = arith.mulf %1159, %14 : vector<8x32xf32>
    %cst_132 = arith.constant dense<0.000000e+00> : vector<8xf32>
    %1161 = vector.multi_reduction <add>, %1160, %cst_132 [1] : vector<8x32xf32> to vector<8xf32>
    %1162 = vector.shape_cast %1161 : vector<8xf32> to vector<8x1xf32>
    %1163 = vector.shape_cast %1162 : vector<8x1xf32> to vector<8x1xf32>
    %1164 = vector.broadcast %1163 : vector<8x1xf32> to vector<8x32xf32>
    %1165 = arith.addf %1164, %16 : vector<8x32xf32>
    %1166 = vector.broadcast %1036 : f32 to vector<8x32xf32>
    %1167 = arith.mulf %1166, %1154 : vector<8x32xf32>
    %1168 = arith.addf %1110, %1167 : vector<8x32xf32>
    %1169 = vector.broadcast %1036 : f32 to vector<8x32xf32>
    %1170 = arith.mulf %1169, %1165 : vector<8x32xf32>
    %1171 = arith.addf %1120, %1170 : vector<8x32xf32>
    %1172 = arith.mulf %1168, %8 : vector<8x32xf32>
    %1173 = arith.mulf %1171, %10 : vector<8x32xf32>
    %1174 = arith.addf %1172, %1173 : vector<8x32xf32>
    %1175 = arith.addf %1174, %12 : vector<8x32xf32>
    %1176 = math.tanh %1175 : vector<8x32xf32>
    %1177 = arith.mulf %1176, %14 : vector<8x32xf32>
    %cst_133 = arith.constant dense<0.000000e+00> : vector<8xf32>
    %1178 = vector.multi_reduction <add>, %1177, %cst_133 [1] : vector<8x32xf32> to vector<8xf32>
    %1179 = vector.shape_cast %1178 : vector<8xf32> to vector<8x1xf32>
    %1180 = vector.shape_cast %1179 : vector<8x1xf32> to vector<8x1xf32>
    %1181 = vector.broadcast %1180 : vector<8x1xf32> to vector<8x32xf32>
    %1182 = arith.addf %1181, %16 : vector<8x32xf32>
    %cst_134 = arith.constant 2.000000e+00 : f32
    %1183 = vector.broadcast %cst_134 : f32 to vector<8x32xf32>
    %1184 = arith.mulf %1183, %1137 : vector<8x32xf32>
    %1185 = arith.addf %1120, %1184 : vector<8x32xf32>
    %cst_135 = arith.constant 2.000000e+00 : f32
    %1186 = vector.broadcast %cst_135 : f32 to vector<8x32xf32>
    %1187 = arith.mulf %1186, %1154 : vector<8x32xf32>
    %1188 = arith.addf %1185, %1187 : vector<8x32xf32>
    %1189 = arith.addf %1188, %1171 : vector<8x32xf32>
    %1190 = vector.broadcast %1038 : f32 to vector<8x32xf32>
    %1191 = arith.mulf %1190, %1189 : vector<8x32xf32>
    %1192 = arith.addf %1110, %1191 : vector<8x32xf32>
    %cst_136 = arith.constant 2.000000e+00 : f32
    %1193 = vector.broadcast %cst_136 : f32 to vector<8x32xf32>
    %1194 = arith.mulf %1193, %1148 : vector<8x32xf32>
    %1195 = arith.addf %1131, %1194 : vector<8x32xf32>
    %cst_137 = arith.constant 2.000000e+00 : f32
    %1196 = vector.broadcast %cst_137 : f32 to vector<8x32xf32>
    %1197 = arith.mulf %1196, %1165 : vector<8x32xf32>
    %1198 = arith.addf %1195, %1197 : vector<8x32xf32>
    %1199 = arith.addf %1198, %1182 : vector<8x32xf32>
    %1200 = vector.broadcast %1038 : f32 to vector<8x32xf32>
    %1201 = arith.mulf %1200, %1199 : vector<8x32xf32>
    %1202 = arith.addf %1120, %1201 : vector<8x32xf32>
    %1203 = arith.mulf %1192, %8 : vector<8x32xf32>
    %1204 = arith.mulf %1202, %10 : vector<8x32xf32>
    %1205 = arith.addf %1203, %1204 : vector<8x32xf32>
    %1206 = arith.addf %1205, %12 : vector<8x32xf32>
    %1207 = math.tanh %1206 : vector<8x32xf32>
    %1208 = arith.mulf %1207, %14 : vector<8x32xf32>
    %cst_138 = arith.constant dense<0.000000e+00> : vector<8xf32>
    %1209 = vector.multi_reduction <add>, %1208, %cst_138 [1] : vector<8x32xf32> to vector<8xf32>
    %1210 = vector.shape_cast %1209 : vector<8xf32> to vector<8x1xf32>
    %1211 = vector.shape_cast %1210 : vector<8x1xf32> to vector<8x1xf32>
    %1212 = vector.broadcast %1211 : vector<8x1xf32> to vector<8x32xf32>
    %1213 = arith.addf %1212, %16 : vector<8x32xf32>
    %1214 = vector.broadcast %1037 : f32 to vector<8x32xf32>
    %1215 = arith.mulf %1214, %1202 : vector<8x32xf32>
    %1216 = arith.addf %1192, %1215 : vector<8x32xf32>
    %1217 = vector.broadcast %1037 : f32 to vector<8x32xf32>
    %1218 = arith.mulf %1217, %1213 : vector<8x32xf32>
    %1219 = arith.addf %1202, %1218 : vector<8x32xf32>
    %1220 = arith.mulf %1216, %8 : vector<8x32xf32>
    %1221 = arith.mulf %1219, %10 : vector<8x32xf32>
    %1222 = arith.addf %1220, %1221 : vector<8x32xf32>
    %1223 = arith.addf %1222, %12 : vector<8x32xf32>
    %1224 = math.tanh %1223 : vector<8x32xf32>
    %1225 = arith.mulf %1224, %14 : vector<8x32xf32>
    %cst_139 = arith.constant dense<0.000000e+00> : vector<8xf32>
    %1226 = vector.multi_reduction <add>, %1225, %cst_139 [1] : vector<8x32xf32> to vector<8xf32>
    %1227 = vector.shape_cast %1226 : vector<8xf32> to vector<8x1xf32>
    %1228 = vector.shape_cast %1227 : vector<8x1xf32> to vector<8x1xf32>
    %1229 = vector.broadcast %1228 : vector<8x1xf32> to vector<8x32xf32>
    %1230 = arith.addf %1229, %16 : vector<8x32xf32>
    %1231 = vector.broadcast %1037 : f32 to vector<8x32xf32>
    %1232 = arith.mulf %1231, %1219 : vector<8x32xf32>
    %1233 = arith.addf %1192, %1232 : vector<8x32xf32>
    %1234 = vector.broadcast %1037 : f32 to vector<8x32xf32>
    %1235 = arith.mulf %1234, %1230 : vector<8x32xf32>
    %1236 = arith.addf %1202, %1235 : vector<8x32xf32>
    %1237 = arith.mulf %1233, %8 : vector<8x32xf32>
    %1238 = arith.mulf %1236, %10 : vector<8x32xf32>
    %1239 = arith.addf %1237, %1238 : vector<8x32xf32>
    %1240 = arith.addf %1239, %12 : vector<8x32xf32>
    %1241 = math.tanh %1240 : vector<8x32xf32>
    %1242 = arith.mulf %1241, %14 : vector<8x32xf32>
    %cst_140 = arith.constant dense<0.000000e+00> : vector<8xf32>
    %1243 = vector.multi_reduction <add>, %1242, %cst_140 [1] : vector<8x32xf32> to vector<8xf32>
    %1244 = vector.shape_cast %1243 : vector<8xf32> to vector<8x1xf32>
    %1245 = vector.shape_cast %1244 : vector<8x1xf32> to vector<8x1xf32>
    %1246 = vector.broadcast %1245 : vector<8x1xf32> to vector<8x32xf32>
    %1247 = arith.addf %1246, %16 : vector<8x32xf32>
    %1248 = vector.broadcast %1036 : f32 to vector<8x32xf32>
    %1249 = arith.mulf %1248, %1236 : vector<8x32xf32>
    %1250 = arith.addf %1192, %1249 : vector<8x32xf32>
    %1251 = vector.broadcast %1036 : f32 to vector<8x32xf32>
    %1252 = arith.mulf %1251, %1247 : vector<8x32xf32>
    %1253 = arith.addf %1202, %1252 : vector<8x32xf32>
    %1254 = arith.mulf %1250, %8 : vector<8x32xf32>
    %1255 = arith.mulf %1253, %10 : vector<8x32xf32>
    %1256 = arith.addf %1254, %1255 : vector<8x32xf32>
    %1257 = arith.addf %1256, %12 : vector<8x32xf32>
    %1258 = math.tanh %1257 : vector<8x32xf32>
    %1259 = arith.mulf %1258, %14 : vector<8x32xf32>
    %cst_141 = arith.constant dense<0.000000e+00> : vector<8xf32>
    %1260 = vector.multi_reduction <add>, %1259, %cst_141 [1] : vector<8x32xf32> to vector<8xf32>
    %1261 = vector.shape_cast %1260 : vector<8xf32> to vector<8x1xf32>
    %1262 = vector.shape_cast %1261 : vector<8x1xf32> to vector<8x1xf32>
    %1263 = vector.broadcast %1262 : vector<8x1xf32> to vector<8x32xf32>
    %1264 = arith.addf %1263, %16 : vector<8x32xf32>
    %cst_142 = arith.constant 2.000000e+00 : f32
    %1265 = vector.broadcast %cst_142 : f32 to vector<8x32xf32>
    %1266 = arith.mulf %1265, %1219 : vector<8x32xf32>
    %1267 = arith.addf %1202, %1266 : vector<8x32xf32>
    %cst_143 = arith.constant 2.000000e+00 : f32
    %1268 = vector.broadcast %cst_143 : f32 to vector<8x32xf32>
    %1269 = arith.mulf %1268, %1236 : vector<8x32xf32>
    %1270 = arith.addf %1267, %1269 : vector<8x32xf32>
    %1271 = arith.addf %1270, %1253 : vector<8x32xf32>
    %1272 = vector.broadcast %1038 : f32 to vector<8x32xf32>
    %1273 = arith.mulf %1272, %1271 : vector<8x32xf32>
    %1274 = arith.addf %1192, %1273 : vector<8x32xf32>
    %cst_144 = arith.constant 2.000000e+00 : f32
    %1275 = vector.broadcast %cst_144 : f32 to vector<8x32xf32>
    %1276 = arith.mulf %1275, %1230 : vector<8x32xf32>
    %1277 = arith.addf %1213, %1276 : vector<8x32xf32>
    %cst_145 = arith.constant 2.000000e+00 : f32
    %1278 = vector.broadcast %cst_145 : f32 to vector<8x32xf32>
    %1279 = arith.mulf %1278, %1247 : vector<8x32xf32>
    %1280 = arith.addf %1277, %1279 : vector<8x32xf32>
    %1281 = arith.addf %1280, %1264 : vector<8x32xf32>
    %1282 = vector.broadcast %1038 : f32 to vector<8x32xf32>
    %1283 = arith.mulf %1282, %1281 : vector<8x32xf32>
    %1284 = arith.addf %1202, %1283 : vector<8x32xf32>
    %1285 = arith.mulf %1274, %8 : vector<8x32xf32>
    %1286 = arith.mulf %1284, %10 : vector<8x32xf32>
    %1287 = arith.addf %1285, %1286 : vector<8x32xf32>
    %1288 = arith.addf %1287, %12 : vector<8x32xf32>
    %1289 = math.tanh %1288 : vector<8x32xf32>
    %1290 = arith.mulf %1289, %14 : vector<8x32xf32>
    %cst_146 = arith.constant dense<0.000000e+00> : vector<8xf32>
    %1291 = vector.multi_reduction <add>, %1290, %cst_146 [1] : vector<8x32xf32> to vector<8xf32>
    %1292 = vector.shape_cast %1291 : vector<8xf32> to vector<8x1xf32>
    %1293 = vector.shape_cast %1292 : vector<8x1xf32> to vector<8x1xf32>
    %1294 = vector.broadcast %1293 : vector<8x1xf32> to vector<8x32xf32>
    %1295 = arith.addf %1294, %16 : vector<8x32xf32>
    %1296 = vector.broadcast %1037 : f32 to vector<8x32xf32>
    %1297 = arith.mulf %1296, %1284 : vector<8x32xf32>
    %1298 = arith.addf %1274, %1297 : vector<8x32xf32>
    %1299 = vector.broadcast %1037 : f32 to vector<8x32xf32>
    %1300 = arith.mulf %1299, %1295 : vector<8x32xf32>
    %1301 = arith.addf %1284, %1300 : vector<8x32xf32>
    %1302 = arith.mulf %1298, %8 : vector<8x32xf32>
    %1303 = arith.mulf %1301, %10 : vector<8x32xf32>
    %1304 = arith.addf %1302, %1303 : vector<8x32xf32>
    %1305 = arith.addf %1304, %12 : vector<8x32xf32>
    %1306 = math.tanh %1305 : vector<8x32xf32>
    %1307 = arith.mulf %1306, %14 : vector<8x32xf32>
    %cst_147 = arith.constant dense<0.000000e+00> : vector<8xf32>
    %1308 = vector.multi_reduction <add>, %1307, %cst_147 [1] : vector<8x32xf32> to vector<8xf32>
    %1309 = vector.shape_cast %1308 : vector<8xf32> to vector<8x1xf32>
    %1310 = vector.shape_cast %1309 : vector<8x1xf32> to vector<8x1xf32>
    %1311 = vector.broadcast %1310 : vector<8x1xf32> to vector<8x32xf32>
    %1312 = arith.addf %1311, %16 : vector<8x32xf32>
    %1313 = vector.broadcast %1037 : f32 to vector<8x32xf32>
    %1314 = arith.mulf %1313, %1301 : vector<8x32xf32>
    %1315 = arith.addf %1274, %1314 : vector<8x32xf32>
    %1316 = vector.broadcast %1037 : f32 to vector<8x32xf32>
    %1317 = arith.mulf %1316, %1312 : vector<8x32xf32>
    %1318 = arith.addf %1284, %1317 : vector<8x32xf32>
    %1319 = arith.mulf %1315, %8 : vector<8x32xf32>
    %1320 = arith.mulf %1318, %10 : vector<8x32xf32>
    %1321 = arith.addf %1319, %1320 : vector<8x32xf32>
    %1322 = arith.addf %1321, %12 : vector<8x32xf32>
    %1323 = math.tanh %1322 : vector<8x32xf32>
    %1324 = arith.mulf %1323, %14 : vector<8x32xf32>
    %cst_148 = arith.constant dense<0.000000e+00> : vector<8xf32>
    %1325 = vector.multi_reduction <add>, %1324, %cst_148 [1] : vector<8x32xf32> to vector<8xf32>
    %1326 = vector.shape_cast %1325 : vector<8xf32> to vector<8x1xf32>
    %1327 = vector.shape_cast %1326 : vector<8x1xf32> to vector<8x1xf32>
    %1328 = vector.broadcast %1327 : vector<8x1xf32> to vector<8x32xf32>
    %1329 = arith.addf %1328, %16 : vector<8x32xf32>
    %1330 = vector.broadcast %1036 : f32 to vector<8x32xf32>
    %1331 = arith.mulf %1330, %1318 : vector<8x32xf32>
    %1332 = arith.addf %1274, %1331 : vector<8x32xf32>
    %1333 = vector.broadcast %1036 : f32 to vector<8x32xf32>
    %1334 = arith.mulf %1333, %1329 : vector<8x32xf32>
    %1335 = arith.addf %1284, %1334 : vector<8x32xf32>
    %1336 = arith.mulf %1332, %8 : vector<8x32xf32>
    %1337 = arith.mulf %1335, %10 : vector<8x32xf32>
    %1338 = arith.addf %1336, %1337 : vector<8x32xf32>
    %1339 = arith.addf %1338, %12 : vector<8x32xf32>
    %1340 = math.tanh %1339 : vector<8x32xf32>
    %1341 = arith.mulf %1340, %14 : vector<8x32xf32>
    %cst_149 = arith.constant dense<0.000000e+00> : vector<8xf32>
    %1342 = vector.multi_reduction <add>, %1341, %cst_149 [1] : vector<8x32xf32> to vector<8xf32>
    %1343 = vector.shape_cast %1342 : vector<8xf32> to vector<8x1xf32>
    %1344 = vector.shape_cast %1343 : vector<8x1xf32> to vector<8x1xf32>
    %1345 = vector.broadcast %1344 : vector<8x1xf32> to vector<8x32xf32>
    %1346 = arith.addf %1345, %16 : vector<8x32xf32>
    %cst_150 = arith.constant 2.000000e+00 : f32
    %1347 = vector.broadcast %cst_150 : f32 to vector<8x32xf32>
    %1348 = arith.mulf %1347, %1301 : vector<8x32xf32>
    %1349 = arith.addf %1284, %1348 : vector<8x32xf32>
    %cst_151 = arith.constant 2.000000e+00 : f32
    %1350 = vector.broadcast %cst_151 : f32 to vector<8x32xf32>
    %1351 = arith.mulf %1350, %1318 : vector<8x32xf32>
    %1352 = arith.addf %1349, %1351 : vector<8x32xf32>
    %1353 = arith.addf %1352, %1335 : vector<8x32xf32>
    %1354 = vector.broadcast %1038 : f32 to vector<8x32xf32>
    %1355 = arith.mulf %1354, %1353 : vector<8x32xf32>
    %1356 = arith.addf %1274, %1355 : vector<8x32xf32>
    %cst_152 = arith.constant 2.000000e+00 : f32
    %1357 = vector.broadcast %cst_152 : f32 to vector<8x32xf32>
    %1358 = arith.mulf %1357, %1312 : vector<8x32xf32>
    %1359 = arith.addf %1295, %1358 : vector<8x32xf32>
    %cst_153 = arith.constant 2.000000e+00 : f32
    %1360 = vector.broadcast %cst_153 : f32 to vector<8x32xf32>
    %1361 = arith.mulf %1360, %1329 : vector<8x32xf32>
    %1362 = arith.addf %1359, %1361 : vector<8x32xf32>
    %1363 = arith.addf %1362, %1346 : vector<8x32xf32>
    %1364 = vector.broadcast %1038 : f32 to vector<8x32xf32>
    %1365 = arith.mulf %1364, %1363 : vector<8x32xf32>
    %1366 = arith.addf %1284, %1365 : vector<8x32xf32>
    %1367 = vector.extract_strided_slice %1356 {offsets = [0, 0], sizes = [8, 1], strides = [1, 1]} : vector<8x32xf32> to vector<8x1xf32>
    %1368 = vector.extract_strided_slice %1366 {offsets = [0, 0], sizes = [8, 1], strides = [1, 1]} : vector<8x32xf32> to vector<8x1xf32>
    %1369 = tpu.concatenate %1367, %1368, %1367, %1368, %1367, %1368 in 1 : vector<8x1xf32>, vector<8x1xf32>, vector<8x1xf32>, vector<8x1xf32>, vector<8x1xf32>, vector<8x1xf32> -> vector<8x6xf32>
    %c5 = arith.constant 5 : index
    %1370 = memref.load %arg0[%c5] : memref<8xf32, #tpu.memory_space<smem>>
    %c4_154 = arith.constant 4 : index
    %1371 = memref.load %arg0[%c4_154] : memref<8xf32, #tpu.memory_space<smem>>
    %1372 = arith.subf %1370, %1371 : f32
    %cst_155 = arith.constant 2.500000e-01 : f32
    %1373 = arith.mulf %1372, %cst_155 : f32
    %cst_156 = arith.constant 5.000000e-01 : f32
    %1374 = arith.mulf %cst_156, %1373 : f32
    %cst_157 = arith.constant 0.166666672 : f32
    %1375 = arith.mulf %1373, %cst_157 : f32
    %1376 = arith.mulf %1356, %8 : vector<8x32xf32>
    %1377 = arith.mulf %1366, %10 : vector<8x32xf32>
    %1378 = arith.addf %1376, %1377 : vector<8x32xf32>
    %1379 = arith.addf %1378, %12 : vector<8x32xf32>
    %1380 = math.tanh %1379 : vector<8x32xf32>
    %1381 = arith.mulf %1380, %14 : vector<8x32xf32>
    %cst_158 = arith.constant dense<0.000000e+00> : vector<8xf32>
    %1382 = vector.multi_reduction <add>, %1381, %cst_158 [1] : vector<8x32xf32> to vector<8xf32>
    %1383 = vector.shape_cast %1382 : vector<8xf32> to vector<8x1xf32>
    %1384 = vector.shape_cast %1383 : vector<8x1xf32> to vector<8x1xf32>
    %1385 = vector.broadcast %1384 : vector<8x1xf32> to vector<8x32xf32>
    %1386 = arith.addf %1385, %16 : vector<8x32xf32>
    %1387 = vector.broadcast %1374 : f32 to vector<8x32xf32>
    %1388 = arith.mulf %1387, %1366 : vector<8x32xf32>
    %1389 = arith.addf %1356, %1388 : vector<8x32xf32>
    %1390 = vector.broadcast %1374 : f32 to vector<8x32xf32>
    %1391 = arith.mulf %1390, %1386 : vector<8x32xf32>
    %1392 = arith.addf %1366, %1391 : vector<8x32xf32>
    %1393 = arith.mulf %1389, %8 : vector<8x32xf32>
    %1394 = arith.mulf %1392, %10 : vector<8x32xf32>
    %1395 = arith.addf %1393, %1394 : vector<8x32xf32>
    %1396 = arith.addf %1395, %12 : vector<8x32xf32>
    %1397 = math.tanh %1396 : vector<8x32xf32>
    %1398 = arith.mulf %1397, %14 : vector<8x32xf32>
    %cst_159 = arith.constant dense<0.000000e+00> : vector<8xf32>
    %1399 = vector.multi_reduction <add>, %1398, %cst_159 [1] : vector<8x32xf32> to vector<8xf32>
    %1400 = vector.shape_cast %1399 : vector<8xf32> to vector<8x1xf32>
    %1401 = vector.shape_cast %1400 : vector<8x1xf32> to vector<8x1xf32>
    %1402 = vector.broadcast %1401 : vector<8x1xf32> to vector<8x32xf32>
    %1403 = arith.addf %1402, %16 : vector<8x32xf32>
    %1404 = vector.broadcast %1374 : f32 to vector<8x32xf32>
    %1405 = arith.mulf %1404, %1392 : vector<8x32xf32>
    %1406 = arith.addf %1356, %1405 : vector<8x32xf32>
    %1407 = vector.broadcast %1374 : f32 to vector<8x32xf32>
    %1408 = arith.mulf %1407, %1403 : vector<8x32xf32>
    %1409 = arith.addf %1366, %1408 : vector<8x32xf32>
    %1410 = arith.mulf %1406, %8 : vector<8x32xf32>
    %1411 = arith.mulf %1409, %10 : vector<8x32xf32>
    %1412 = arith.addf %1410, %1411 : vector<8x32xf32>
    %1413 = arith.addf %1412, %12 : vector<8x32xf32>
    %1414 = math.tanh %1413 : vector<8x32xf32>
    %1415 = arith.mulf %1414, %14 : vector<8x32xf32>
    %cst_160 = arith.constant dense<0.000000e+00> : vector<8xf32>
    %1416 = vector.multi_reduction <add>, %1415, %cst_160 [1] : vector<8x32xf32> to vector<8xf32>
    %1417 = vector.shape_cast %1416 : vector<8xf32> to vector<8x1xf32>
    %1418 = vector.shape_cast %1417 : vector<8x1xf32> to vector<8x1xf32>
    %1419 = vector.broadcast %1418 : vector<8x1xf32> to vector<8x32xf32>
    %1420 = arith.addf %1419, %16 : vector<8x32xf32>
    %1421 = vector.broadcast %1373 : f32 to vector<8x32xf32>
    %1422 = arith.mulf %1421, %1409 : vector<8x32xf32>
    %1423 = arith.addf %1356, %1422 : vector<8x32xf32>
    %1424 = vector.broadcast %1373 : f32 to vector<8x32xf32>
    %1425 = arith.mulf %1424, %1420 : vector<8x32xf32>
    %1426 = arith.addf %1366, %1425 : vector<8x32xf32>
    %1427 = arith.mulf %1423, %8 : vector<8x32xf32>
    %1428 = arith.mulf %1426, %10 : vector<8x32xf32>
    %1429 = arith.addf %1427, %1428 : vector<8x32xf32>
    %1430 = arith.addf %1429, %12 : vector<8x32xf32>
    %1431 = math.tanh %1430 : vector<8x32xf32>
    %1432 = arith.mulf %1431, %14 : vector<8x32xf32>
    %cst_161 = arith.constant dense<0.000000e+00> : vector<8xf32>
    %1433 = vector.multi_reduction <add>, %1432, %cst_161 [1] : vector<8x32xf32> to vector<8xf32>
    %1434 = vector.shape_cast %1433 : vector<8xf32> to vector<8x1xf32>
    %1435 = vector.shape_cast %1434 : vector<8x1xf32> to vector<8x1xf32>
    %1436 = vector.broadcast %1435 : vector<8x1xf32> to vector<8x32xf32>
    %1437 = arith.addf %1436, %16 : vector<8x32xf32>
    %cst_162 = arith.constant 2.000000e+00 : f32
    %1438 = vector.broadcast %cst_162 : f32 to vector<8x32xf32>
    %1439 = arith.mulf %1438, %1392 : vector<8x32xf32>
    %1440 = arith.addf %1366, %1439 : vector<8x32xf32>
    %cst_163 = arith.constant 2.000000e+00 : f32
    %1441 = vector.broadcast %cst_163 : f32 to vector<8x32xf32>
    %1442 = arith.mulf %1441, %1409 : vector<8x32xf32>
    %1443 = arith.addf %1440, %1442 : vector<8x32xf32>
    %1444 = arith.addf %1443, %1426 : vector<8x32xf32>
    %1445 = vector.broadcast %1375 : f32 to vector<8x32xf32>
    %1446 = arith.mulf %1445, %1444 : vector<8x32xf32>
    %1447 = arith.addf %1356, %1446 : vector<8x32xf32>
    %cst_164 = arith.constant 2.000000e+00 : f32
    %1448 = vector.broadcast %cst_164 : f32 to vector<8x32xf32>
    %1449 = arith.mulf %1448, %1403 : vector<8x32xf32>
    %1450 = arith.addf %1386, %1449 : vector<8x32xf32>
    %cst_165 = arith.constant 2.000000e+00 : f32
    %1451 = vector.broadcast %cst_165 : f32 to vector<8x32xf32>
    %1452 = arith.mulf %1451, %1420 : vector<8x32xf32>
    %1453 = arith.addf %1450, %1452 : vector<8x32xf32>
    %1454 = arith.addf %1453, %1437 : vector<8x32xf32>
    %1455 = vector.broadcast %1375 : f32 to vector<8x32xf32>
    %1456 = arith.mulf %1455, %1454 : vector<8x32xf32>
    %1457 = arith.addf %1366, %1456 : vector<8x32xf32>
    %1458 = arith.mulf %1447, %8 : vector<8x32xf32>
    %1459 = arith.mulf %1457, %10 : vector<8x32xf32>
    %1460 = arith.addf %1458, %1459 : vector<8x32xf32>
    %1461 = arith.addf %1460, %12 : vector<8x32xf32>
    %1462 = math.tanh %1461 : vector<8x32xf32>
    %1463 = arith.mulf %1462, %14 : vector<8x32xf32>
    %cst_166 = arith.constant dense<0.000000e+00> : vector<8xf32>
    %1464 = vector.multi_reduction <add>, %1463, %cst_166 [1] : vector<8x32xf32> to vector<8xf32>
    %1465 = vector.shape_cast %1464 : vector<8xf32> to vector<8x1xf32>
    %1466 = vector.shape_cast %1465 : vector<8x1xf32> to vector<8x1xf32>
    %1467 = vector.broadcast %1466 : vector<8x1xf32> to vector<8x32xf32>
    %1468 = arith.addf %1467, %16 : vector<8x32xf32>
    %1469 = vector.broadcast %1374 : f32 to vector<8x32xf32>
    %1470 = arith.mulf %1469, %1457 : vector<8x32xf32>
    %1471 = arith.addf %1447, %1470 : vector<8x32xf32>
    %1472 = vector.broadcast %1374 : f32 to vector<8x32xf32>
    %1473 = arith.mulf %1472, %1468 : vector<8x32xf32>
    %1474 = arith.addf %1457, %1473 : vector<8x32xf32>
    %1475 = arith.mulf %1471, %8 : vector<8x32xf32>
    %1476 = arith.mulf %1474, %10 : vector<8x32xf32>
    %1477 = arith.addf %1475, %1476 : vector<8x32xf32>
    %1478 = arith.addf %1477, %12 : vector<8x32xf32>
    %1479 = math.tanh %1478 : vector<8x32xf32>
    %1480 = arith.mulf %1479, %14 : vector<8x32xf32>
    %cst_167 = arith.constant dense<0.000000e+00> : vector<8xf32>
    %1481 = vector.multi_reduction <add>, %1480, %cst_167 [1] : vector<8x32xf32> to vector<8xf32>
    %1482 = vector.shape_cast %1481 : vector<8xf32> to vector<8x1xf32>
    %1483 = vector.shape_cast %1482 : vector<8x1xf32> to vector<8x1xf32>
    %1484 = vector.broadcast %1483 : vector<8x1xf32> to vector<8x32xf32>
    %1485 = arith.addf %1484, %16 : vector<8x32xf32>
    %1486 = vector.broadcast %1374 : f32 to vector<8x32xf32>
    %1487 = arith.mulf %1486, %1474 : vector<8x32xf32>
    %1488 = arith.addf %1447, %1487 : vector<8x32xf32>
    %1489 = vector.broadcast %1374 : f32 to vector<8x32xf32>
    %1490 = arith.mulf %1489, %1485 : vector<8x32xf32>
    %1491 = arith.addf %1457, %1490 : vector<8x32xf32>
    %1492 = arith.mulf %1488, %8 : vector<8x32xf32>
    %1493 = arith.mulf %1491, %10 : vector<8x32xf32>
    %1494 = arith.addf %1492, %1493 : vector<8x32xf32>
    %1495 = arith.addf %1494, %12 : vector<8x32xf32>
    %1496 = math.tanh %1495 : vector<8x32xf32>
    %1497 = arith.mulf %1496, %14 : vector<8x32xf32>
    %cst_168 = arith.constant dense<0.000000e+00> : vector<8xf32>
    %1498 = vector.multi_reduction <add>, %1497, %cst_168 [1] : vector<8x32xf32> to vector<8xf32>
    %1499 = vector.shape_cast %1498 : vector<8xf32> to vector<8x1xf32>
    %1500 = vector.shape_cast %1499 : vector<8x1xf32> to vector<8x1xf32>
    %1501 = vector.broadcast %1500 : vector<8x1xf32> to vector<8x32xf32>
    %1502 = arith.addf %1501, %16 : vector<8x32xf32>
    %1503 = vector.broadcast %1373 : f32 to vector<8x32xf32>
    %1504 = arith.mulf %1503, %1491 : vector<8x32xf32>
    %1505 = arith.addf %1447, %1504 : vector<8x32xf32>
    %1506 = vector.broadcast %1373 : f32 to vector<8x32xf32>
    %1507 = arith.mulf %1506, %1502 : vector<8x32xf32>
    %1508 = arith.addf %1457, %1507 : vector<8x32xf32>
    %1509 = arith.mulf %1505, %8 : vector<8x32xf32>
    %1510 = arith.mulf %1508, %10 : vector<8x32xf32>
    %1511 = arith.addf %1509, %1510 : vector<8x32xf32>
    %1512 = arith.addf %1511, %12 : vector<8x32xf32>
    %1513 = math.tanh %1512 : vector<8x32xf32>
    %1514 = arith.mulf %1513, %14 : vector<8x32xf32>
    %cst_169 = arith.constant dense<0.000000e+00> : vector<8xf32>
    %1515 = vector.multi_reduction <add>, %1514, %cst_169 [1] : vector<8x32xf32> to vector<8xf32>
    %1516 = vector.shape_cast %1515 : vector<8xf32> to vector<8x1xf32>
    %1517 = vector.shape_cast %1516 : vector<8x1xf32> to vector<8x1xf32>
    %1518 = vector.broadcast %1517 : vector<8x1xf32> to vector<8x32xf32>
    %1519 = arith.addf %1518, %16 : vector<8x32xf32>
    %cst_170 = arith.constant 2.000000e+00 : f32
    %1520 = vector.broadcast %cst_170 : f32 to vector<8x32xf32>
    %1521 = arith.mulf %1520, %1474 : vector<8x32xf32>
    %1522 = arith.addf %1457, %1521 : vector<8x32xf32>
    %cst_171 = arith.constant 2.000000e+00 : f32
    %1523 = vector.broadcast %cst_171 : f32 to vector<8x32xf32>
    %1524 = arith.mulf %1523, %1491 : vector<8x32xf32>
    %1525 = arith.addf %1522, %1524 : vector<8x32xf32>
    %1526 = arith.addf %1525, %1508 : vector<8x32xf32>
    %1527 = vector.broadcast %1375 : f32 to vector<8x32xf32>
    %1528 = arith.mulf %1527, %1526 : vector<8x32xf32>
    %1529 = arith.addf %1447, %1528 : vector<8x32xf32>
    %cst_172 = arith.constant 2.000000e+00 : f32
    %1530 = vector.broadcast %cst_172 : f32 to vector<8x32xf32>
    %1531 = arith.mulf %1530, %1485 : vector<8x32xf32>
    %1532 = arith.addf %1468, %1531 : vector<8x32xf32>
    %cst_173 = arith.constant 2.000000e+00 : f32
    %1533 = vector.broadcast %cst_173 : f32 to vector<8x32xf32>
    %1534 = arith.mulf %1533, %1502 : vector<8x32xf32>
    %1535 = arith.addf %1532, %1534 : vector<8x32xf32>
    %1536 = arith.addf %1535, %1519 : vector<8x32xf32>
    %1537 = vector.broadcast %1375 : f32 to vector<8x32xf32>
    %1538 = arith.mulf %1537, %1536 : vector<8x32xf32>
    %1539 = arith.addf %1457, %1538 : vector<8x32xf32>
    %1540 = arith.mulf %1529, %8 : vector<8x32xf32>
    %1541 = arith.mulf %1539, %10 : vector<8x32xf32>
    %1542 = arith.addf %1540, %1541 : vector<8x32xf32>
    %1543 = arith.addf %1542, %12 : vector<8x32xf32>
    %1544 = math.tanh %1543 : vector<8x32xf32>
    %1545 = arith.mulf %1544, %14 : vector<8x32xf32>
    %cst_174 = arith.constant dense<0.000000e+00> : vector<8xf32>
    %1546 = vector.multi_reduction <add>, %1545, %cst_174 [1] : vector<8x32xf32> to vector<8xf32>
    %1547 = vector.shape_cast %1546 : vector<8xf32> to vector<8x1xf32>
    %1548 = vector.shape_cast %1547 : vector<8x1xf32> to vector<8x1xf32>
    %1549 = vector.broadcast %1548 : vector<8x1xf32> to vector<8x32xf32>
    %1550 = arith.addf %1549, %16 : vector<8x32xf32>
    %1551 = vector.broadcast %1374 : f32 to vector<8x32xf32>
    %1552 = arith.mulf %1551, %1539 : vector<8x32xf32>
    %1553 = arith.addf %1529, %1552 : vector<8x32xf32>
    %1554 = vector.broadcast %1374 : f32 to vector<8x32xf32>
    %1555 = arith.mulf %1554, %1550 : vector<8x32xf32>
    %1556 = arith.addf %1539, %1555 : vector<8x32xf32>
    %1557 = arith.mulf %1553, %8 : vector<8x32xf32>
    %1558 = arith.mulf %1556, %10 : vector<8x32xf32>
    %1559 = arith.addf %1557, %1558 : vector<8x32xf32>
    %1560 = arith.addf %1559, %12 : vector<8x32xf32>
    %1561 = math.tanh %1560 : vector<8x32xf32>
    %1562 = arith.mulf %1561, %14 : vector<8x32xf32>
    %cst_175 = arith.constant dense<0.000000e+00> : vector<8xf32>
    %1563 = vector.multi_reduction <add>, %1562, %cst_175 [1] : vector<8x32xf32> to vector<8xf32>
    %1564 = vector.shape_cast %1563 : vector<8xf32> to vector<8x1xf32>
    %1565 = vector.shape_cast %1564 : vector<8x1xf32> to vector<8x1xf32>
    %1566 = vector.broadcast %1565 : vector<8x1xf32> to vector<8x32xf32>
    %1567 = arith.addf %1566, %16 : vector<8x32xf32>
    %1568 = vector.broadcast %1374 : f32 to vector<8x32xf32>
    %1569 = arith.mulf %1568, %1556 : vector<8x32xf32>
    %1570 = arith.addf %1529, %1569 : vector<8x32xf32>
    %1571 = vector.broadcast %1374 : f32 to vector<8x32xf32>
    %1572 = arith.mulf %1571, %1567 : vector<8x32xf32>
    %1573 = arith.addf %1539, %1572 : vector<8x32xf32>
    %1574 = arith.mulf %1570, %8 : vector<8x32xf32>
    %1575 = arith.mulf %1573, %10 : vector<8x32xf32>
    %1576 = arith.addf %1574, %1575 : vector<8x32xf32>
    %1577 = arith.addf %1576, %12 : vector<8x32xf32>
    %1578 = math.tanh %1577 : vector<8x32xf32>
    %1579 = arith.mulf %1578, %14 : vector<8x32xf32>
    %cst_176 = arith.constant dense<0.000000e+00> : vector<8xf32>
    %1580 = vector.multi_reduction <add>, %1579, %cst_176 [1] : vector<8x32xf32> to vector<8xf32>
    %1581 = vector.shape_cast %1580 : vector<8xf32> to vector<8x1xf32>
    %1582 = vector.shape_cast %1581 : vector<8x1xf32> to vector<8x1xf32>
    %1583 = vector.broadcast %1582 : vector<8x1xf32> to vector<8x32xf32>
    %1584 = arith.addf %1583, %16 : vector<8x32xf32>
    %1585 = vector.broadcast %1373 : f32 to vector<8x32xf32>
    %1586 = arith.mulf %1585, %1573 : vector<8x32xf32>
    %1587 = arith.addf %1529, %1586 : vector<8x32xf32>
    %1588 = vector.broadcast %1373 : f32 to vector<8x32xf32>
    %1589 = arith.mulf %1588, %1584 : vector<8x32xf32>
    %1590 = arith.addf %1539, %1589 : vector<8x32xf32>
    %1591 = arith.mulf %1587, %8 : vector<8x32xf32>
    %1592 = arith.mulf %1590, %10 : vector<8x32xf32>
    %1593 = arith.addf %1591, %1592 : vector<8x32xf32>
    %1594 = arith.addf %1593, %12 : vector<8x32xf32>
    %1595 = math.tanh %1594 : vector<8x32xf32>
    %1596 = arith.mulf %1595, %14 : vector<8x32xf32>
    %cst_177 = arith.constant dense<0.000000e+00> : vector<8xf32>
    %1597 = vector.multi_reduction <add>, %1596, %cst_177 [1] : vector<8x32xf32> to vector<8xf32>
    %1598 = vector.shape_cast %1597 : vector<8xf32> to vector<8x1xf32>
    %1599 = vector.shape_cast %1598 : vector<8x1xf32> to vector<8x1xf32>
    %1600 = vector.broadcast %1599 : vector<8x1xf32> to vector<8x32xf32>
    %1601 = arith.addf %1600, %16 : vector<8x32xf32>
    %cst_178 = arith.constant 2.000000e+00 : f32
    %1602 = vector.broadcast %cst_178 : f32 to vector<8x32xf32>
    %1603 = arith.mulf %1602, %1556 : vector<8x32xf32>
    %1604 = arith.addf %1539, %1603 : vector<8x32xf32>
    %cst_179 = arith.constant 2.000000e+00 : f32
    %1605 = vector.broadcast %cst_179 : f32 to vector<8x32xf32>
    %1606 = arith.mulf %1605, %1573 : vector<8x32xf32>
    %1607 = arith.addf %1604, %1606 : vector<8x32xf32>
    %1608 = arith.addf %1607, %1590 : vector<8x32xf32>
    %1609 = vector.broadcast %1375 : f32 to vector<8x32xf32>
    %1610 = arith.mulf %1609, %1608 : vector<8x32xf32>
    %1611 = arith.addf %1529, %1610 : vector<8x32xf32>
    %cst_180 = arith.constant 2.000000e+00 : f32
    %1612 = vector.broadcast %cst_180 : f32 to vector<8x32xf32>
    %1613 = arith.mulf %1612, %1567 : vector<8x32xf32>
    %1614 = arith.addf %1550, %1613 : vector<8x32xf32>
    %cst_181 = arith.constant 2.000000e+00 : f32
    %1615 = vector.broadcast %cst_181 : f32 to vector<8x32xf32>
    %1616 = arith.mulf %1615, %1584 : vector<8x32xf32>
    %1617 = arith.addf %1614, %1616 : vector<8x32xf32>
    %1618 = arith.addf %1617, %1601 : vector<8x32xf32>
    %1619 = vector.broadcast %1375 : f32 to vector<8x32xf32>
    %1620 = arith.mulf %1619, %1618 : vector<8x32xf32>
    %1621 = arith.addf %1539, %1620 : vector<8x32xf32>
    %1622 = arith.mulf %1611, %8 : vector<8x32xf32>
    %1623 = arith.mulf %1621, %10 : vector<8x32xf32>
    %1624 = arith.addf %1622, %1623 : vector<8x32xf32>
    %1625 = arith.addf %1624, %12 : vector<8x32xf32>
    %1626 = math.tanh %1625 : vector<8x32xf32>
    %1627 = arith.mulf %1626, %14 : vector<8x32xf32>
    %cst_182 = arith.constant dense<0.000000e+00> : vector<8xf32>
    %1628 = vector.multi_reduction <add>, %1627, %cst_182 [1] : vector<8x32xf32> to vector<8xf32>
    %1629 = vector.shape_cast %1628 : vector<8xf32> to vector<8x1xf32>
    %1630 = vector.shape_cast %1629 : vector<8x1xf32> to vector<8x1xf32>
    %1631 = vector.broadcast %1630 : vector<8x1xf32> to vector<8x32xf32>
    %1632 = arith.addf %1631, %16 : vector<8x32xf32>
    %1633 = vector.broadcast %1374 : f32 to vector<8x32xf32>
    %1634 = arith.mulf %1633, %1621 : vector<8x32xf32>
    %1635 = arith.addf %1611, %1634 : vector<8x32xf32>
    %1636 = vector.broadcast %1374 : f32 to vector<8x32xf32>
    %1637 = arith.mulf %1636, %1632 : vector<8x32xf32>
    %1638 = arith.addf %1621, %1637 : vector<8x32xf32>
    %1639 = arith.mulf %1635, %8 : vector<8x32xf32>
    %1640 = arith.mulf %1638, %10 : vector<8x32xf32>
    %1641 = arith.addf %1639, %1640 : vector<8x32xf32>
    %1642 = arith.addf %1641, %12 : vector<8x32xf32>
    %1643 = math.tanh %1642 : vector<8x32xf32>
    %1644 = arith.mulf %1643, %14 : vector<8x32xf32>
    %cst_183 = arith.constant dense<0.000000e+00> : vector<8xf32>
    %1645 = vector.multi_reduction <add>, %1644, %cst_183 [1] : vector<8x32xf32> to vector<8xf32>
    %1646 = vector.shape_cast %1645 : vector<8xf32> to vector<8x1xf32>
    %1647 = vector.shape_cast %1646 : vector<8x1xf32> to vector<8x1xf32>
    %1648 = vector.broadcast %1647 : vector<8x1xf32> to vector<8x32xf32>
    %1649 = arith.addf %1648, %16 : vector<8x32xf32>
    %1650 = vector.broadcast %1374 : f32 to vector<8x32xf32>
    %1651 = arith.mulf %1650, %1638 : vector<8x32xf32>
    %1652 = arith.addf %1611, %1651 : vector<8x32xf32>
    %1653 = vector.broadcast %1374 : f32 to vector<8x32xf32>
    %1654 = arith.mulf %1653, %1649 : vector<8x32xf32>
    %1655 = arith.addf %1621, %1654 : vector<8x32xf32>
    %1656 = arith.mulf %1652, %8 : vector<8x32xf32>
    %1657 = arith.mulf %1655, %10 : vector<8x32xf32>
    %1658 = arith.addf %1656, %1657 : vector<8x32xf32>
    %1659 = arith.addf %1658, %12 : vector<8x32xf32>
    %1660 = math.tanh %1659 : vector<8x32xf32>
    %1661 = arith.mulf %1660, %14 : vector<8x32xf32>
    %cst_184 = arith.constant dense<0.000000e+00> : vector<8xf32>
    %1662 = vector.multi_reduction <add>, %1661, %cst_184 [1] : vector<8x32xf32> to vector<8xf32>
    %1663 = vector.shape_cast %1662 : vector<8xf32> to vector<8x1xf32>
    %1664 = vector.shape_cast %1663 : vector<8x1xf32> to vector<8x1xf32>
    %1665 = vector.broadcast %1664 : vector<8x1xf32> to vector<8x32xf32>
    %1666 = arith.addf %1665, %16 : vector<8x32xf32>
    %1667 = vector.broadcast %1373 : f32 to vector<8x32xf32>
    %1668 = arith.mulf %1667, %1655 : vector<8x32xf32>
    %1669 = arith.addf %1611, %1668 : vector<8x32xf32>
    %1670 = vector.broadcast %1373 : f32 to vector<8x32xf32>
    %1671 = arith.mulf %1670, %1666 : vector<8x32xf32>
    %1672 = arith.addf %1621, %1671 : vector<8x32xf32>
    %1673 = arith.mulf %1669, %8 : vector<8x32xf32>
    %1674 = arith.mulf %1672, %10 : vector<8x32xf32>
    %1675 = arith.addf %1673, %1674 : vector<8x32xf32>
    %1676 = arith.addf %1675, %12 : vector<8x32xf32>
    %1677 = math.tanh %1676 : vector<8x32xf32>
    %1678 = arith.mulf %1677, %14 : vector<8x32xf32>
    %cst_185 = arith.constant dense<0.000000e+00> : vector<8xf32>
    %1679 = vector.multi_reduction <add>, %1678, %cst_185 [1] : vector<8x32xf32> to vector<8xf32>
    %1680 = vector.shape_cast %1679 : vector<8xf32> to vector<8x1xf32>
    %1681 = vector.shape_cast %1680 : vector<8x1xf32> to vector<8x1xf32>
    %1682 = vector.broadcast %1681 : vector<8x1xf32> to vector<8x32xf32>
    %1683 = arith.addf %1682, %16 : vector<8x32xf32>
    %cst_186 = arith.constant 2.000000e+00 : f32
    %1684 = vector.broadcast %cst_186 : f32 to vector<8x32xf32>
    %1685 = arith.mulf %1684, %1638 : vector<8x32xf32>
    %1686 = arith.addf %1621, %1685 : vector<8x32xf32>
    %cst_187 = arith.constant 2.000000e+00 : f32
    %1687 = vector.broadcast %cst_187 : f32 to vector<8x32xf32>
    %1688 = arith.mulf %1687, %1655 : vector<8x32xf32>
    %1689 = arith.addf %1686, %1688 : vector<8x32xf32>
    %1690 = arith.addf %1689, %1672 : vector<8x32xf32>
    %1691 = vector.broadcast %1375 : f32 to vector<8x32xf32>
    %1692 = arith.mulf %1691, %1690 : vector<8x32xf32>
    %1693 = arith.addf %1611, %1692 : vector<8x32xf32>
    %cst_188 = arith.constant 2.000000e+00 : f32
    %1694 = vector.broadcast %cst_188 : f32 to vector<8x32xf32>
    %1695 = arith.mulf %1694, %1649 : vector<8x32xf32>
    %1696 = arith.addf %1632, %1695 : vector<8x32xf32>
    %cst_189 = arith.constant 2.000000e+00 : f32
    %1697 = vector.broadcast %cst_189 : f32 to vector<8x32xf32>
    %1698 = arith.mulf %1697, %1666 : vector<8x32xf32>
    %1699 = arith.addf %1696, %1698 : vector<8x32xf32>
    %1700 = arith.addf %1699, %1683 : vector<8x32xf32>
    %1701 = vector.broadcast %1375 : f32 to vector<8x32xf32>
    %1702 = arith.mulf %1701, %1700 : vector<8x32xf32>
    %1703 = arith.addf %1621, %1702 : vector<8x32xf32>
    %1704 = vector.extract_strided_slice %1693 {offsets = [0, 0], sizes = [8, 1], strides = [1, 1]} : vector<8x32xf32> to vector<8x1xf32>
    %1705 = vector.extract_strided_slice %1703 {offsets = [0, 0], sizes = [8, 1], strides = [1, 1]} : vector<8x32xf32> to vector<8x1xf32>
    %1706 = tpu.concatenate %1704, %1705, %1704, %1705, %1704, %1705 in 1 : vector<8x1xf32>, vector<8x1xf32>, vector<8x1xf32>, vector<8x1xf32>, vector<8x1xf32>, vector<8x1xf32> -> vector<8x6xf32>
    %c6 = arith.constant 6 : index
    %1707 = memref.load %arg0[%c6] : memref<8xf32, #tpu.memory_space<smem>>
    %c5_190 = arith.constant 5 : index
    %1708 = memref.load %arg0[%c5_190] : memref<8xf32, #tpu.memory_space<smem>>
    %1709 = arith.subf %1707, %1708 : f32
    %cst_191 = arith.constant 2.500000e-01 : f32
    %1710 = arith.mulf %1709, %cst_191 : f32
    %cst_192 = arith.constant 5.000000e-01 : f32
    %1711 = arith.mulf %cst_192, %1710 : f32
    %cst_193 = arith.constant 0.166666672 : f32
    %1712 = arith.mulf %1710, %cst_193 : f32
    %1713 = arith.mulf %1693, %8 : vector<8x32xf32>
    %1714 = arith.mulf %1703, %10 : vector<8x32xf32>
    %1715 = arith.addf %1713, %1714 : vector<8x32xf32>
    %1716 = arith.addf %1715, %12 : vector<8x32xf32>
    %1717 = math.tanh %1716 : vector<8x32xf32>
    %1718 = arith.mulf %1717, %14 : vector<8x32xf32>
    %cst_194 = arith.constant dense<0.000000e+00> : vector<8xf32>
    %1719 = vector.multi_reduction <add>, %1718, %cst_194 [1] : vector<8x32xf32> to vector<8xf32>
    %1720 = vector.shape_cast %1719 : vector<8xf32> to vector<8x1xf32>
    %1721 = vector.shape_cast %1720 : vector<8x1xf32> to vector<8x1xf32>
    %1722 = vector.broadcast %1721 : vector<8x1xf32> to vector<8x32xf32>
    %1723 = arith.addf %1722, %16 : vector<8x32xf32>
    %1724 = vector.broadcast %1711 : f32 to vector<8x32xf32>
    %1725 = arith.mulf %1724, %1703 : vector<8x32xf32>
    %1726 = arith.addf %1693, %1725 : vector<8x32xf32>
    %1727 = vector.broadcast %1711 : f32 to vector<8x32xf32>
    %1728 = arith.mulf %1727, %1723 : vector<8x32xf32>
    %1729 = arith.addf %1703, %1728 : vector<8x32xf32>
    %1730 = arith.mulf %1726, %8 : vector<8x32xf32>
    %1731 = arith.mulf %1729, %10 : vector<8x32xf32>
    %1732 = arith.addf %1730, %1731 : vector<8x32xf32>
    %1733 = arith.addf %1732, %12 : vector<8x32xf32>
    %1734 = math.tanh %1733 : vector<8x32xf32>
    %1735 = arith.mulf %1734, %14 : vector<8x32xf32>
    %cst_195 = arith.constant dense<0.000000e+00> : vector<8xf32>
    %1736 = vector.multi_reduction <add>, %1735, %cst_195 [1] : vector<8x32xf32> to vector<8xf32>
    %1737 = vector.shape_cast %1736 : vector<8xf32> to vector<8x1xf32>
    %1738 = vector.shape_cast %1737 : vector<8x1xf32> to vector<8x1xf32>
    %1739 = vector.broadcast %1738 : vector<8x1xf32> to vector<8x32xf32>
    %1740 = arith.addf %1739, %16 : vector<8x32xf32>
    %1741 = vector.broadcast %1711 : f32 to vector<8x32xf32>
    %1742 = arith.mulf %1741, %1729 : vector<8x32xf32>
    %1743 = arith.addf %1693, %1742 : vector<8x32xf32>
    %1744 = vector.broadcast %1711 : f32 to vector<8x32xf32>
    %1745 = arith.mulf %1744, %1740 : vector<8x32xf32>
    %1746 = arith.addf %1703, %1745 : vector<8x32xf32>
    %1747 = arith.mulf %1743, %8 : vector<8x32xf32>
    %1748 = arith.mulf %1746, %10 : vector<8x32xf32>
    %1749 = arith.addf %1747, %1748 : vector<8x32xf32>
    %1750 = arith.addf %1749, %12 : vector<8x32xf32>
    %1751 = math.tanh %1750 : vector<8x32xf32>
    %1752 = arith.mulf %1751, %14 : vector<8x32xf32>
    %cst_196 = arith.constant dense<0.000000e+00> : vector<8xf32>
    %1753 = vector.multi_reduction <add>, %1752, %cst_196 [1] : vector<8x32xf32> to vector<8xf32>
    %1754 = vector.shape_cast %1753 : vector<8xf32> to vector<8x1xf32>
    %1755 = vector.shape_cast %1754 : vector<8x1xf32> to vector<8x1xf32>
    %1756 = vector.broadcast %1755 : vector<8x1xf32> to vector<8x32xf32>
    %1757 = arith.addf %1756, %16 : vector<8x32xf32>
    %1758 = vector.broadcast %1710 : f32 to vector<8x32xf32>
    %1759 = arith.mulf %1758, %1746 : vector<8x32xf32>
    %1760 = arith.addf %1693, %1759 : vector<8x32xf32>
    %1761 = vector.broadcast %1710 : f32 to vector<8x32xf32>
    %1762 = arith.mulf %1761, %1757 : vector<8x32xf32>
    %1763 = arith.addf %1703, %1762 : vector<8x32xf32>
    %1764 = arith.mulf %1760, %8 : vector<8x32xf32>
    %1765 = arith.mulf %1763, %10 : vector<8x32xf32>
    %1766 = arith.addf %1764, %1765 : vector<8x32xf32>
    %1767 = arith.addf %1766, %12 : vector<8x32xf32>
    %1768 = math.tanh %1767 : vector<8x32xf32>
    %1769 = arith.mulf %1768, %14 : vector<8x32xf32>
    %cst_197 = arith.constant dense<0.000000e+00> : vector<8xf32>
    %1770 = vector.multi_reduction <add>, %1769, %cst_197 [1] : vector<8x32xf32> to vector<8xf32>
    %1771 = vector.shape_cast %1770 : vector<8xf32> to vector<8x1xf32>
    %1772 = vector.shape_cast %1771 : vector<8x1xf32> to vector<8x1xf32>
    %1773 = vector.broadcast %1772 : vector<8x1xf32> to vector<8x32xf32>
    %1774 = arith.addf %1773, %16 : vector<8x32xf32>
    %cst_198 = arith.constant 2.000000e+00 : f32
    %1775 = vector.broadcast %cst_198 : f32 to vector<8x32xf32>
    %1776 = arith.mulf %1775, %1729 : vector<8x32xf32>
    %1777 = arith.addf %1703, %1776 : vector<8x32xf32>
    %cst_199 = arith.constant 2.000000e+00 : f32
    %1778 = vector.broadcast %cst_199 : f32 to vector<8x32xf32>
    %1779 = arith.mulf %1778, %1746 : vector<8x32xf32>
    %1780 = arith.addf %1777, %1779 : vector<8x32xf32>
    %1781 = arith.addf %1780, %1763 : vector<8x32xf32>
    %1782 = vector.broadcast %1712 : f32 to vector<8x32xf32>
    %1783 = arith.mulf %1782, %1781 : vector<8x32xf32>
    %1784 = arith.addf %1693, %1783 : vector<8x32xf32>
    %cst_200 = arith.constant 2.000000e+00 : f32
    %1785 = vector.broadcast %cst_200 : f32 to vector<8x32xf32>
    %1786 = arith.mulf %1785, %1740 : vector<8x32xf32>
    %1787 = arith.addf %1723, %1786 : vector<8x32xf32>
    %cst_201 = arith.constant 2.000000e+00 : f32
    %1788 = vector.broadcast %cst_201 : f32 to vector<8x32xf32>
    %1789 = arith.mulf %1788, %1757 : vector<8x32xf32>
    %1790 = arith.addf %1787, %1789 : vector<8x32xf32>
    %1791 = arith.addf %1790, %1774 : vector<8x32xf32>
    %1792 = vector.broadcast %1712 : f32 to vector<8x32xf32>
    %1793 = arith.mulf %1792, %1791 : vector<8x32xf32>
    %1794 = arith.addf %1703, %1793 : vector<8x32xf32>
    %1795 = arith.mulf %1784, %8 : vector<8x32xf32>
    %1796 = arith.mulf %1794, %10 : vector<8x32xf32>
    %1797 = arith.addf %1795, %1796 : vector<8x32xf32>
    %1798 = arith.addf %1797, %12 : vector<8x32xf32>
    %1799 = math.tanh %1798 : vector<8x32xf32>
    %1800 = arith.mulf %1799, %14 : vector<8x32xf32>
    %cst_202 = arith.constant dense<0.000000e+00> : vector<8xf32>
    %1801 = vector.multi_reduction <add>, %1800, %cst_202 [1] : vector<8x32xf32> to vector<8xf32>
    %1802 = vector.shape_cast %1801 : vector<8xf32> to vector<8x1xf32>
    %1803 = vector.shape_cast %1802 : vector<8x1xf32> to vector<8x1xf32>
    %1804 = vector.broadcast %1803 : vector<8x1xf32> to vector<8x32xf32>
    %1805 = arith.addf %1804, %16 : vector<8x32xf32>
    %1806 = vector.broadcast %1711 : f32 to vector<8x32xf32>
    %1807 = arith.mulf %1806, %1794 : vector<8x32xf32>
    %1808 = arith.addf %1784, %1807 : vector<8x32xf32>
    %1809 = vector.broadcast %1711 : f32 to vector<8x32xf32>
    %1810 = arith.mulf %1809, %1805 : vector<8x32xf32>
    %1811 = arith.addf %1794, %1810 : vector<8x32xf32>
    %1812 = arith.mulf %1808, %8 : vector<8x32xf32>
    %1813 = arith.mulf %1811, %10 : vector<8x32xf32>
    %1814 = arith.addf %1812, %1813 : vector<8x32xf32>
    %1815 = arith.addf %1814, %12 : vector<8x32xf32>
    %1816 = math.tanh %1815 : vector<8x32xf32>
    %1817 = arith.mulf %1816, %14 : vector<8x32xf32>
    %cst_203 = arith.constant dense<0.000000e+00> : vector<8xf32>
    %1818 = vector.multi_reduction <add>, %1817, %cst_203 [1] : vector<8x32xf32> to vector<8xf32>
    %1819 = vector.shape_cast %1818 : vector<8xf32> to vector<8x1xf32>
    %1820 = vector.shape_cast %1819 : vector<8x1xf32> to vector<8x1xf32>
    %1821 = vector.broadcast %1820 : vector<8x1xf32> to vector<8x32xf32>
    %1822 = arith.addf %1821, %16 : vector<8x32xf32>
    %1823 = vector.broadcast %1711 : f32 to vector<8x32xf32>
    %1824 = arith.mulf %1823, %1811 : vector<8x32xf32>
    %1825 = arith.addf %1784, %1824 : vector<8x32xf32>
    %1826 = vector.broadcast %1711 : f32 to vector<8x32xf32>
    %1827 = arith.mulf %1826, %1822 : vector<8x32xf32>
    %1828 = arith.addf %1794, %1827 : vector<8x32xf32>
    %1829 = arith.mulf %1825, %8 : vector<8x32xf32>
    %1830 = arith.mulf %1828, %10 : vector<8x32xf32>
    %1831 = arith.addf %1829, %1830 : vector<8x32xf32>
    %1832 = arith.addf %1831, %12 : vector<8x32xf32>
    %1833 = math.tanh %1832 : vector<8x32xf32>
    %1834 = arith.mulf %1833, %14 : vector<8x32xf32>
    %cst_204 = arith.constant dense<0.000000e+00> : vector<8xf32>
    %1835 = vector.multi_reduction <add>, %1834, %cst_204 [1] : vector<8x32xf32> to vector<8xf32>
    %1836 = vector.shape_cast %1835 : vector<8xf32> to vector<8x1xf32>
    %1837 = vector.shape_cast %1836 : vector<8x1xf32> to vector<8x1xf32>
    %1838 = vector.broadcast %1837 : vector<8x1xf32> to vector<8x32xf32>
    %1839 = arith.addf %1838, %16 : vector<8x32xf32>
    %1840 = vector.broadcast %1710 : f32 to vector<8x32xf32>
    %1841 = arith.mulf %1840, %1828 : vector<8x32xf32>
    %1842 = arith.addf %1784, %1841 : vector<8x32xf32>
    %1843 = vector.broadcast %1710 : f32 to vector<8x32xf32>
    %1844 = arith.mulf %1843, %1839 : vector<8x32xf32>
    %1845 = arith.addf %1794, %1844 : vector<8x32xf32>
    %1846 = arith.mulf %1842, %8 : vector<8x32xf32>
    %1847 = arith.mulf %1845, %10 : vector<8x32xf32>
    %1848 = arith.addf %1846, %1847 : vector<8x32xf32>
    %1849 = arith.addf %1848, %12 : vector<8x32xf32>
    %1850 = math.tanh %1849 : vector<8x32xf32>
    %1851 = arith.mulf %1850, %14 : vector<8x32xf32>
    %cst_205 = arith.constant dense<0.000000e+00> : vector<8xf32>
    %1852 = vector.multi_reduction <add>, %1851, %cst_205 [1] : vector<8x32xf32> to vector<8xf32>
    %1853 = vector.shape_cast %1852 : vector<8xf32> to vector<8x1xf32>
    %1854 = vector.shape_cast %1853 : vector<8x1xf32> to vector<8x1xf32>
    %1855 = vector.broadcast %1854 : vector<8x1xf32> to vector<8x32xf32>
    %1856 = arith.addf %1855, %16 : vector<8x32xf32>
    %cst_206 = arith.constant 2.000000e+00 : f32
    %1857 = vector.broadcast %cst_206 : f32 to vector<8x32xf32>
    %1858 = arith.mulf %1857, %1811 : vector<8x32xf32>
    %1859 = arith.addf %1794, %1858 : vector<8x32xf32>
    %cst_207 = arith.constant 2.000000e+00 : f32
    %1860 = vector.broadcast %cst_207 : f32 to vector<8x32xf32>
    %1861 = arith.mulf %1860, %1828 : vector<8x32xf32>
    %1862 = arith.addf %1859, %1861 : vector<8x32xf32>
    %1863 = arith.addf %1862, %1845 : vector<8x32xf32>
    %1864 = vector.broadcast %1712 : f32 to vector<8x32xf32>
    %1865 = arith.mulf %1864, %1863 : vector<8x32xf32>
    %1866 = arith.addf %1784, %1865 : vector<8x32xf32>
    %cst_208 = arith.constant 2.000000e+00 : f32
    %1867 = vector.broadcast %cst_208 : f32 to vector<8x32xf32>
    %1868 = arith.mulf %1867, %1822 : vector<8x32xf32>
    %1869 = arith.addf %1805, %1868 : vector<8x32xf32>
    %cst_209 = arith.constant 2.000000e+00 : f32
    %1870 = vector.broadcast %cst_209 : f32 to vector<8x32xf32>
    %1871 = arith.mulf %1870, %1839 : vector<8x32xf32>
    %1872 = arith.addf %1869, %1871 : vector<8x32xf32>
    %1873 = arith.addf %1872, %1856 : vector<8x32xf32>
    %1874 = vector.broadcast %1712 : f32 to vector<8x32xf32>
    %1875 = arith.mulf %1874, %1873 : vector<8x32xf32>
    %1876 = arith.addf %1794, %1875 : vector<8x32xf32>
    %1877 = arith.mulf %1866, %8 : vector<8x32xf32>
    %1878 = arith.mulf %1876, %10 : vector<8x32xf32>
    %1879 = arith.addf %1877, %1878 : vector<8x32xf32>
    %1880 = arith.addf %1879, %12 : vector<8x32xf32>
    %1881 = math.tanh %1880 : vector<8x32xf32>
    %1882 = arith.mulf %1881, %14 : vector<8x32xf32>
    %cst_210 = arith.constant dense<0.000000e+00> : vector<8xf32>
    %1883 = vector.multi_reduction <add>, %1882, %cst_210 [1] : vector<8x32xf32> to vector<8xf32>
    %1884 = vector.shape_cast %1883 : vector<8xf32> to vector<8x1xf32>
    %1885 = vector.shape_cast %1884 : vector<8x1xf32> to vector<8x1xf32>
    %1886 = vector.broadcast %1885 : vector<8x1xf32> to vector<8x32xf32>
    %1887 = arith.addf %1886, %16 : vector<8x32xf32>
    %1888 = vector.broadcast %1711 : f32 to vector<8x32xf32>
    %1889 = arith.mulf %1888, %1876 : vector<8x32xf32>
    %1890 = arith.addf %1866, %1889 : vector<8x32xf32>
    %1891 = vector.broadcast %1711 : f32 to vector<8x32xf32>
    %1892 = arith.mulf %1891, %1887 : vector<8x32xf32>
    %1893 = arith.addf %1876, %1892 : vector<8x32xf32>
    %1894 = arith.mulf %1890, %8 : vector<8x32xf32>
    %1895 = arith.mulf %1893, %10 : vector<8x32xf32>
    %1896 = arith.addf %1894, %1895 : vector<8x32xf32>
    %1897 = arith.addf %1896, %12 : vector<8x32xf32>
    %1898 = math.tanh %1897 : vector<8x32xf32>
    %1899 = arith.mulf %1898, %14 : vector<8x32xf32>
    %cst_211 = arith.constant dense<0.000000e+00> : vector<8xf32>
    %1900 = vector.multi_reduction <add>, %1899, %cst_211 [1] : vector<8x32xf32> to vector<8xf32>
    %1901 = vector.shape_cast %1900 : vector<8xf32> to vector<8x1xf32>
    %1902 = vector.shape_cast %1901 : vector<8x1xf32> to vector<8x1xf32>
    %1903 = vector.broadcast %1902 : vector<8x1xf32> to vector<8x32xf32>
    %1904 = arith.addf %1903, %16 : vector<8x32xf32>
    %1905 = vector.broadcast %1711 : f32 to vector<8x32xf32>
    %1906 = arith.mulf %1905, %1893 : vector<8x32xf32>
    %1907 = arith.addf %1866, %1906 : vector<8x32xf32>
    %1908 = vector.broadcast %1711 : f32 to vector<8x32xf32>
    %1909 = arith.mulf %1908, %1904 : vector<8x32xf32>
    %1910 = arith.addf %1876, %1909 : vector<8x32xf32>
    %1911 = arith.mulf %1907, %8 : vector<8x32xf32>
    %1912 = arith.mulf %1910, %10 : vector<8x32xf32>
    %1913 = arith.addf %1911, %1912 : vector<8x32xf32>
    %1914 = arith.addf %1913, %12 : vector<8x32xf32>
    %1915 = math.tanh %1914 : vector<8x32xf32>
    %1916 = arith.mulf %1915, %14 : vector<8x32xf32>
    %cst_212 = arith.constant dense<0.000000e+00> : vector<8xf32>
    %1917 = vector.multi_reduction <add>, %1916, %cst_212 [1] : vector<8x32xf32> to vector<8xf32>
    %1918 = vector.shape_cast %1917 : vector<8xf32> to vector<8x1xf32>
    %1919 = vector.shape_cast %1918 : vector<8x1xf32> to vector<8x1xf32>
    %1920 = vector.broadcast %1919 : vector<8x1xf32> to vector<8x32xf32>
    %1921 = arith.addf %1920, %16 : vector<8x32xf32>
    %1922 = vector.broadcast %1710 : f32 to vector<8x32xf32>
    %1923 = arith.mulf %1922, %1910 : vector<8x32xf32>
    %1924 = arith.addf %1866, %1923 : vector<8x32xf32>
    %1925 = vector.broadcast %1710 : f32 to vector<8x32xf32>
    %1926 = arith.mulf %1925, %1921 : vector<8x32xf32>
    %1927 = arith.addf %1876, %1926 : vector<8x32xf32>
    %1928 = arith.mulf %1924, %8 : vector<8x32xf32>
    %1929 = arith.mulf %1927, %10 : vector<8x32xf32>
    %1930 = arith.addf %1928, %1929 : vector<8x32xf32>
    %1931 = arith.addf %1930, %12 : vector<8x32xf32>
    %1932 = math.tanh %1931 : vector<8x32xf32>
    %1933 = arith.mulf %1932, %14 : vector<8x32xf32>
    %cst_213 = arith.constant dense<0.000000e+00> : vector<8xf32>
    %1934 = vector.multi_reduction <add>, %1933, %cst_213 [1] : vector<8x32xf32> to vector<8xf32>
    %1935 = vector.shape_cast %1934 : vector<8xf32> to vector<8x1xf32>
    %1936 = vector.shape_cast %1935 : vector<8x1xf32> to vector<8x1xf32>
    %1937 = vector.broadcast %1936 : vector<8x1xf32> to vector<8x32xf32>
    %1938 = arith.addf %1937, %16 : vector<8x32xf32>
    %cst_214 = arith.constant 2.000000e+00 : f32
    %1939 = vector.broadcast %cst_214 : f32 to vector<8x32xf32>
    %1940 = arith.mulf %1939, %1893 : vector<8x32xf32>
    %1941 = arith.addf %1876, %1940 : vector<8x32xf32>
    %cst_215 = arith.constant 2.000000e+00 : f32
    %1942 = vector.broadcast %cst_215 : f32 to vector<8x32xf32>
    %1943 = arith.mulf %1942, %1910 : vector<8x32xf32>
    %1944 = arith.addf %1941, %1943 : vector<8x32xf32>
    %1945 = arith.addf %1944, %1927 : vector<8x32xf32>
    %1946 = vector.broadcast %1712 : f32 to vector<8x32xf32>
    %1947 = arith.mulf %1946, %1945 : vector<8x32xf32>
    %1948 = arith.addf %1866, %1947 : vector<8x32xf32>
    %cst_216 = arith.constant 2.000000e+00 : f32
    %1949 = vector.broadcast %cst_216 : f32 to vector<8x32xf32>
    %1950 = arith.mulf %1949, %1904 : vector<8x32xf32>
    %1951 = arith.addf %1887, %1950 : vector<8x32xf32>
    %cst_217 = arith.constant 2.000000e+00 : f32
    %1952 = vector.broadcast %cst_217 : f32 to vector<8x32xf32>
    %1953 = arith.mulf %1952, %1921 : vector<8x32xf32>
    %1954 = arith.addf %1951, %1953 : vector<8x32xf32>
    %1955 = arith.addf %1954, %1938 : vector<8x32xf32>
    %1956 = vector.broadcast %1712 : f32 to vector<8x32xf32>
    %1957 = arith.mulf %1956, %1955 : vector<8x32xf32>
    %1958 = arith.addf %1876, %1957 : vector<8x32xf32>
    %1959 = arith.mulf %1948, %8 : vector<8x32xf32>
    %1960 = arith.mulf %1958, %10 : vector<8x32xf32>
    %1961 = arith.addf %1959, %1960 : vector<8x32xf32>
    %1962 = arith.addf %1961, %12 : vector<8x32xf32>
    %1963 = math.tanh %1962 : vector<8x32xf32>
    %1964 = arith.mulf %1963, %14 : vector<8x32xf32>
    %cst_218 = arith.constant dense<0.000000e+00> : vector<8xf32>
    %1965 = vector.multi_reduction <add>, %1964, %cst_218 [1] : vector<8x32xf32> to vector<8xf32>
    %1966 = vector.shape_cast %1965 : vector<8xf32> to vector<8x1xf32>
    %1967 = vector.shape_cast %1966 : vector<8x1xf32> to vector<8x1xf32>
    %1968 = vector.broadcast %1967 : vector<8x1xf32> to vector<8x32xf32>
    %1969 = arith.addf %1968, %16 : vector<8x32xf32>
    %1970 = vector.broadcast %1711 : f32 to vector<8x32xf32>
    %1971 = arith.mulf %1970, %1958 : vector<8x32xf32>
    %1972 = arith.addf %1948, %1971 : vector<8x32xf32>
    %1973 = vector.broadcast %1711 : f32 to vector<8x32xf32>
    %1974 = arith.mulf %1973, %1969 : vector<8x32xf32>
    %1975 = arith.addf %1958, %1974 : vector<8x32xf32>
    %1976 = arith.mulf %1972, %8 : vector<8x32xf32>
    %1977 = arith.mulf %1975, %10 : vector<8x32xf32>
    %1978 = arith.addf %1976, %1977 : vector<8x32xf32>
    %1979 = arith.addf %1978, %12 : vector<8x32xf32>
    %1980 = math.tanh %1979 : vector<8x32xf32>
    %1981 = arith.mulf %1980, %14 : vector<8x32xf32>
    %cst_219 = arith.constant dense<0.000000e+00> : vector<8xf32>
    %1982 = vector.multi_reduction <add>, %1981, %cst_219 [1] : vector<8x32xf32> to vector<8xf32>
    %1983 = vector.shape_cast %1982 : vector<8xf32> to vector<8x1xf32>
    %1984 = vector.shape_cast %1983 : vector<8x1xf32> to vector<8x1xf32>
    %1985 = vector.broadcast %1984 : vector<8x1xf32> to vector<8x32xf32>
    %1986 = arith.addf %1985, %16 : vector<8x32xf32>
    %1987 = vector.broadcast %1711 : f32 to vector<8x32xf32>
    %1988 = arith.mulf %1987, %1975 : vector<8x32xf32>
    %1989 = arith.addf %1948, %1988 : vector<8x32xf32>
    %1990 = vector.broadcast %1711 : f32 to vector<8x32xf32>
    %1991 = arith.mulf %1990, %1986 : vector<8x32xf32>
    %1992 = arith.addf %1958, %1991 : vector<8x32xf32>
    %1993 = arith.mulf %1989, %8 : vector<8x32xf32>
    %1994 = arith.mulf %1992, %10 : vector<8x32xf32>
    %1995 = arith.addf %1993, %1994 : vector<8x32xf32>
    %1996 = arith.addf %1995, %12 : vector<8x32xf32>
    %1997 = math.tanh %1996 : vector<8x32xf32>
    %1998 = arith.mulf %1997, %14 : vector<8x32xf32>
    %cst_220 = arith.constant dense<0.000000e+00> : vector<8xf32>
    %1999 = vector.multi_reduction <add>, %1998, %cst_220 [1] : vector<8x32xf32> to vector<8xf32>
    %2000 = vector.shape_cast %1999 : vector<8xf32> to vector<8x1xf32>
    %2001 = vector.shape_cast %2000 : vector<8x1xf32> to vector<8x1xf32>
    %2002 = vector.broadcast %2001 : vector<8x1xf32> to vector<8x32xf32>
    %2003 = arith.addf %2002, %16 : vector<8x32xf32>
    %2004 = vector.broadcast %1710 : f32 to vector<8x32xf32>
    %2005 = arith.mulf %2004, %1992 : vector<8x32xf32>
    %2006 = arith.addf %1948, %2005 : vector<8x32xf32>
    %2007 = vector.broadcast %1710 : f32 to vector<8x32xf32>
    %2008 = arith.mulf %2007, %2003 : vector<8x32xf32>
    %2009 = arith.addf %1958, %2008 : vector<8x32xf32>
    %2010 = arith.mulf %2006, %8 : vector<8x32xf32>
    %2011 = arith.mulf %2009, %10 : vector<8x32xf32>
    %2012 = arith.addf %2010, %2011 : vector<8x32xf32>
    %2013 = arith.addf %2012, %12 : vector<8x32xf32>
    %2014 = math.tanh %2013 : vector<8x32xf32>
    %2015 = arith.mulf %2014, %14 : vector<8x32xf32>
    %cst_221 = arith.constant dense<0.000000e+00> : vector<8xf32>
    %2016 = vector.multi_reduction <add>, %2015, %cst_221 [1] : vector<8x32xf32> to vector<8xf32>
    %2017 = vector.shape_cast %2016 : vector<8xf32> to vector<8x1xf32>
    %2018 = vector.shape_cast %2017 : vector<8x1xf32> to vector<8x1xf32>
    %2019 = vector.broadcast %2018 : vector<8x1xf32> to vector<8x32xf32>
    %2020 = arith.addf %2019, %16 : vector<8x32xf32>
    %cst_222 = arith.constant 2.000000e+00 : f32
    %2021 = vector.broadcast %cst_222 : f32 to vector<8x32xf32>
    %2022 = arith.mulf %2021, %1975 : vector<8x32xf32>
    %2023 = arith.addf %1958, %2022 : vector<8x32xf32>
    %cst_223 = arith.constant 2.000000e+00 : f32
    %2024 = vector.broadcast %cst_223 : f32 to vector<8x32xf32>
    %2025 = arith.mulf %2024, %1992 : vector<8x32xf32>
    %2026 = arith.addf %2023, %2025 : vector<8x32xf32>
    %2027 = arith.addf %2026, %2009 : vector<8x32xf32>
    %2028 = vector.broadcast %1712 : f32 to vector<8x32xf32>
    %2029 = arith.mulf %2028, %2027 : vector<8x32xf32>
    %2030 = arith.addf %1948, %2029 : vector<8x32xf32>
    %cst_224 = arith.constant 2.000000e+00 : f32
    %2031 = vector.broadcast %cst_224 : f32 to vector<8x32xf32>
    %2032 = arith.mulf %2031, %1986 : vector<8x32xf32>
    %2033 = arith.addf %1969, %2032 : vector<8x32xf32>
    %cst_225 = arith.constant 2.000000e+00 : f32
    %2034 = vector.broadcast %cst_225 : f32 to vector<8x32xf32>
    %2035 = arith.mulf %2034, %2003 : vector<8x32xf32>
    %2036 = arith.addf %2033, %2035 : vector<8x32xf32>
    %2037 = arith.addf %2036, %2020 : vector<8x32xf32>
    %2038 = vector.broadcast %1712 : f32 to vector<8x32xf32>
    %2039 = arith.mulf %2038, %2037 : vector<8x32xf32>
    %2040 = arith.addf %1958, %2039 : vector<8x32xf32>
    %2041 = vector.extract_strided_slice %2030 {offsets = [0, 0], sizes = [8, 1], strides = [1, 1]} : vector<8x32xf32> to vector<8x1xf32>
    %2042 = vector.extract_strided_slice %2040 {offsets = [0, 0], sizes = [8, 1], strides = [1, 1]} : vector<8x32xf32> to vector<8x1xf32>
    %2043 = tpu.concatenate %2041, %2042, %2041, %2042, %2041, %2042 in 1 : vector<8x1xf32>, vector<8x1xf32>, vector<8x1xf32>, vector<8x1xf32>, vector<8x1xf32>, vector<8x1xf32> -> vector<8x6xf32>
    %c7 = arith.constant 7 : index
    %2044 = memref.load %arg0[%c7] : memref<8xf32, #tpu.memory_space<smem>>
    %c6_226 = arith.constant 6 : index
    %2045 = memref.load %arg0[%c6_226] : memref<8xf32, #tpu.memory_space<smem>>
    %2046 = arith.subf %2044, %2045 : f32
    %cst_227 = arith.constant 2.500000e-01 : f32
    %2047 = arith.mulf %2046, %cst_227 : f32
    %cst_228 = arith.constant 5.000000e-01 : f32
    %2048 = arith.mulf %cst_228, %2047 : f32
    %cst_229 = arith.constant 0.166666672 : f32
    %2049 = arith.mulf %2047, %cst_229 : f32
    %2050 = arith.mulf %2030, %8 : vector<8x32xf32>
    %2051 = arith.mulf %2040, %10 : vector<8x32xf32>
    %2052 = arith.addf %2050, %2051 : vector<8x32xf32>
    %2053 = arith.addf %2052, %12 : vector<8x32xf32>
    %2054 = math.tanh %2053 : vector<8x32xf32>
    %2055 = arith.mulf %2054, %14 : vector<8x32xf32>
    %cst_230 = arith.constant dense<0.000000e+00> : vector<8xf32>
    %2056 = vector.multi_reduction <add>, %2055, %cst_230 [1] : vector<8x32xf32> to vector<8xf32>
    %2057 = vector.shape_cast %2056 : vector<8xf32> to vector<8x1xf32>
    %2058 = vector.shape_cast %2057 : vector<8x1xf32> to vector<8x1xf32>
    %2059 = vector.broadcast %2058 : vector<8x1xf32> to vector<8x32xf32>
    %2060 = arith.addf %2059, %16 : vector<8x32xf32>
    %2061 = vector.broadcast %2048 : f32 to vector<8x32xf32>
    %2062 = arith.mulf %2061, %2040 : vector<8x32xf32>
    %2063 = arith.addf %2030, %2062 : vector<8x32xf32>
    %2064 = vector.broadcast %2048 : f32 to vector<8x32xf32>
    %2065 = arith.mulf %2064, %2060 : vector<8x32xf32>
    %2066 = arith.addf %2040, %2065 : vector<8x32xf32>
    %2067 = arith.mulf %2063, %8 : vector<8x32xf32>
    %2068 = arith.mulf %2066, %10 : vector<8x32xf32>
    %2069 = arith.addf %2067, %2068 : vector<8x32xf32>
    %2070 = arith.addf %2069, %12 : vector<8x32xf32>
    %2071 = math.tanh %2070 : vector<8x32xf32>
    %2072 = arith.mulf %2071, %14 : vector<8x32xf32>
    %cst_231 = arith.constant dense<0.000000e+00> : vector<8xf32>
    %2073 = vector.multi_reduction <add>, %2072, %cst_231 [1] : vector<8x32xf32> to vector<8xf32>
    %2074 = vector.shape_cast %2073 : vector<8xf32> to vector<8x1xf32>
    %2075 = vector.shape_cast %2074 : vector<8x1xf32> to vector<8x1xf32>
    %2076 = vector.broadcast %2075 : vector<8x1xf32> to vector<8x32xf32>
    %2077 = arith.addf %2076, %16 : vector<8x32xf32>
    %2078 = vector.broadcast %2048 : f32 to vector<8x32xf32>
    %2079 = arith.mulf %2078, %2066 : vector<8x32xf32>
    %2080 = arith.addf %2030, %2079 : vector<8x32xf32>
    %2081 = vector.broadcast %2048 : f32 to vector<8x32xf32>
    %2082 = arith.mulf %2081, %2077 : vector<8x32xf32>
    %2083 = arith.addf %2040, %2082 : vector<8x32xf32>
    %2084 = arith.mulf %2080, %8 : vector<8x32xf32>
    %2085 = arith.mulf %2083, %10 : vector<8x32xf32>
    %2086 = arith.addf %2084, %2085 : vector<8x32xf32>
    %2087 = arith.addf %2086, %12 : vector<8x32xf32>
    %2088 = math.tanh %2087 : vector<8x32xf32>
    %2089 = arith.mulf %2088, %14 : vector<8x32xf32>
    %cst_232 = arith.constant dense<0.000000e+00> : vector<8xf32>
    %2090 = vector.multi_reduction <add>, %2089, %cst_232 [1] : vector<8x32xf32> to vector<8xf32>
    %2091 = vector.shape_cast %2090 : vector<8xf32> to vector<8x1xf32>
    %2092 = vector.shape_cast %2091 : vector<8x1xf32> to vector<8x1xf32>
    %2093 = vector.broadcast %2092 : vector<8x1xf32> to vector<8x32xf32>
    %2094 = arith.addf %2093, %16 : vector<8x32xf32>
    %2095 = vector.broadcast %2047 : f32 to vector<8x32xf32>
    %2096 = arith.mulf %2095, %2083 : vector<8x32xf32>
    %2097 = arith.addf %2030, %2096 : vector<8x32xf32>
    %2098 = vector.broadcast %2047 : f32 to vector<8x32xf32>
    %2099 = arith.mulf %2098, %2094 : vector<8x32xf32>
    %2100 = arith.addf %2040, %2099 : vector<8x32xf32>
    %2101 = arith.mulf %2097, %8 : vector<8x32xf32>
    %2102 = arith.mulf %2100, %10 : vector<8x32xf32>
    %2103 = arith.addf %2101, %2102 : vector<8x32xf32>
    %2104 = arith.addf %2103, %12 : vector<8x32xf32>
    %2105 = math.tanh %2104 : vector<8x32xf32>
    %2106 = arith.mulf %2105, %14 : vector<8x32xf32>
    %cst_233 = arith.constant dense<0.000000e+00> : vector<8xf32>
    %2107 = vector.multi_reduction <add>, %2106, %cst_233 [1] : vector<8x32xf32> to vector<8xf32>
    %2108 = vector.shape_cast %2107 : vector<8xf32> to vector<8x1xf32>
    %2109 = vector.shape_cast %2108 : vector<8x1xf32> to vector<8x1xf32>
    %2110 = vector.broadcast %2109 : vector<8x1xf32> to vector<8x32xf32>
    %2111 = arith.addf %2110, %16 : vector<8x32xf32>
    %cst_234 = arith.constant 2.000000e+00 : f32
    %2112 = vector.broadcast %cst_234 : f32 to vector<8x32xf32>
    %2113 = arith.mulf %2112, %2066 : vector<8x32xf32>
    %2114 = arith.addf %2040, %2113 : vector<8x32xf32>
    %cst_235 = arith.constant 2.000000e+00 : f32
    %2115 = vector.broadcast %cst_235 : f32 to vector<8x32xf32>
    %2116 = arith.mulf %2115, %2083 : vector<8x32xf32>
    %2117 = arith.addf %2114, %2116 : vector<8x32xf32>
    %2118 = arith.addf %2117, %2100 : vector<8x32xf32>
    %2119 = vector.broadcast %2049 : f32 to vector<8x32xf32>
    %2120 = arith.mulf %2119, %2118 : vector<8x32xf32>
    %2121 = arith.addf %2030, %2120 : vector<8x32xf32>
    %cst_236 = arith.constant 2.000000e+00 : f32
    %2122 = vector.broadcast %cst_236 : f32 to vector<8x32xf32>
    %2123 = arith.mulf %2122, %2077 : vector<8x32xf32>
    %2124 = arith.addf %2060, %2123 : vector<8x32xf32>
    %cst_237 = arith.constant 2.000000e+00 : f32
    %2125 = vector.broadcast %cst_237 : f32 to vector<8x32xf32>
    %2126 = arith.mulf %2125, %2094 : vector<8x32xf32>
    %2127 = arith.addf %2124, %2126 : vector<8x32xf32>
    %2128 = arith.addf %2127, %2111 : vector<8x32xf32>
    %2129 = vector.broadcast %2049 : f32 to vector<8x32xf32>
    %2130 = arith.mulf %2129, %2128 : vector<8x32xf32>
    %2131 = arith.addf %2040, %2130 : vector<8x32xf32>
    %2132 = arith.mulf %2121, %8 : vector<8x32xf32>
    %2133 = arith.mulf %2131, %10 : vector<8x32xf32>
    %2134 = arith.addf %2132, %2133 : vector<8x32xf32>
    %2135 = arith.addf %2134, %12 : vector<8x32xf32>
    %2136 = math.tanh %2135 : vector<8x32xf32>
    %2137 = arith.mulf %2136, %14 : vector<8x32xf32>
    %cst_238 = arith.constant dense<0.000000e+00> : vector<8xf32>
    %2138 = vector.multi_reduction <add>, %2137, %cst_238 [1] : vector<8x32xf32> to vector<8xf32>
    %2139 = vector.shape_cast %2138 : vector<8xf32> to vector<8x1xf32>
    %2140 = vector.shape_cast %2139 : vector<8x1xf32> to vector<8x1xf32>
    %2141 = vector.broadcast %2140 : vector<8x1xf32> to vector<8x32xf32>
    %2142 = arith.addf %2141, %16 : vector<8x32xf32>
    %2143 = vector.broadcast %2048 : f32 to vector<8x32xf32>
    %2144 = arith.mulf %2143, %2131 : vector<8x32xf32>
    %2145 = arith.addf %2121, %2144 : vector<8x32xf32>
    %2146 = vector.broadcast %2048 : f32 to vector<8x32xf32>
    %2147 = arith.mulf %2146, %2142 : vector<8x32xf32>
    %2148 = arith.addf %2131, %2147 : vector<8x32xf32>
    %2149 = arith.mulf %2145, %8 : vector<8x32xf32>
    %2150 = arith.mulf %2148, %10 : vector<8x32xf32>
    %2151 = arith.addf %2149, %2150 : vector<8x32xf32>
    %2152 = arith.addf %2151, %12 : vector<8x32xf32>
    %2153 = math.tanh %2152 : vector<8x32xf32>
    %2154 = arith.mulf %2153, %14 : vector<8x32xf32>
    %cst_239 = arith.constant dense<0.000000e+00> : vector<8xf32>
    %2155 = vector.multi_reduction <add>, %2154, %cst_239 [1] : vector<8x32xf32> to vector<8xf32>
    %2156 = vector.shape_cast %2155 : vector<8xf32> to vector<8x1xf32>
    %2157 = vector.shape_cast %2156 : vector<8x1xf32> to vector<8x1xf32>
    %2158 = vector.broadcast %2157 : vector<8x1xf32> to vector<8x32xf32>
    %2159 = arith.addf %2158, %16 : vector<8x32xf32>
    %2160 = vector.broadcast %2048 : f32 to vector<8x32xf32>
    %2161 = arith.mulf %2160, %2148 : vector<8x32xf32>
    %2162 = arith.addf %2121, %2161 : vector<8x32xf32>
    %2163 = vector.broadcast %2048 : f32 to vector<8x32xf32>
    %2164 = arith.mulf %2163, %2159 : vector<8x32xf32>
    %2165 = arith.addf %2131, %2164 : vector<8x32xf32>
    %2166 = arith.mulf %2162, %8 : vector<8x32xf32>
    %2167 = arith.mulf %2165, %10 : vector<8x32xf32>
    %2168 = arith.addf %2166, %2167 : vector<8x32xf32>
    %2169 = arith.addf %2168, %12 : vector<8x32xf32>
    %2170 = math.tanh %2169 : vector<8x32xf32>
    %2171 = arith.mulf %2170, %14 : vector<8x32xf32>
    %cst_240 = arith.constant dense<0.000000e+00> : vector<8xf32>
    %2172 = vector.multi_reduction <add>, %2171, %cst_240 [1] : vector<8x32xf32> to vector<8xf32>
    %2173 = vector.shape_cast %2172 : vector<8xf32> to vector<8x1xf32>
    %2174 = vector.shape_cast %2173 : vector<8x1xf32> to vector<8x1xf32>
    %2175 = vector.broadcast %2174 : vector<8x1xf32> to vector<8x32xf32>
    %2176 = arith.addf %2175, %16 : vector<8x32xf32>
    %2177 = vector.broadcast %2047 : f32 to vector<8x32xf32>
    %2178 = arith.mulf %2177, %2165 : vector<8x32xf32>
    %2179 = arith.addf %2121, %2178 : vector<8x32xf32>
    %2180 = vector.broadcast %2047 : f32 to vector<8x32xf32>
    %2181 = arith.mulf %2180, %2176 : vector<8x32xf32>
    %2182 = arith.addf %2131, %2181 : vector<8x32xf32>
    %2183 = arith.mulf %2179, %8 : vector<8x32xf32>
    %2184 = arith.mulf %2182, %10 : vector<8x32xf32>
    %2185 = arith.addf %2183, %2184 : vector<8x32xf32>
    %2186 = arith.addf %2185, %12 : vector<8x32xf32>
    %2187 = math.tanh %2186 : vector<8x32xf32>
    %2188 = arith.mulf %2187, %14 : vector<8x32xf32>
    %cst_241 = arith.constant dense<0.000000e+00> : vector<8xf32>
    %2189 = vector.multi_reduction <add>, %2188, %cst_241 [1] : vector<8x32xf32> to vector<8xf32>
    %2190 = vector.shape_cast %2189 : vector<8xf32> to vector<8x1xf32>
    %2191 = vector.shape_cast %2190 : vector<8x1xf32> to vector<8x1xf32>
    %2192 = vector.broadcast %2191 : vector<8x1xf32> to vector<8x32xf32>
    %2193 = arith.addf %2192, %16 : vector<8x32xf32>
    %cst_242 = arith.constant 2.000000e+00 : f32
    %2194 = vector.broadcast %cst_242 : f32 to vector<8x32xf32>
    %2195 = arith.mulf %2194, %2148 : vector<8x32xf32>
    %2196 = arith.addf %2131, %2195 : vector<8x32xf32>
    %cst_243 = arith.constant 2.000000e+00 : f32
    %2197 = vector.broadcast %cst_243 : f32 to vector<8x32xf32>
    %2198 = arith.mulf %2197, %2165 : vector<8x32xf32>
    %2199 = arith.addf %2196, %2198 : vector<8x32xf32>
    %2200 = arith.addf %2199, %2182 : vector<8x32xf32>
    %2201 = vector.broadcast %2049 : f32 to vector<8x32xf32>
    %2202 = arith.mulf %2201, %2200 : vector<8x32xf32>
    %2203 = arith.addf %2121, %2202 : vector<8x32xf32>
    %cst_244 = arith.constant 2.000000e+00 : f32
    %2204 = vector.broadcast %cst_244 : f32 to vector<8x32xf32>
    %2205 = arith.mulf %2204, %2159 : vector<8x32xf32>
    %2206 = arith.addf %2142, %2205 : vector<8x32xf32>
    %cst_245 = arith.constant 2.000000e+00 : f32
    %2207 = vector.broadcast %cst_245 : f32 to vector<8x32xf32>
    %2208 = arith.mulf %2207, %2176 : vector<8x32xf32>
    %2209 = arith.addf %2206, %2208 : vector<8x32xf32>
    %2210 = arith.addf %2209, %2193 : vector<8x32xf32>
    %2211 = vector.broadcast %2049 : f32 to vector<8x32xf32>
    %2212 = arith.mulf %2211, %2210 : vector<8x32xf32>
    %2213 = arith.addf %2131, %2212 : vector<8x32xf32>
    %2214 = arith.mulf %2203, %8 : vector<8x32xf32>
    %2215 = arith.mulf %2213, %10 : vector<8x32xf32>
    %2216 = arith.addf %2214, %2215 : vector<8x32xf32>
    %2217 = arith.addf %2216, %12 : vector<8x32xf32>
    %2218 = math.tanh %2217 : vector<8x32xf32>
    %2219 = arith.mulf %2218, %14 : vector<8x32xf32>
    %cst_246 = arith.constant dense<0.000000e+00> : vector<8xf32>
    %2220 = vector.multi_reduction <add>, %2219, %cst_246 [1] : vector<8x32xf32> to vector<8xf32>
    %2221 = vector.shape_cast %2220 : vector<8xf32> to vector<8x1xf32>
    %2222 = vector.shape_cast %2221 : vector<8x1xf32> to vector<8x1xf32>
    %2223 = vector.broadcast %2222 : vector<8x1xf32> to vector<8x32xf32>
    %2224 = arith.addf %2223, %16 : vector<8x32xf32>
    %2225 = vector.broadcast %2048 : f32 to vector<8x32xf32>
    %2226 = arith.mulf %2225, %2213 : vector<8x32xf32>
    %2227 = arith.addf %2203, %2226 : vector<8x32xf32>
    %2228 = vector.broadcast %2048 : f32 to vector<8x32xf32>
    %2229 = arith.mulf %2228, %2224 : vector<8x32xf32>
    %2230 = arith.addf %2213, %2229 : vector<8x32xf32>
    %2231 = arith.mulf %2227, %8 : vector<8x32xf32>
    %2232 = arith.mulf %2230, %10 : vector<8x32xf32>
    %2233 = arith.addf %2231, %2232 : vector<8x32xf32>
    %2234 = arith.addf %2233, %12 : vector<8x32xf32>
    %2235 = math.tanh %2234 : vector<8x32xf32>
    %2236 = arith.mulf %2235, %14 : vector<8x32xf32>
    %cst_247 = arith.constant dense<0.000000e+00> : vector<8xf32>
    %2237 = vector.multi_reduction <add>, %2236, %cst_247 [1] : vector<8x32xf32> to vector<8xf32>
    %2238 = vector.shape_cast %2237 : vector<8xf32> to vector<8x1xf32>
    %2239 = vector.shape_cast %2238 : vector<8x1xf32> to vector<8x1xf32>
    %2240 = vector.broadcast %2239 : vector<8x1xf32> to vector<8x32xf32>
    %2241 = arith.addf %2240, %16 : vector<8x32xf32>
    %2242 = vector.broadcast %2048 : f32 to vector<8x32xf32>
    %2243 = arith.mulf %2242, %2230 : vector<8x32xf32>
    %2244 = arith.addf %2203, %2243 : vector<8x32xf32>
    %2245 = vector.broadcast %2048 : f32 to vector<8x32xf32>
    %2246 = arith.mulf %2245, %2241 : vector<8x32xf32>
    %2247 = arith.addf %2213, %2246 : vector<8x32xf32>
    %2248 = arith.mulf %2244, %8 : vector<8x32xf32>
    %2249 = arith.mulf %2247, %10 : vector<8x32xf32>
    %2250 = arith.addf %2248, %2249 : vector<8x32xf32>
    %2251 = arith.addf %2250, %12 : vector<8x32xf32>
    %2252 = math.tanh %2251 : vector<8x32xf32>
    %2253 = arith.mulf %2252, %14 : vector<8x32xf32>
    %cst_248 = arith.constant dense<0.000000e+00> : vector<8xf32>
    %2254 = vector.multi_reduction <add>, %2253, %cst_248 [1] : vector<8x32xf32> to vector<8xf32>
    %2255 = vector.shape_cast %2254 : vector<8xf32> to vector<8x1xf32>
    %2256 = vector.shape_cast %2255 : vector<8x1xf32> to vector<8x1xf32>
    %2257 = vector.broadcast %2256 : vector<8x1xf32> to vector<8x32xf32>
    %2258 = arith.addf %2257, %16 : vector<8x32xf32>
    %2259 = vector.broadcast %2047 : f32 to vector<8x32xf32>
    %2260 = arith.mulf %2259, %2247 : vector<8x32xf32>
    %2261 = arith.addf %2203, %2260 : vector<8x32xf32>
    %2262 = vector.broadcast %2047 : f32 to vector<8x32xf32>
    %2263 = arith.mulf %2262, %2258 : vector<8x32xf32>
    %2264 = arith.addf %2213, %2263 : vector<8x32xf32>
    %2265 = arith.mulf %2261, %8 : vector<8x32xf32>
    %2266 = arith.mulf %2264, %10 : vector<8x32xf32>
    %2267 = arith.addf %2265, %2266 : vector<8x32xf32>
    %2268 = arith.addf %2267, %12 : vector<8x32xf32>
    %2269 = math.tanh %2268 : vector<8x32xf32>
    %2270 = arith.mulf %2269, %14 : vector<8x32xf32>
    %cst_249 = arith.constant dense<0.000000e+00> : vector<8xf32>
    %2271 = vector.multi_reduction <add>, %2270, %cst_249 [1] : vector<8x32xf32> to vector<8xf32>
    %2272 = vector.shape_cast %2271 : vector<8xf32> to vector<8x1xf32>
    %2273 = vector.shape_cast %2272 : vector<8x1xf32> to vector<8x1xf32>
    %2274 = vector.broadcast %2273 : vector<8x1xf32> to vector<8x32xf32>
    %2275 = arith.addf %2274, %16 : vector<8x32xf32>
    %cst_250 = arith.constant 2.000000e+00 : f32
    %2276 = vector.broadcast %cst_250 : f32 to vector<8x32xf32>
    %2277 = arith.mulf %2276, %2230 : vector<8x32xf32>
    %2278 = arith.addf %2213, %2277 : vector<8x32xf32>
    %cst_251 = arith.constant 2.000000e+00 : f32
    %2279 = vector.broadcast %cst_251 : f32 to vector<8x32xf32>
    %2280 = arith.mulf %2279, %2247 : vector<8x32xf32>
    %2281 = arith.addf %2278, %2280 : vector<8x32xf32>
    %2282 = arith.addf %2281, %2264 : vector<8x32xf32>
    %2283 = vector.broadcast %2049 : f32 to vector<8x32xf32>
    %2284 = arith.mulf %2283, %2282 : vector<8x32xf32>
    %2285 = arith.addf %2203, %2284 : vector<8x32xf32>
    %cst_252 = arith.constant 2.000000e+00 : f32
    %2286 = vector.broadcast %cst_252 : f32 to vector<8x32xf32>
    %2287 = arith.mulf %2286, %2241 : vector<8x32xf32>
    %2288 = arith.addf %2224, %2287 : vector<8x32xf32>
    %cst_253 = arith.constant 2.000000e+00 : f32
    %2289 = vector.broadcast %cst_253 : f32 to vector<8x32xf32>
    %2290 = arith.mulf %2289, %2258 : vector<8x32xf32>
    %2291 = arith.addf %2288, %2290 : vector<8x32xf32>
    %2292 = arith.addf %2291, %2275 : vector<8x32xf32>
    %2293 = vector.broadcast %2049 : f32 to vector<8x32xf32>
    %2294 = arith.mulf %2293, %2292 : vector<8x32xf32>
    %2295 = arith.addf %2213, %2294 : vector<8x32xf32>
    %2296 = arith.mulf %2285, %8 : vector<8x32xf32>
    %2297 = arith.mulf %2295, %10 : vector<8x32xf32>
    %2298 = arith.addf %2296, %2297 : vector<8x32xf32>
    %2299 = arith.addf %2298, %12 : vector<8x32xf32>
    %2300 = math.tanh %2299 : vector<8x32xf32>
    %2301 = arith.mulf %2300, %14 : vector<8x32xf32>
    %cst_254 = arith.constant dense<0.000000e+00> : vector<8xf32>
    %2302 = vector.multi_reduction <add>, %2301, %cst_254 [1] : vector<8x32xf32> to vector<8xf32>
    %2303 = vector.shape_cast %2302 : vector<8xf32> to vector<8x1xf32>
    %2304 = vector.shape_cast %2303 : vector<8x1xf32> to vector<8x1xf32>
    %2305 = vector.broadcast %2304 : vector<8x1xf32> to vector<8x32xf32>
    %2306 = arith.addf %2305, %16 : vector<8x32xf32>
    %2307 = vector.broadcast %2048 : f32 to vector<8x32xf32>
    %2308 = arith.mulf %2307, %2295 : vector<8x32xf32>
    %2309 = arith.addf %2285, %2308 : vector<8x32xf32>
    %2310 = vector.broadcast %2048 : f32 to vector<8x32xf32>
    %2311 = arith.mulf %2310, %2306 : vector<8x32xf32>
    %2312 = arith.addf %2295, %2311 : vector<8x32xf32>
    %2313 = arith.mulf %2309, %8 : vector<8x32xf32>
    %2314 = arith.mulf %2312, %10 : vector<8x32xf32>
    %2315 = arith.addf %2313, %2314 : vector<8x32xf32>
    %2316 = arith.addf %2315, %12 : vector<8x32xf32>
    %2317 = math.tanh %2316 : vector<8x32xf32>
    %2318 = arith.mulf %2317, %14 : vector<8x32xf32>
    %cst_255 = arith.constant dense<0.000000e+00> : vector<8xf32>
    %2319 = vector.multi_reduction <add>, %2318, %cst_255 [1] : vector<8x32xf32> to vector<8xf32>
    %2320 = vector.shape_cast %2319 : vector<8xf32> to vector<8x1xf32>
    %2321 = vector.shape_cast %2320 : vector<8x1xf32> to vector<8x1xf32>
    %2322 = vector.broadcast %2321 : vector<8x1xf32> to vector<8x32xf32>
    %2323 = arith.addf %2322, %16 : vector<8x32xf32>
    %2324 = vector.broadcast %2048 : f32 to vector<8x32xf32>
    %2325 = arith.mulf %2324, %2312 : vector<8x32xf32>
    %2326 = arith.addf %2285, %2325 : vector<8x32xf32>
    %2327 = vector.broadcast %2048 : f32 to vector<8x32xf32>
    %2328 = arith.mulf %2327, %2323 : vector<8x32xf32>
    %2329 = arith.addf %2295, %2328 : vector<8x32xf32>
    %2330 = arith.mulf %2326, %8 : vector<8x32xf32>
    %2331 = arith.mulf %2329, %10 : vector<8x32xf32>
    %2332 = arith.addf %2330, %2331 : vector<8x32xf32>
    %2333 = arith.addf %2332, %12 : vector<8x32xf32>
    %2334 = math.tanh %2333 : vector<8x32xf32>
    %2335 = arith.mulf %2334, %14 : vector<8x32xf32>
    %cst_256 = arith.constant dense<0.000000e+00> : vector<8xf32>
    %2336 = vector.multi_reduction <add>, %2335, %cst_256 [1] : vector<8x32xf32> to vector<8xf32>
    %2337 = vector.shape_cast %2336 : vector<8xf32> to vector<8x1xf32>
    %2338 = vector.shape_cast %2337 : vector<8x1xf32> to vector<8x1xf32>
    %2339 = vector.broadcast %2338 : vector<8x1xf32> to vector<8x32xf32>
    %2340 = arith.addf %2339, %16 : vector<8x32xf32>
    %2341 = vector.broadcast %2047 : f32 to vector<8x32xf32>
    %2342 = arith.mulf %2341, %2329 : vector<8x32xf32>
    %2343 = arith.addf %2285, %2342 : vector<8x32xf32>
    %2344 = vector.broadcast %2047 : f32 to vector<8x32xf32>
    %2345 = arith.mulf %2344, %2340 : vector<8x32xf32>
    %2346 = arith.addf %2295, %2345 : vector<8x32xf32>
    %2347 = arith.mulf %2343, %8 : vector<8x32xf32>
    %2348 = arith.mulf %2346, %10 : vector<8x32xf32>
    %2349 = arith.addf %2347, %2348 : vector<8x32xf32>
    %2350 = arith.addf %2349, %12 : vector<8x32xf32>
    %2351 = math.tanh %2350 : vector<8x32xf32>
    %2352 = arith.mulf %2351, %14 : vector<8x32xf32>
    %cst_257 = arith.constant dense<0.000000e+00> : vector<8xf32>
    %2353 = vector.multi_reduction <add>, %2352, %cst_257 [1] : vector<8x32xf32> to vector<8xf32>
    %2354 = vector.shape_cast %2353 : vector<8xf32> to vector<8x1xf32>
    %2355 = vector.shape_cast %2354 : vector<8x1xf32> to vector<8x1xf32>
    %2356 = vector.broadcast %2355 : vector<8x1xf32> to vector<8x32xf32>
    %2357 = arith.addf %2356, %16 : vector<8x32xf32>
    %cst_258 = arith.constant 2.000000e+00 : f32
    %2358 = vector.broadcast %cst_258 : f32 to vector<8x32xf32>
    %2359 = arith.mulf %2358, %2312 : vector<8x32xf32>
    %2360 = arith.addf %2295, %2359 : vector<8x32xf32>
    %cst_259 = arith.constant 2.000000e+00 : f32
    %2361 = vector.broadcast %cst_259 : f32 to vector<8x32xf32>
    %2362 = arith.mulf %2361, %2329 : vector<8x32xf32>
    %2363 = arith.addf %2360, %2362 : vector<8x32xf32>
    %2364 = arith.addf %2363, %2346 : vector<8x32xf32>
    %2365 = vector.broadcast %2049 : f32 to vector<8x32xf32>
    %2366 = arith.mulf %2365, %2364 : vector<8x32xf32>
    %2367 = arith.addf %2285, %2366 : vector<8x32xf32>
    %cst_260 = arith.constant 2.000000e+00 : f32
    %2368 = vector.broadcast %cst_260 : f32 to vector<8x32xf32>
    %2369 = arith.mulf %2368, %2323 : vector<8x32xf32>
    %2370 = arith.addf %2306, %2369 : vector<8x32xf32>
    %cst_261 = arith.constant 2.000000e+00 : f32
    %2371 = vector.broadcast %cst_261 : f32 to vector<8x32xf32>
    %2372 = arith.mulf %2371, %2340 : vector<8x32xf32>
    %2373 = arith.addf %2370, %2372 : vector<8x32xf32>
    %2374 = arith.addf %2373, %2357 : vector<8x32xf32>
    %2375 = vector.broadcast %2049 : f32 to vector<8x32xf32>
    %2376 = arith.mulf %2375, %2374 : vector<8x32xf32>
    %2377 = arith.addf %2295, %2376 : vector<8x32xf32>
    %2378 = vector.extract_strided_slice %2367 {offsets = [0, 0], sizes = [8, 1], strides = [1, 1]} : vector<8x32xf32> to vector<8x1xf32>
    %2379 = vector.extract_strided_slice %2377 {offsets = [0, 0], sizes = [8, 1], strides = [1, 1]} : vector<8x32xf32> to vector<8x1xf32>
    %2380 = tpu.concatenate %2378, %2379, %2378, %2379, %2378, %2379 in 1 : vector<8x1xf32>, vector<8x1xf32>, vector<8x1xf32>, vector<8x1xf32>, vector<8x1xf32>, vector<8x1xf32> -> vector<8x6xf32>
    %2381 = tpu.concatenate %21, %358, %695, %1032, %1369, %1706, %2043, %2380 in 1 : vector<8x6xf32>, vector<8x6xf32>, vector<8x6xf32>, vector<8x6xf32>, vector<8x6xf32>, vector<8x6xf32>, vector<8x6xf32>, vector<8x6xf32> -> vector<8x48xf32>
    %c0_262 = arith.constant 0 : index
    %c0_263 = arith.constant 0 : index
    %2382 = vector.load %arg2[%c0_262, %c0_263] : memref<1x48xi32, #tpu.memory_space<vmem>>, vector<1x48xi32>
    %2383 = tpu.iota {dimensions = array<i32: 0>} : vector<8x48xi32>
    %2384 = vector.broadcast %2382 : vector<1x48xi32> to vector<8x48xi32>
    %2385 = arith.cmpi eq, %2384, %2383 : vector<8x48xi32>
    %2386 = arith.extui %2385 : vector<8x48xi1> to vector<8x48xi32>
    %2387 = arith.sitofp %2386 : vector<8x48xi32> to vector<8x48xf32>
    %2388 = arith.mulf %2387, %2381 : vector<8x48xf32>
    %cst_264 = arith.constant dense<0.000000e+00> : vector<48xf32>
    %2389 = vector.multi_reduction <add>, %2388, %cst_264 [0] : vector<8x48xf32> to vector<48xf32>
    %2390 = vector.shape_cast %2389 : vector<48xf32> to vector<1x48xf32>
    %c0_265 = arith.constant 0 : index
    %c0_266 = arith.constant 0 : index
    %2391 = vector.load %arg3[%c0_265, %c0_266] : memref<1x48xf32, #tpu.memory_space<vmem>>, vector<1x48xf32>
    tpu.vector_store %arg3[%c0_265, %c0_266], %2390 {strides = array<i32>} : memref<1x48xf32, #tpu.memory_space<vmem>>, vector<1x48xf32>,
    return
  }
}

</mosaic_0001>

<llo_original>
// kernel: ode_block_forward.1
$region0: #{ode_block_forward.1}
  #allocation0 [shape = 'u32[]', space=smem, size = 0x4, offset = 0x4, fixed_abs, tag = 'smem constant byte address 0x4 - core index']
  #allocation1 [shape = 'u32[144,128]{1,0:T(1,128)}', space=vmem, size = 0x12000, scoped, tag = 'internal scratch']
  %s0 = inlined_call_operand.vmem [shape: f32[8], index: 0, kind: input, shape index: {}]
  %s1 = inlined_call_operand.vmem [shape: f32[8,128], index: 1, kind: input, shape index: {}]
  %s2 = inlined_call_operand.vmem [shape: s32[1,48], index: 2, kind: input, shape index: {}]
  %s3 = inlined_call_operand.vmem [shape: f32[1,48], index: 3, kind: output, shape index: {}]
  %s4 = sld [smem:[#allocation0]]
  $region26: #{ode_block_forward.1} parent=0
    _
  %s6 = ssub.s32 1, %s4
  %s7 = scalar_select 0, %s6, %s4
  $region1: #{ode_block_forward.1} parent=0
    #allocation2 [shape = 'u8[512]{0}', space=smem, size = 0x200, scoped, tag = 'input window, operand 0, single buffered']
    #allocation3 [shape = 's32[1]{0}', space=sflag, size = 0x4, scoped, tag = 'scoped memory for ode_block_forward.1']
    %8 = vsyncpa [#allocation3], 0
    // Predicated region
    $region2: #{ode_block_forward.1} parent=1 // pred_check
      _
    $region3: #{ode_block_forward.1} parent=1 // pred_check_branch
      %10 = sbr.rel (0) target = $region5
    $region4: #{ode_block_forward.1} parent=1 // pred_region
      %s12 = ssub.s32 16, 16
      %13 = vsyncadd [#allocation3], %s12
      %s15 = sshll.u32 %s0, 4
      %s16 = int_to_ptr.vmem [resolvable:$true] %s15
      %18 = dma.vmem_to_smem %s16, 16, [#allocation2], [#allocation3]
    $region5: #{ode_block_forward.1} parent=1 // pred_fallthru
      _
    // Predicated region
    $region6: #{ode_block_forward.1} parent=1 // pred_check
      _
    $region7: #{ode_block_forward.1} parent=1 // pred_check_branch
      %20 = sbr.rel (0) target = $region9
    $region8: #{ode_block_forward.1} parent=1 // pred_region
      _
    $region9: #{ode_block_forward.1} parent=1 // pred_fallthru
      _
    // Predicated region
    $region10: #{ode_block_forward.1} parent=1 // pred_check
      _
    $region11: #{ode_block_forward.1} parent=1 // pred_check_branch
      %22 = sbr.rel (0) target = $region13
    $region12: #{ode_block_forward.1} parent=1 // pred_region
      _
    $region13: #{ode_block_forward.1} parent=1 // pred_fallthru
      _
    // Predicated region
    $region14: #{ode_block_forward.1} parent=1 // pred_check
      _
    $region15: #{ode_block_forward.1} parent=1 // pred_check_branch
      %24 = sbr.rel (0) target = $region17
    $region16: #{ode_block_forward.1} parent=1 // pred_region
      %25 = dma.done [#allocation3], 16
    $region17: #{ode_block_forward.1} parent=1 // pred_fallthru
      _
    %26 = sfence
    %v27 = vld [vmem:[%s1] sm:$0x1]
    %v28 = vld [vmem:[%s1 + $0x1] sm:$0x1]
    %v29 = vld [vmem:[%s1 + $0x2] sm:$0x1]
    %v30 = vld [vmem:[%s1 + $0x3] sm:$0x1]
    %v31 = vld [vmem:[%s1 + $0x4] sm:$0x1]
    %v32 = vld [vmem:[%s1] sm:$0xff]
    %v33 = vlaneseq
    %v34 = vshrl.u32 %v33, 7
    %v35 = vsub.s32 0, %v34
    %v36 = vrot.slane %v27, %v35
    %v37 = vlaneseq
    %v38 = vshrl.u32 %v37, 7
    %v39 = vsub.s32 0, %v38
    %v40 = vrot.slane %v28, %v39
    %v41 = vlaneseq
    %v42 = vshrl.u32 %v41, 7
    %v43 = vsub.s32 0, %v42
    %v44 = vrot.slane %v29, %v43
    %v45 = vlaneseq
    %v46 = vshrl.u32 %v45, 7
    %v47 = vsub.s32 0, %v46
    %v48 = vrot.slane %v30, %v47
    %s50 = vtos %v31
    %v51 = vstv %s50
    %54 = vset.pattern.permute.xlu0 120
    %55 = vperm.xlu0 %54, %v32
    %v56 = vpop.permute.xlu0 %55
    %58 = vset.pattern.permute.xlu0 121
    %59 = vperm.xlu0 %58, %v32
    %v60 = vpop.permute.xlu0 %59
    %62 = vrot.lane.b32.xlu0 %v32, 8
    %v63 = vpop.permute.xlu0 %62
    %65 = vrot.lane.b32.xlu0 %v32, 10
    %v66 = vpop.permute.xlu0 %65
    %68 = vrot.lane.b32.xlu0 %v32, 12
    %v69 = vpop.permute.xlu0 %68
    %vm71 = vcmask 7168
    %vm72 = vcmask 15360
    %v73 = vsel %vm72, %v63, %v66
    %vm74 = vcmask 23552
    %v75 = vsel %vm74, %v73, %v66
    %vm76 = vcmask 31744
    %v77 = vsel %vm76, %v75, %v69
    %vm78 = vcmask 39936
    %v79 = vsel %vm78, %v77, %v69
    %s80 = sld [smem:[#allocation2 + $0x1]]
    %s81 = sld [smem:[#allocation2]]
    %s82 = ssub.f32 %s80, %s81
    %s83 = smul.f32 %s82, 0.25
    %s84 = smul.f32 %s83, 0.5
    %s85 = smul.f32 %s83, 0.16666667
    %v86 = vmul.f32 %v56, %v36
    %v87 = vmul.f32 %v60, %v40
    %v88 = vadd.f32 %v86, %v87
    %v89 = vadd.f32 %v88, %v44
    %v90 = vtanh.pop %v89
    %v91 = vmul.f32 %v90, %v48
    %vm92 = vcmask 261120
    %v93 = vsel %vm92, %v91, 0.0
    %94 = vadd.xlane.f32.xlu0 %v93
    %v95 = vpop.xlane.xlu0 %94
    %v96 = vadd.f32 %v95, %v51
    %v97 = vstv %s84
    %v98 = vmul.f32 %v97, %v60
    %v99 = vadd.f32 %v56, %v98
    %v100 = vmul.f32 %v97, %v96
    %v101 = vadd.f32 %v60, %v100
    %v102 = vmul.f32 %v99, %v36
    %v103 = vmul.f32 %v101, %v40
    %v104 = vadd.f32 %v102, %v103
    %v105 = vadd.f32 %v104, %v44
    %v106 = vtanh.pop %v105
    %v107 = vmul.f32 %v106, %v48
    %v108 = vsel %vm92, %v107, 0.0
    %109 = vadd.xlane.f32.xlu0 %v108
    %v110 = vpop.xlane.xlu0 %109
    %v111 = vadd.f32 %v110, %v51
    %v112 = vmul.f32 %v97, %v101
    %v113 = vadd.f32 %v56, %v112
    %v114 = vmul.f32 %v97, %v111
    %v115 = vadd.f32 %v60, %v114
    %v116 = vmul.f32 %v113, %v36
    %v117 = vmul.f32 %v115, %v40
    %v118 = vadd.f32 %v116, %v117
    %v119 = vadd.f32 %v118, %v44
    %v120 = vtanh.pop %v119
    %v121 = vmul.f32 %v120, %v48
    %v122 = vsel %vm92, %v121, 0.0
    %123 = vadd.xlane.f32.xlu0 %v122
    %v124 = vpop.xlane.xlu0 %123
    %v125 = vadd.f32 %v124, %v51
    %v126 = vstv %s83
    %v127 = vmul.f32 %v126, %v115
    %v128 = vadd.f32 %v56, %v127
    %v129 = vmul.f32 %v126, %v125
    %v130 = vadd.f32 %v60, %v129
    %v131 = vmul.f32 %v128, %v36
    %v132 = vmul.f32 %v130, %v40
    %v133 = vadd.f32 %v131, %v132
    %v134 = vadd.f32 %v133, %v44
    %v135 = vtanh.pop %v134
    %v136 = vmul.f32 %v135, %v48
    %v137 = vsel %vm92, %v136, 0.0
    %138 = vadd.xlane.f32.xlu0 %v137
    %v139 = vpop.xlane.xlu0 %138
    %v140 = vadd.f32 %v139, %v51
    %v141 = vmul.f32 %v101, 2.0
    %v142 = vadd.f32 %v60, %v141
    %v143 = vmul.f32 %v115, 2.0
    %v144 = vadd.f32 %v142, %v143
    %v145 = vadd.f32 %v144, %v130
    %v146 = vstv %s85
    %v147 = vmul.f32 %v146, %v145
    %v148 = vadd.f32 %v56, %v147
    %v149 = vmul.f32 %v111, 2.0
    %v150 = vadd.f32 %v96, %v149
    %v151 = vmul.f32 %v125, 2.0
    %v152 = vadd.f32 %v150, %v151
    %v153 = vadd.f32 %v152, %v140
    %v154 = vmul.f32 %v146, %v153
    %v155 = vadd.f32 %v60, %v154
    %v156 = vmul.f32 %v148, %v36
    %v157 = vmul.f32 %v155, %v40
    %v158 = vadd.f32 %v156, %v157
    %v159 = vadd.f32 %v158, %v44
    %v160 = vtanh.pop %v159
    %v161 = vmul.f32 %v160, %v48
    %v162 = vsel %vm92, %v161, 0.0
    %163 = vadd.xlane.f32.xlu0 %v162
    %v164 = vpop.xlane.xlu0 %163
    %v165 = vadd.f32 %v164, %v51
    %v166 = vmul.f32 %v97, %v155
    %v167 = vadd.f32 %v148, %v166
    %v168 = vmul.f32 %v97, %v165
    %v169 = vadd.f32 %v155, %v168
    %v170 = vmul.f32 %v167, %v36
    %v171 = vmul.f32 %v169, %v40
    %v172 = vadd.f32 %v170, %v171
    %v173 = vadd.f32 %v172, %v44
    %v174 = vtanh.pop %v173
    %v175 = vmul.f32 %v174, %v48
    %v176 = vsel %vm92, %v175, 0.0
    %177 = vadd.xlane.f32.xlu0 %v176
    %v178 = vpop.xlane.xlu0 %177
    %v179 = vadd.f32 %v178, %v51
    %v180 = vmul.f32 %v97, %v169
    %v181 = vadd.f32 %v148, %v180
    %v182 = vmul.f32 %v97, %v179
    %v183 = vadd.f32 %v155, %v182
    %v184 = vmul.f32 %v181, %v36
    %v185 = vmul.f32 %v183, %v40
    %v186 = vadd.f32 %v184, %v185
    %v187 = vadd.f32 %v186, %v44
    %v188 = vtanh.pop %v187
    %v189 = vmul.f32 %v188, %v48
    %v190 = vsel %vm92, %v189, 0.0
    %191 = vadd.xlane.f32.xlu0 %v190
    %v192 = vpop.xlane.xlu0 %191
    %v193 = vadd.f32 %v192, %v51
    %v194 = vmul.f32 %v126, %v183
    %v195 = vadd.f32 %v148, %v194
    %v196 = vmul.f32 %v126, %v193
    %v197 = vadd.f32 %v155, %v196
    %v198 = vmul.f32 %v195, %v36
    %v199 = vmul.f32 %v197, %v40
    %v200 = vadd.f32 %v198, %v199
    %v201 = vadd.f32 %v200, %v44
    %v202 = vtanh.pop %v201
    %v203 = vmul.f32 %v202, %v48
    %v204 = vsel %vm92, %v203, 0.0
    %205 = vadd.xlane.f32.xlu0 %v204
    %v206 = vpop.xlane.xlu0 %205
    %v207 = vadd.f32 %v206, %v51
    %v208 = vmul.f32 %v169, 2.0
    %v209 = vadd.f32 %v155, %v208
    %v210 = vmul.f32 %v183, 2.0
    %v211 = vadd.f32 %v209, %v210
    %v212 = vadd.f32 %v211, %v197
    %v213 = vmul.f32 %v146, %v212
    %v214 = vadd.f32 %v148, %v213
    %v215 = vmul.f32 %v179, 2.0
    %v216 = vadd.f32 %v165, %v215
    %v217 = vmul.f32 %v193, 2.0
    %v218 = vadd.f32 %v216, %v217
    %v219 = vadd.f32 %v218, %v207
    %v220 = vmul.f32 %v146, %v219
    %v221 = vadd.f32 %v155, %v220
    %v222 = vmul.f32 %v214, %v36
    %v223 = vmul.f32 %v221, %v40
    %v224 = vadd.f32 %v222, %v223
    %v225 = vadd.f32 %v224, %v44
    %v226 = vtanh.pop %v225
    %v227 = vmul.f32 %v226, %v48
    %v228 = vsel %vm92, %v227, 0.0
    %229 = vadd.xlane.f32.xlu0 %v228
    %v230 = vpop.xlane.xlu0 %229
    %v231 = vadd.f32 %v230, %v51
    %v232 = vmul.f32 %v97, %v221
    %v233 = vadd.f32 %v214, %v232
    %v234 = vmul.f32 %v97, %v231
    %v235 = vadd.f32 %v221, %v234
    %v236 = vmul.f32 %v233, %v36
    %v237 = vmul.f32 %v235, %v40
    %v238 = vadd.f32 %v236, %v237
    %v239 = vadd.f32 %v238, %v44
    %v240 = vtanh.pop %v239
    %v241 = vmul.f32 %v240, %v48
    %v242 = vsel %vm92, %v241, 0.0
    %243 = vadd.xlane.f32.xlu0 %v242
    %v244 = vpop.xlane.xlu0 %243
    %v245 = vadd.f32 %v244, %v51
    %v246 = vmul.f32 %v97, %v235
    %v247 = vadd.f32 %v214, %v246
    %v248 = vmul.f32 %v97, %v245
    %v249 = vadd.f32 %v221, %v248
    %v250 = vmul.f32 %v247, %v36
    %v251 = vmul.f32 %v249, %v40
    %v252 = vadd.f32 %v250, %v251
    %v253 = vadd.f32 %v252, %v44
    %v254 = vtanh.pop %v253
    %v255 = vmul.f32 %v254, %v48
    %v256 = vsel %vm92, %v255, 0.0
    %257 = vadd.xlane.f32.xlu0 %v256
    %v258 = vpop.xlane.xlu0 %257
    %v259 = vadd.f32 %v258, %v51
    %v260 = vmul.f32 %v126, %v249
    %v261 = vadd.f32 %v214, %v260
    %v262 = vmul.f32 %v126, %v259
    %v263 = vadd.f32 %v221, %v262
    %v264 = vmul.f32 %v261, %v36
    %v265 = vmul.f32 %v263, %v40
    %v266 = vadd.f32 %v264, %v265
    %v267 = vadd.f32 %v266, %v44
    %v268 = vtanh.pop %v267
    %v269 = vmul.f32 %v268, %v48
    %v270 = vsel %vm92, %v269, 0.0
    %271 = vadd.xlane.f32.xlu0 %v270
    %v272 = vpop.xlane.xlu0 %271
    %v273 = vadd.f32 %v272, %v51
    %v274 = vmul.f32 %v235, 2.0
    %v275 = vadd.f32 %v221, %v274
    %v276 = vmul.f32 %v249, 2.0
    %v277 = vadd.f32 %v275, %v276
    %v278 = vadd.f32 %v277, %v263
    %v279 = vmul.f32 %v146, %v278
    %v280 = vadd.f32 %v214, %v279
    %v281 = vmul.f32 %v245, 2.0
    %v282 = vadd.f32 %v231, %v281
    %v283 = vmul.f32 %v259, 2.0
    %v284 = vadd.f32 %v282, %v283
    %v285 = vadd.f32 %v284, %v273
    %v286 = vmul.f32 %v146, %v285
    %v287 = vadd.f32 %v221, %v286
    %v288 = vmul.f32 %v280, %v36
    %v289 = vmul.f32 %v287, %v40
    %v290 = vadd.f32 %v288, %v289
    %v291 = vadd.f32 %v290, %v44
    %v292 = vtanh.pop %v291
    %v293 = vmul.f32 %v292, %v48
    %v294 = vsel %vm92, %v293, 0.0
    %295 = vadd.xlane.f32.xlu0 %v294
    %v296 = vpop.xlane.xlu0 %295
    %v297 = vadd.f32 %v296, %v51
    %v298 = vmul.f32 %v97, %v287
    %v299 = vadd.f32 %v280, %v298
    %v300 = vmul.f32 %v97, %v297
    %v301 = vadd.f32 %v287, %v300
    %v302 = vmul.f32 %v299, %v36
    %v303 = vmul.f32 %v301, %v40
    %v304 = vadd.f32 %v302, %v303
    %v305 = vadd.f32 %v304, %v44
    %v306 = vtanh.pop %v305
    %v307 = vmul.f32 %v306, %v48
    %v308 = vsel %vm92, %v307, 0.0
    %309 = vadd.xlane.f32.xlu0 %v308
    %v310 = vpop.xlane.xlu0 %309
    %v311 = vadd.f32 %v310, %v51
    %v312 = vmul.f32 %v97, %v301
    %v313 = vadd.f32 %v280, %v312
    %v314 = vmul.f32 %v97, %v311
    %v315 = vadd.f32 %v287, %v314
    %v316 = vmul.f32 %v313, %v36
    %v317 = vmul.f32 %v315, %v40
    %v318 = vadd.f32 %v316, %v317
    %v319 = vadd.f32 %v318, %v44
    %v320 = vtanh.pop %v319
    %v321 = vmul.f32 %v320, %v48
    %v322 = vsel %vm92, %v321, 0.0
    %323 = vadd.xlane.f32.xlu0 %v322
    %v324 = vpop.xlane.xlu0 %323
    %v325 = vadd.f32 %v324, %v51
    %v326 = vmul.f32 %v126, %v315
    %v327 = vadd.f32 %v280, %v326
    %v328 = vmul.f32 %v126, %v325
    %v329 = vadd.f32 %v287, %v328
    %v330 = vmul.f32 %v327, %v36
    %v331 = vmul.f32 %v329, %v40
    %v332 = vadd.f32 %v330, %v331
    %v333 = vadd.f32 %v332, %v44
    %v334 = vtanh.pop %v333
    %v335 = vmul.f32 %v334, %v48
    %v336 = vsel %vm92, %v335, 0.0
    %337 = vadd.xlane.f32.xlu0 %v336
    %v338 = vpop.xlane.xlu0 %337
    %v339 = vadd.f32 %v338, %v51
    %v340 = vmul.f32 %v301, 2.0
    %v341 = vadd.f32 %v287, %v340
    %v342 = vmul.f32 %v315, 2.0
    %v343 = vadd.f32 %v341, %v342
    %v344 = vadd.f32 %v343, %v329
    %v345 = vmul.f32 %v146, %v344
    %v346 = vadd.f32 %v280, %v345
    %v347 = vmul.f32 %v311, 2.0
    %v348 = vadd.f32 %v297, %v347
    %v349 = vmul.f32 %v325, 2.0
    %v350 = vadd.f32 %v348, %v349
    %v351 = vadd.f32 %v350, %v339
    %v352 = vmul.f32 %v146, %v351
    %v353 = vadd.f32 %v287, %v352
    %v354 = vsel %vm71, %v346, %v353
    %v355 = vsel %vm72, %v354, %v346
    %v356 = vsel %vm74, %v355, %v353
    %v357 = vsel %vm76, %v356, %v346
    %v358 = vsel %vm78, %v357, %v353
    %s359 = sld [smem:[#allocation2 + $0x2]]
    %s360 = ssub.f32 %s359, %s80
    %s361 = smul.f32 %s360, 0.25
    %s362 = smul.f32 %s361, 0.5
    %s363 = smul.f32 %s361, 0.16666667
    %v364 = vmul.f32 %v346, %v36
    %v365 = vmul.f32 %v353, %v40
    %v366 = vadd.f32 %v364, %v365
    %v367 = vadd.f32 %v366, %v44
    %v368 = vtanh.pop %v367
    %v369 = vmul.f32 %v368, %v48
    %v370 = vsel %vm92, %v369, 0.0
    %371 = vadd.xlane.f32.xlu0 %v370
    %v372 = vpop.xlane.xlu0 %371
    %v373 = vadd.f32 %v372, %v51
    %v374 = vstv %s362
    %v375 = vmul.f32 %v374, %v353
    %v376 = vadd.f32 %v346, %v375
    %v377 = vmul.f32 %v374, %v373
    %v378 = vadd.f32 %v353, %v377
    %v379 = vmul.f32 %v376, %v36
    %v380 = vmul.f32 %v378, %v40
    %v381 = vadd.f32 %v379, %v380
    %v382 = vadd.f32 %v381, %v44
    %v383 = vtanh.pop %v382
    %v384 = vmul.f32 %v383, %v48
    %v385 = vsel %vm92, %v384, 0.0
    %386 = vadd.xlane.f32.xlu0 %v385
    %v387 = vpop.xlane.xlu0 %386
    %v388 = vadd.f32 %v387, %v51
    %v389 = vmul.f32 %v374, %v378
    %v390 = vadd.f32 %v346, %v389
    %v391 = vmul.f32 %v374, %v388
    %v392 = vadd.f32 %v353, %v391
    %v393 = vmul.f32 %v390, %v36
    %v394 = vmul.f32 %v392, %v40
    %v395 = vadd.f32 %v393, %v394
    %v396 = vadd.f32 %v395, %v44
    %v397 = vtanh.pop %v396
    %v398 = vmul.f32 %v397, %v48
    %v399 = vsel %vm92, %v398, 0.0
    %400 = vadd.xlane.f32.xlu0 %v399
    %v401 = vpop.xlane.xlu0 %400
    %v402 = vadd.f32 %v401, %v51
    %v403 = vstv %s361
    %v404 = vmul.f32 %v403, %v392
    %v405 = vadd.f32 %v346, %v404
    %v406 = vmul.f32 %v403, %v402
    %v407 = vadd.f32 %v353, %v406
    %v408 = vmul.f32 %v405, %v36
    %v409 = vmul.f32 %v407, %v40
    %v410 = vadd.f32 %v408, %v409
    %v411 = vadd.f32 %v410, %v44
    %v412 = vtanh.pop %v411
    %v413 = vmul.f32 %v412, %v48
    %v414 = vsel %vm92, %v413, 0.0
    %415 = vadd.xlane.f32.xlu0 %v414
    %v416 = vpop.xlane.xlu0 %415
    %v417 = vadd.f32 %v416, %v51
    %v418 = vmul.f32 %v378, 2.0
    %v419 = vadd.f32 %v353, %v418
    %v420 = vmul.f32 %v392, 2.0
    %v421 = vadd.f32 %v419, %v420
    %v422 = vadd.f32 %v421, %v407
    %v423 = vstv %s363
    %v424 = vmul.f32 %v423, %v422
    %v425 = vadd.f32 %v346, %v424
    %v426 = vmul.f32 %v388, 2.0
    %v427 = vadd.f32 %v373, %v426
    %v428 = vmul.f32 %v402, 2.0
    %v429 = vadd.f32 %v427, %v428
    %v430 = vadd.f32 %v429, %v417
    %v431 = vmul.f32 %v423, %v430
    %v432 = vadd.f32 %v353, %v431
    %v433 = vmul.f32 %v425, %v36
    %v434 = vmul.f32 %v432, %v40
    %v435 = vadd.f32 %v433, %v434
    %v436 = vadd.f32 %v435, %v44
    %v437 = vtanh.pop %v436
    %v438 = vmul.f32 %v437, %v48
    %v439 = vsel %vm92, %v438, 0.0
    %440 = vadd.xlane.f32.xlu0 %v439
    %v441 = vpop.xlane.xlu0 %440
    %v442 = vadd.f32 %v441, %v51
    %v443 = vmul.f32 %v374, %v432
    %v444 = vadd.f32 %v425, %v443
    %v445 = vmul.f32 %v374, %v442
    %v446 = vadd.f32 %v432, %v445
    %v447 = vmul.f32 %v444, %v36
    %v448 = vmul.f32 %v446, %v40
    %v449 = vadd.f32 %v447, %v448
    %v450 = vadd.f32 %v449, %v44
    %v451 = vtanh.pop %v450
    %v452 = vmul.f32 %v451, %v48
    %v453 = vsel %vm92, %v452, 0.0
    %454 = vadd.xlane.f32.xlu0 %v453
    %v455 = vpop.xlane.xlu0 %454
    %v456 = vadd.f32 %v455, %v51
    %v457 = vmul.f32 %v374, %v446
    %v458 = vadd.f32 %v425, %v457
    %v459 = vmul.f32 %v374, %v456
    %v460 = vadd.f32 %v432, %v459
    %v461 = vmul.f32 %v458, %v36
    %v462 = vmul.f32 %v460, %v40
    %v463 = vadd.f32 %v461, %v462
    %v464 = vadd.f32 %v463, %v44
    %v465 = vtanh.pop %v464
    %v466 = vmul.f32 %v465, %v48
    %v467 = vsel %vm92, %v466, 0.0
    %468 = vadd.xlane.f32.xlu0 %v467
    %v469 = vpop.xlane.xlu0 %468
    %v470 = vadd.f32 %v469, %v51
    %v471 = vmul.f32 %v403, %v460
    %v472 = vadd.f32 %v425, %v471
    %v473 = vmul.f32 %v403, %v470
    %v474 = vadd.f32 %v432, %v473
    %v475 = vmul.f32 %v472, %v36
    %v476 = vmul.f32 %v474, %v40
    %v477 = vadd.f32 %v475, %v476
    %v478 = vadd.f32 %v477, %v44
    %v479 = vtanh.pop %v478
    %v480 = vmul.f32 %v479, %v48
    %v481 = vsel %vm92, %v480, 0.0
    %482 = vadd.xlane.f32.xlu0 %v481
    %v483 = vpop.xlane.xlu0 %482
    %v484 = vadd.f32 %v483, %v51
    %v485 = vmul.f32 %v446, 2.0
    %v486 = vadd.f32 %v432, %v485
    %v487 = vmul.f32 %v460, 2.0
    %v488 = vadd.f32 %v486, %v487
    %v489 = vadd.f32 %v488, %v474
    %v490 = vmul.f32 %v423, %v489
    %v491 = vadd.f32 %v425, %v490
    %v492 = vmul.f32 %v456, 2.0
    %v493 = vadd.f32 %v442, %v492
    %v494 = vmul.f32 %v470, 2.0
    %v495 = vadd.f32 %v493, %v494
    %v496 = vadd.f32 %v495, %v484
    %v497 = vmul.f32 %v423, %v496
    %v498 = vadd.f32 %v432, %v497
    %v499 = vmul.f32 %v491, %v36
    %v500 = vmul.f32 %v498, %v40
    %v501 = vadd.f32 %v499, %v500
    %v502 = vadd.f32 %v501, %v44
    %v503 = vtanh.pop %v502
    %v504 = vmul.f32 %v503, %v48
    %v505 = vsel %vm92, %v504, 0.0
    %506 = vadd.xlane.f32.xlu0 %v505
    %v507 = vpop.xlane.xlu0 %506
    %v508 = vadd.f32 %v507, %v51
    %v509 = vmul.f32 %v374, %v498
    %v510 = vadd.f32 %v491, %v509
    %v511 = vmul.f32 %v374, %v508
    %v512 = vadd.f32 %v498, %v511
    %v513 = vmul.f32 %v510, %v36
    %v514 = vmul.f32 %v512, %v40
    %v515 = vadd.f32 %v513, %v514
    %v516 = vadd.f32 %v515, %v44
    %v517 = vtanh.pop %v516
    %v518 = vmul.f32 %v517, %v48
    %v519 = vsel %vm92, %v518, 0.0
    %520 = vadd.xlane.f32.xlu0 %v519
    %v521 = vpop.xlane.xlu0 %520
    %v522 = vadd.f32 %v521, %v51
    %v523 = vmul.f32 %v374, %v512
    %v524 = vadd.f32 %v491, %v523
    %v525 = vmul.f32 %v374, %v522
    %v526 = vadd.f32 %v498, %v525
    %v527 = vmul.f32 %v524, %v36
    %v528 = vmul.f32 %v526, %v40
    %v529 = vadd.f32 %v527, %v528
    %v530 = vadd.f32 %v529, %v44
    %v531 = vtanh.pop %v530
    %v532 = vmul.f32 %v531, %v48
    %v533 = vsel %vm92, %v532, 0.0
    %534 = vadd.xlane.f32.xlu0 %v533
    %v535 = vpop.xlane.xlu0 %534
    %v536 = vadd.f32 %v535, %v51
    %v537 = vmul.f32 %v403, %v526
    %v538 = vadd.f32 %v491, %v537
    %v539 = vmul.f32 %v403, %v536
    %v540 = vadd.f32 %v498, %v539
    %v541 = vmul.f32 %v538, %v36
    %v542 = vmul.f32 %v540, %v40
    %v543 = vadd.f32 %v541, %v542
    %v544 = vadd.f32 %v543, %v44
    %v545 = vtanh.pop %v544
    %v546 = vmul.f32 %v545, %v48
    %v547 = vsel %vm92, %v546, 0.0
    %548 = vadd.xlane.f32.xlu0 %v547
    %v549 = vpop.xlane.xlu0 %548
    %v550 = vadd.f32 %v549, %v51
    %v551 = vmul.f32 %v512, 2.0
    %v552 = vadd.f32 %v498, %v551
    %v553 = vmul.f32 %v526, 2.0
    %v554 = vadd.f32 %v552, %v553
    %v555 = vadd.f32 %v554, %v540
    %v556 = vmul.f32 %v423, %v555
    %v557 = vadd.f32 %v491, %v556
    %v558 = vmul.f32 %v522, 2.0
    %v559 = vadd.f32 %v508, %v558
    %v560 = vmul.f32 %v536, 2.0
    %v561 = vadd.f32 %v559, %v560
    %v562 = vadd.f32 %v561, %v550
    %v563 = vmul.f32 %v423, %v562
    %v564 = vadd.f32 %v498, %v563
    %v565 = vmul.f32 %v557, %v36
    %v566 = vmul.f32 %v564, %v40
    %v567 = vadd.f32 %v565, %v566
    %v568 = vadd.f32 %v567, %v44
    %v569 = vtanh.pop %v568
    %v570 = vmul.f32 %v569, %v48
    %v571 = vsel %vm92, %v570, 0.0
    %572 = vadd.xlane.f32.xlu0 %v571
    %v573 = vpop.xlane.xlu0 %572
    %v574 = vadd.f32 %v573, %v51
    %v575 = vmul.f32 %v374, %v564
    %v576 = vadd.f32 %v557, %v575
    %v577 = vmul.f32 %v374, %v574
    %v578 = vadd.f32 %v564, %v577
    %v579 = vmul.f32 %v576, %v36
    %v580 = vmul.f32 %v578, %v40
    %v581 = vadd.f32 %v579, %v580
    %v582 = vadd.f32 %v581, %v44
    %v583 = vtanh.pop %v582
    %v584 = vmul.f32 %v583, %v48
    %v585 = vsel %vm92, %v584, 0.0
    %586 = vadd.xlane.f32.xlu0 %v585
    %v587 = vpop.xlane.xlu0 %586
    %v588 = vadd.f32 %v587, %v51
    %v589 = vmul.f32 %v374, %v578
    %v590 = vadd.f32 %v557, %v589
    %v591 = vmul.f32 %v374, %v588
    %v592 = vadd.f32 %v564, %v591
    %v593 = vmul.f32 %v590, %v36
    %v594 = vmul.f32 %v592, %v40
    %v595 = vadd.f32 %v593, %v594
    %v596 = vadd.f32 %v595, %v44
    %v597 = vtanh.pop %v596
    %v598 = vmul.f32 %v597, %v48
    %v599 = vsel %vm92, %v598, 0.0
    %600 = vadd.xlane.f32.xlu0 %v599
    %v601 = vpop.xlane.xlu0 %600
    %v602 = vadd.f32 %v601, %v51
    %v603 = vmul.f32 %v403, %v592
    %v604 = vadd.f32 %v557, %v603
    %v605 = vmul.f32 %v403, %v602
    %v606 = vadd.f32 %v564, %v605
    %v607 = vmul.f32 %v604, %v36
    %v608 = vmul.f32 %v606, %v40
    %v609 = vadd.f32 %v607, %v608
    %v610 = vadd.f32 %v609, %v44
    %v611 = vtanh.pop %v610
    %v612 = vmul.f32 %v611, %v48
    %v613 = vsel %vm92, %v612, 0.0
    %614 = vadd.xlane.f32.xlu0 %v613
    %v615 = vpop.xlane.xlu0 %614
    %v616 = vadd.f32 %v615, %v51
    %v617 = vmul.f32 %v578, 2.0
    %v618 = vadd.f32 %v564, %v617
    %v619 = vmul.f32 %v592, 2.0
    %v620 = vadd.f32 %v618, %v619
    %v621 = vadd.f32 %v620, %v606
    %v622 = vmul.f32 %v423, %v621
    %v623 = vadd.f32 %v557, %v622
    %v624 = vmul.f32 %v588, 2.0
    %v625 = vadd.f32 %v574, %v624
    %v626 = vmul.f32 %v602, 2.0
    %v627 = vadd.f32 %v625, %v626
    %v628 = vadd.f32 %v627, %v616
    %v629 = vmul.f32 %v423, %v628
    %v630 = vadd.f32 %v564, %v629
    %v631 = vsel %vm71, %v623, %v630
    %v632 = vsel %vm72, %v631, %v623
    %v633 = vsel %vm74, %v632, %v630
    %v634 = vsel %vm76, %v633, %v623
    %v635 = vsel %vm78, %v634, %v630
    %s636 = sld [smem:[#allocation2 + $0x3]]
    %s637 = ssub.f32 %s636, %s359
    %s638 = smul.f32 %s637, 0.25
    %s639 = smul.f32 %s638, 0.5
    %s640 = smul.f32 %s638, 0.16666667
    %v641 = vmul.f32 %v623, %v36
    %v642 = vmul.f32 %v630, %v40
    %v643 = vadd.f32 %v641, %v642
    %v644 = vadd.f32 %v643, %v44
    %v645 = vtanh.pop %v644
    %v646 = vmul.f32 %v645, %v48
    %v647 = vsel %vm92, %v646, 0.0
    %648 = vadd.xlane.f32.xlu0 %v647
    %v649 = vpop.xlane.xlu0 %648
    %v650 = vadd.f32 %v649, %v51
    %v651 = vstv %s639
    %v652 = vmul.f32 %v651, %v630
    %v653 = vadd.f32 %v623, %v652
    %v654 = vmul.f32 %v651, %v650
    %v655 = vadd.f32 %v630, %v654
    %v656 = vmul.f32 %v653, %v36
    %v657 = vmul.f32 %v655, %v40
    %v658 = vadd.f32 %v656, %v657
    %v659 = vadd.f32 %v658, %v44
    %v660 = vtanh.pop %v659
    %v661 = vmul.f32 %v660, %v48
    %v662 = vsel %vm92, %v661, 0.0
    %663 = vadd.xlane.f32.xlu0 %v662
    %v664 = vpop.xlane.xlu0 %663
    %v665 = vadd.f32 %v664, %v51
    %v666 = vmul.f32 %v651, %v655
    %v667 = vadd.f32 %v623, %v666
    %v668 = vmul.f32 %v651, %v665
    %v669 = vadd.f32 %v630, %v668
    %v670 = vmul.f32 %v667, %v36
    %v671 = vmul.f32 %v669, %v40
    %v672 = vadd.f32 %v670, %v671
    %v673 = vadd.f32 %v672, %v44
    %v674 = vtanh.pop %v673
    %v675 = vmul.f32 %v674, %v48
    %v676 = vsel %vm92, %v675, 0.0
    %677 = vadd.xlane.f32.xlu0 %v676
    %v678 = vpop.xlane.xlu0 %677
    %v679 = vadd.f32 %v678, %v51
    %v680 = vstv %s638
    %v681 = vmul.f32 %v680, %v669
    %v682 = vadd.f32 %v623, %v681
    %v683 = vmul.f32 %v680, %v679
    %v684 = vadd.f32 %v630, %v683
    %v685 = vmul.f32 %v682, %v36
    %v686 = vmul.f32 %v684, %v40
    %v687 = vadd.f32 %v685, %v686
    %v688 = vadd.f32 %v687, %v44
    %v689 = vtanh.pop %v688
    %v690 = vmul.f32 %v689, %v48
    %v691 = vsel %vm92, %v690, 0.0
    %692 = vadd.xlane.f32.xlu0 %v691
    %v693 = vpop.xlane.xlu0 %692
    %v694 = vadd.f32 %v693, %v51
    %v695 = vmul.f32 %v655, 2.0
    %v696 = vadd.f32 %v630, %v695
    %v697 = vmul.f32 %v669, 2.0
    %v698 = vadd.f32 %v696, %v697
    %v699 = vadd.f32 %v698, %v684
    %v700 = vstv %s640
    %v701 = vmul.f32 %v700, %v699
    %v702 = vadd.f32 %v623, %v701
    %v703 = vmul.f32 %v665, 2.0
    %v704 = vadd.f32 %v650, %v703
    %v705 = vmul.f32 %v679, 2.0
    %v706 = vadd.f32 %v704, %v705
    %v707 = vadd.f32 %v706, %v694
    %v708 = vmul.f32 %v700, %v707
    %v709 = vadd.f32 %v630, %v708
    %v710 = vmul.f32 %v702, %v36
    %v711 = vmul.f32 %v709, %v40
    %v712 = vadd.f32 %v710, %v711
    %v713 = vadd.f32 %v712, %v44
    %v714 = vtanh.pop %v713
    %v715 = vmul.f32 %v714, %v48
    %v716 = vsel %vm92, %v715, 0.0
    %717 = vadd.xlane.f32.xlu0 %v716
    %v718 = vpop.xlane.xlu0 %717
    %v719 = vadd.f32 %v718, %v51
    %v720 = vmul.f32 %v651, %v709
    %v721 = vadd.f32 %v702, %v720
    %v722 = vmul.f32 %v651, %v719
    %v723 = vadd.f32 %v709, %v722
    %v724 = vmul.f32 %v721, %v36
    %v725 = vmul.f32 %v723, %v40
    %v726 = vadd.f32 %v724, %v725
    %v727 = vadd.f32 %v726, %v44
    %v728 = vtanh.pop %v727
    %v729 = vmul.f32 %v728, %v48
    %v730 = vsel %vm92, %v729, 0.0
    %731 = vadd.xlane.f32.xlu0 %v730
    %v732 = vpop.xlane.xlu0 %731
    %v733 = vadd.f32 %v732, %v51
    %v734 = vmul.f32 %v651, %v723
    %v735 = vadd.f32 %v702, %v734
    %v736 = vmul.f32 %v651, %v733
    %v737 = vadd.f32 %v709, %v736
    %v738 = vmul.f32 %v735, %v36
    %v739 = vmul.f32 %v737, %v40
    %v740 = vadd.f32 %v738, %v739
    %v741 = vadd.f32 %v740, %v44
    %v742 = vtanh.pop %v741
    %v743 = vmul.f32 %v742, %v48
    %v744 = vsel %vm92, %v743, 0.0
    %745 = vadd.xlane.f32.xlu0 %v744
    %v746 = vpop.xlane.xlu0 %745
    %v747 = vadd.f32 %v746, %v51
    %v748 = vmul.f32 %v680, %v737
    %v749 = vadd.f32 %v702, %v748
    %v750 = vmul.f32 %v680, %v747
    %v751 = vadd.f32 %v709, %v750
    %v752 = vmul.f32 %v749, %v36
    %v753 = vmul.f32 %v751, %v40
    %v754 = vadd.f32 %v752, %v753
    %v755 = vadd.f32 %v754, %v44
    %v756 = vtanh.pop %v755
    %v757 = vmul.f32 %v756, %v48
    %v758 = vsel %vm92, %v757, 0.0
    %759 = vadd.xlane.f32.xlu0 %v758
    %v760 = vpop.xlane.xlu0 %759
    %v761 = vadd.f32 %v760, %v51
    %v762 = vmul.f32 %v723, 2.0
    %v763 = vadd.f32 %v709, %v762
    %v764 = vmul.f32 %v737, 2.0
    %v765 = vadd.f32 %v763, %v764
    %v766 = vadd.f32 %v765, %v751
    %v767 = vmul.f32 %v700, %v766
    %v768 = vadd.f32 %v702, %v767
    %v769 = vmul.f32 %v733, 2.0
    %v770 = vadd.f32 %v719, %v769
    %v771 = vmul.f32 %v747, 2.0
    %v772 = vadd.f32 %v770, %v771
    %v773 = vadd.f32 %v772, %v761
    %v774 = vmul.f32 %v700, %v773
    %v775 = vadd.f32 %v709, %v774
    %v776 = vmul.f32 %v768, %v36
    %v777 = vmul.f32 %v775, %v40
    %v778 = vadd.f32 %v776, %v777
    %v779 = vadd.f32 %v778, %v44
    %v780 = vtanh.pop %v779
    %v781 = vmul.f32 %v780, %v48
    %v782 = vsel %vm92, %v781, 0.0
    %783 = vadd.xlane.f32.xlu0 %v782
    %v784 = vpop.xlane.xlu0 %783
    %v785 = vadd.f32 %v784, %v51
    %v786 = vmul.f32 %v651, %v775
    %v787 = vadd.f32 %v768, %v786
    %v788 = vmul.f32 %v651, %v785
    %v789 = vadd.f32 %v775, %v788
    %v790 = vmul.f32 %v787, %v36
    %v791 = vmul.f32 %v789, %v40
    %v792 = vadd.f32 %v790, %v791
    %v793 = vadd.f32 %v792, %v44
    %v794 = vtanh.pop %v793
    %v795 = vmul.f32 %v794, %v48
    %v796 = vsel %vm92, %v795, 0.0
    %797 = vadd.xlane.f32.xlu0 %v796
    %v798 = vpop.xlane.xlu0 %797
    %v799 = vadd.f32 %v798, %v51
    %v800 = vmul.f32 %v651, %v789
    %v801 = vadd.f32 %v768, %v800
    %v802 = vmul.f32 %v651, %v799
    %v803 = vadd.f32 %v775, %v802
    %v804 = vmul.f32 %v801, %v36
    %v805 = vmul.f32 %v803, %v40
    %v806 = vadd.f32 %v804, %v805
    %v807 = vadd.f32 %v806, %v44
    %v808 = vtanh.pop %v807
    %v809 = vmul.f32 %v808, %v48
    %v810 = vsel %vm92, %v809, 0.0
    %811 = vadd.xlane.f32.xlu0 %v810
    %v812 = vpop.xlane.xlu0 %811
    %v813 = vadd.f32 %v812, %v51
    %v814 = vmul.f32 %v680, %v803
    %v815 = vadd.f32 %v768, %v814
    %v816 = vmul.f32 %v680, %v813
    %v817 = vadd.f32 %v775, %v816
    %v818 = vmul.f32 %v815, %v36
    %v819 = vmul.f32 %v817, %v40
    %v820 = vadd.f32 %v818, %v819
    %v821 = vadd.f32 %v820, %v44
    %v822 = vtanh.pop %v821
    %v823 = vmul.f32 %v822, %v48
    %v824 = vsel %vm92, %v823, 0.0
    %825 = vadd.xlane.f32.xlu0 %v824
    %v826 = vpop.xlane.xlu0 %825
    %v827 = vadd.f32 %v826, %v51
    %v828 = vmul.f32 %v789, 2.0
    %v829 = vadd.f32 %v775, %v828
    %v830 = vmul.f32 %v803, 2.0
    %v831 = vadd.f32 %v829, %v830
    %v832 = vadd.f32 %v831, %v817
    %v833 = vmul.f32 %v700, %v832
    %v834 = vadd.f32 %v768, %v833
    %v835 = vmul.f32 %v799, 2.0
    %v836 = vadd.f32 %v785, %v835
    %v837 = vmul.f32 %v813, 2.0
    %v838 = vadd.f32 %v836, %v837
    %v839 = vadd.f32 %v838, %v827
    %v840 = vmul.f32 %v700, %v839
    %v841 = vadd.f32 %v775, %v840
    %v842 = vmul.f32 %v834, %v36
    %v843 = vmul.f32 %v841, %v40
    %v844 = vadd.f32 %v842, %v843
    %v845 = vadd.f32 %v844, %v44
    %v846 = vtanh.pop %v845
    %v847 = vmul.f32 %v846, %v48
    %v848 = vsel %vm92, %v847, 0.0
    %849 = vadd.xlane.f32.xlu0 %v848
    %v850 = vpop.xlane.xlu0 %849
    %v851 = vadd.f32 %v850, %v51
    %v852 = vmul.f32 %v651, %v841
    %v853 = vadd.f32 %v834, %v852
    %v854 = vmul.f32 %v651, %v851
    %v855 = vadd.f32 %v841, %v854
    %v856 = vmul.f32 %v853, %v36
    %v857 = vmul.f32 %v855, %v40
    %v858 = vadd.f32 %v856, %v857
    %v859 = vadd.f32 %v858, %v44
    %v860 = vtanh.pop %v859
    %v861 = vmul.f32 %v860, %v48
    %v862 = vsel %vm92, %v861, 0.0
    %863 = vadd.xlane.f32.xlu0 %v862
    %v864 = vpop.xlane.xlu0 %863
    %v865 = vadd.f32 %v864, %v51
    %v866 = vmul.f32 %v651, %v855
    %v867 = vadd.f32 %v834, %v866
    %v868 = vmul.f32 %v651, %v865
    %v869 = vadd.f32 %v841, %v868
    %v870 = vmul.f32 %v867, %v36
    %v871 = vmul.f32 %v869, %v40
    %v872 = vadd.f32 %v870, %v871
    %v873 = vadd.f32 %v872, %v44
    %v874 = vtanh.pop %v873
    %v875 = vmul.f32 %v874, %v48
    %v876 = vsel %vm92, %v875, 0.0
    %877 = vadd.xlane.f32.xlu0 %v876
    %v878 = vpop.xlane.xlu0 %877
    %v879 = vadd.f32 %v878, %v51
    %v880 = vmul.f32 %v680, %v869
    %v881 = vadd.f32 %v834, %v880
    %v882 = vmul.f32 %v680, %v879
    %v883 = vadd.f32 %v841, %v882
    %v884 = vmul.f32 %v881, %v36
    %v885 = vmul.f32 %v883, %v40
    %v886 = vadd.f32 %v884, %v885
    %v887 = vadd.f32 %v886, %v44
    %v888 = vtanh.pop %v887
    %v889 = vmul.f32 %v888, %v48
    %v890 = vsel %vm92, %v889, 0.0
    %891 = vadd.xlane.f32.xlu0 %v890
    %v892 = vpop.xlane.xlu0 %891
    %v893 = vadd.f32 %v892, %v51
    %v894 = vmul.f32 %v855, 2.0
    %v895 = vadd.f32 %v841, %v894
    %v896 = vmul.f32 %v869, 2.0
    %v897 = vadd.f32 %v895, %v896
    %v898 = vadd.f32 %v897, %v883
    %v899 = vmul.f32 %v700, %v898
    %v900 = vadd.f32 %v834, %v899
    %v901 = vmul.f32 %v865, 2.0
    %v902 = vadd.f32 %v851, %v901
    %v903 = vmul.f32 %v879, 2.0
    %v904 = vadd.f32 %v902, %v903
    %v905 = vadd.f32 %v904, %v893
    %v906 = vmul.f32 %v700, %v905
    %v907 = vadd.f32 %v841, %v906
    %v908 = vsel %vm71, %v900, %v907
    %v909 = vsel %vm72, %v908, %v900
    %v910 = vsel %vm74, %v909, %v907
    %v911 = vsel %vm76, %v910, %v900
    %v912 = vsel %vm78, %v911, %v907
    %s913 = sld [smem:[#allocation2 + $0x4]]
    %s914 = ssub.f32 %s913, %s636
    %s915 = smul.f32 %s914, 0.25
    %s916 = smul.f32 %s915, 0.5
    %s917 = smul.f32 %s915, 0.16666667
    %v918 = vmul.f32 %v900, %v36
    %v919 = vmul.f32 %v907, %v40
    %v920 = vadd.f32 %v918, %v919
    %v921 = vadd.f32 %v920, %v44
    %v922 = vtanh.pop %v921
    %v923 = vmul.f32 %v922, %v48
    %v924 = vsel %vm92, %v923, 0.0
    %925 = vadd.xlane.f32.xlu0 %v924
    %v926 = vpop.xlane.xlu0 %925
    %v927 = vadd.f32 %v926, %v51
    %v928 = vstv %s916
    %v929 = vmul.f32 %v928, %v907
    %v930 = vadd.f32 %v900, %v929
    %v931 = vmul.f32 %v928, %v927
    %v932 = vadd.f32 %v907, %v931
    %v933 = vmul.f32 %v930, %v36
    %v934 = vmul.f32 %v932, %v40
    %v935 = vadd.f32 %v933, %v934
    %v936 = vadd.f32 %v935, %v44
    %v937 = vtanh.pop %v936
    %v938 = vmul.f32 %v937, %v48
    %v939 = vsel %vm92, %v938, 0.0
    %940 = vadd.xlane.f32.xlu0 %v939
    %v941 = vpop.xlane.xlu0 %940
    %v942 = vadd.f32 %v941, %v51
    %v943 = vmul.f32 %v928, %v932
    %v944 = vadd.f32 %v900, %v943
    %v945 = vmul.f32 %v928, %v942
    %v946 = vadd.f32 %v907, %v945
    %v947 = vmul.f32 %v944, %v36
    %v948 = vmul.f32 %v946, %v40
    %v949 = vadd.f32 %v947, %v948
    %v950 = vadd.f32 %v949, %v44
    %v951 = vtanh.pop %v950
    %v952 = vmul.f32 %v951, %v48
    %v953 = vsel %vm92, %v952, 0.0
    %954 = vadd.xlane.f32.xlu0 %v953
    %v955 = vpop.xlane.xlu0 %954
    %v956 = vadd.f32 %v955, %v51
    %v957 = vstv %s915
    %v958 = vmul.f32 %v957, %v946
    %v959 = vadd.f32 %v900, %v958
    %v960 = vmul.f32 %v957, %v956
    %v961 = vadd.f32 %v907, %v960
    %v962 = vmul.f32 %v959, %v36
    %v963 = vmul.f32 %v961, %v40
    %v964 = vadd.f32 %v962, %v963
    %v965 = vadd.f32 %v964, %v44
    %v966 = vtanh.pop %v965
    %v967 = vmul.f32 %v966, %v48
    %v968 = vsel %vm92, %v967, 0.0
    %969 = vadd.xlane.f32.xlu0 %v968
    %v970 = vpop.xlane.xlu0 %969
    %v971 = vadd.f32 %v970, %v51
    %v972 = vmul.f32 %v932, 2.0
    %v973 = vadd.f32 %v907, %v972
    %v974 = vmul.f32 %v946, 2.0
    %v975 = vadd.f32 %v973, %v974
    %v976 = vadd.f32 %v975, %v961
    %v977 = vstv %s917
    %v978 = vmul.f32 %v977, %v976
    %v979 = vadd.f32 %v900, %v978
    %v980 = vmul.f32 %v942, 2.0
    %v981 = vadd.f32 %v927, %v980
    %v982 = vmul.f32 %v956, 2.0
    %v983 = vadd.f32 %v981, %v982
    %v984 = vadd.f32 %v983, %v971
    %v985 = vmul.f32 %v977, %v984
    %v986 = vadd.f32 %v907, %v985
    %v987 = vmul.f32 %v979, %v36
    %v988 = vmul.f32 %v986, %v40
    %v989 = vadd.f32 %v987, %v988
    %v990 = vadd.f32 %v989, %v44
    %v991 = vtanh.pop %v990
    %v992 = vmul.f32 %v991, %v48
    %v993 = vsel %vm92, %v992, 0.0
    %994 = vadd.xlane.f32.xlu0 %v993
    %v995 = vpop.xlane.xlu0 %994
    %v996 = vadd.f32 %v995, %v51
    %v997 = vmul.f32 %v928, %v986
    %v998 = vadd.f32 %v979, %v997
    %v999 = vmul.f32 %v928, %v996
    %v1000 = vadd.f32 %v986, %v999
    %v1001 = vmul.f32 %v998, %v36
    %v1002 = vmul.f32 %v1000, %v40
    %v1003 = vadd.f32 %v1001, %v1002
    %v1004 = vadd.f32 %v1003, %v44
    %v1005 = vtanh.pop %v1004
    %v1006 = vmul.f32 %v1005, %v48
    %v1007 = vsel %vm92, %v1006, 0.0
    %1008 = vadd.xlane.f32.xlu0 %v1007
    %v1009 = vpop.xlane.xlu0 %1008
    %v1010 = vadd.f32 %v1009, %v51
    %v1011 = vmul.f32 %v928, %v1000
    %v1012 = vadd.f32 %v979, %v1011
    %v1013 = vmul.f32 %v928, %v1010
    %v1014 = vadd.f32 %v986, %v1013
    %v1015 = vmul.f32 %v1012, %v36
    %v1016 = vmul.f32 %v1014, %v40
    %v1017 = vadd.f32 %v1015, %v1016
    %v1018 = vadd.f32 %v1017, %v44
    %v1019 = vtanh.pop %v1018
    %v1020 = vmul.f32 %v1019, %v48
    %v1021 = vsel %vm92, %v1020, 0.0
    %1022 = vadd.xlane.f32.xlu0 %v1021
    %v1023 = vpop.xlane.xlu0 %1022
    %v1024 = vadd.f32 %v1023, %v51
    %v1025 = vmul.f32 %v957, %v1014
    %v1026 = vadd.f32 %v979, %v1025
    %v1027 = vmul.f32 %v957, %v1024
    %v1028 = vadd.f32 %v986, %v1027
    %v1029 = vmul.f32 %v1026, %v36
    %v1030 = vmul.f32 %v1028, %v40
    %v1031 = vadd.f32 %v1029, %v1030
    %v1032 = vadd.f32 %v1031, %v44
    %v1033 = vtanh.pop %v1032
    %v1034 = vmul.f32 %v1033, %v48
    %v1035 = vsel %vm92, %v1034, 0.0
    %1036 = vadd.xlane.f32.xlu0 %v1035
    %v1037 = vpop.xlane.xlu0 %1036
    %v1038 = vadd.f32 %v1037, %v51
    %v1039 = vmul.f32 %v1000, 2.0
    %v1040 = vadd.f32 %v986, %v1039
    %v1041 = vmul.f32 %v1014, 2.0
    %v1042 = vadd.f32 %v1040, %v1041
    %v1043 = vadd.f32 %v1042, %v1028
    %v1044 = vmul.f32 %v977, %v1043
    %v1045 = vadd.f32 %v979, %v1044
    %v1046 = vmul.f32 %v1010, 2.0
    %v1047 = vadd.f32 %v996, %v1046
    %v1048 = vmul.f32 %v1024, 2.0
    %v1049 = vadd.f32 %v1047, %v1048
    %v1050 = vadd.f32 %v1049, %v1038
    %v1051 = vmul.f32 %v977, %v1050
    %v1052 = vadd.f32 %v986, %v1051
    %v1053 = vmul.f32 %v1045, %v36
    %v1054 = vmul.f32 %v1052, %v40
    %v1055 = vadd.f32 %v1053, %v1054
    %v1056 = vadd.f32 %v1055, %v44
    %v1057 = vtanh.pop %v1056
    %v1058 = vmul.f32 %v1057, %v48
    %v1059 = vsel %vm92, %v1058, 0.0
    %1060 = vadd.xlane.f32.xlu0 %v1059
    %v1061 = vpop.xlane.xlu0 %1060
    %v1062 = vadd.f32 %v1061, %v51
    %v1063 = vmul.f32 %v928, %v1052
    %v1064 = vadd.f32 %v1045, %v1063
    %v1065 = vmul.f32 %v928, %v1062
    %v1066 = vadd.f32 %v1052, %v1065
    %v1067 = vmul.f32 %v1064, %v36
    %v1068 = vmul.f32 %v1066, %v40
    %v1069 = vadd.f32 %v1067, %v1068
    %v1070 = vadd.f32 %v1069, %v44
    %v1071 = vtanh.pop %v1070
    %v1072 = vmul.f32 %v1071, %v48
    %v1073 = vsel %vm92, %v1072, 0.0
    %1074 = vadd.xlane.f32.xlu0 %v1073
    %v1075 = vpop.xlane.xlu0 %1074
    %v1076 = vadd.f32 %v1075, %v51
    %v1077 = vmul.f32 %v928, %v1066
    %v1078 = vadd.f32 %v1045, %v1077
    %v1079 = vmul.f32 %v928, %v1076
    %v1080 = vadd.f32 %v1052, %v1079
    %v1081 = vmul.f32 %v1078, %v36
    %v1082 = vmul.f32 %v1080, %v40
    %v1083 = vadd.f32 %v1081, %v1082
    %v1084 = vadd.f32 %v1083, %v44
    %v1085 = vtanh.pop %v1084
    %v1086 = vmul.f32 %v1085, %v48
    %v1087 = vsel %vm92, %v1086, 0.0
    %1088 = vadd.xlane.f32.xlu0 %v1087
    %v1089 = vpop.xlane.xlu0 %1088
    %v1090 = vadd.f32 %v1089, %v51
    %v1091 = vmul.f32 %v957, %v1080
    %v1092 = vadd.f32 %v1045, %v1091
    %v1093 = vmul.f32 %v957, %v1090
    %v1094 = vadd.f32 %v1052, %v1093
    %v1095 = vmul.f32 %v1092, %v36
    %v1096 = vmul.f32 %v1094, %v40
    %v1097 = vadd.f32 %v1095, %v1096
    %v1098 = vadd.f32 %v1097, %v44
    %v1099 = vtanh.pop %v1098
    %v1100 = vmul.f32 %v1099, %v48
    %v1101 = vsel %vm92, %v1100, 0.0
    %1102 = vadd.xlane.f32.xlu0 %v1101
    %v1103 = vpop.xlane.xlu0 %1102
    %v1104 = vadd.f32 %v1103, %v51
    %v1105 = vmul.f32 %v1066, 2.0
    %v1106 = vadd.f32 %v1052, %v1105
    %v1107 = vmul.f32 %v1080, 2.0
    %v1108 = vadd.f32 %v1106, %v1107
    %v1109 = vadd.f32 %v1108, %v1094
    %v1110 = vmul.f32 %v977, %v1109
    %v1111 = vadd.f32 %v1045, %v1110
    %v1112 = vmul.f32 %v1076, 2.0
    %v1113 = vadd.f32 %v1062, %v1112
    %v1114 = vmul.f32 %v1090, 2.0
    %v1115 = vadd.f32 %v1113, %v1114
    %v1116 = vadd.f32 %v1115, %v1104
    %v1117 = vmul.f32 %v977, %v1116
    %v1118 = vadd.f32 %v1052, %v1117
    %v1119 = vmul.f32 %v1111, %v36
    %v1120 = vmul.f32 %v1118, %v40
    %v1121 = vadd.f32 %v1119, %v1120
    %v1122 = vadd.f32 %v1121, %v44
    %v1123 = vtanh.pop %v1122
    %v1124 = vmul.f32 %v1123, %v48
    %v1125 = vsel %vm92, %v1124, 0.0
    %1126 = vadd.xlane.f32.xlu0 %v1125
    %v1127 = vpop.xlane.xlu0 %1126
    %v1128 = vadd.f32 %v1127, %v51
    %v1129 = vmul.f32 %v928, %v1118
    %v1130 = vadd.f32 %v1111, %v1129
    %v1131 = vmul.f32 %v928, %v1128
    %v1132 = vadd.f32 %v1118, %v1131
    %v1133 = vmul.f32 %v1130, %v36
    %v1134 = vmul.f32 %v1132, %v40
    %v1135 = vadd.f32 %v1133, %v1134
    %v1136 = vadd.f32 %v1135, %v44
    %v1137 = vtanh.pop %v1136
    %v1138 = vmul.f32 %v1137, %v48
    %v1139 = vsel %vm92, %v1138, 0.0
    %1140 = vadd.xlane.f32.xlu0 %v1139
    %v1141 = vpop.xlane.xlu0 %1140
    %v1142 = vadd.f32 %v1141, %v51
    %v1143 = vmul.f32 %v928, %v1132
    %v1144 = vadd.f32 %v1111, %v1143
    %v1145 = vmul.f32 %v928, %v1142
    %v1146 = vadd.f32 %v1118, %v1145
    %v1147 = vmul.f32 %v1144, %v36
    %v1148 = vmul.f32 %v1146, %v40
    %v1149 = vadd.f32 %v1147, %v1148
    %v1150 = vadd.f32 %v1149, %v44
    %v1151 = vtanh.pop %v1150
    %v1152 = vmul.f32 %v1151, %v48
    %v1153 = vsel %vm92, %v1152, 0.0
    %1154 = vadd.xlane.f32.xlu0 %v1153
    %v1155 = vpop.xlane.xlu0 %1154
    %v1156 = vadd.f32 %v1155, %v51
    %v1157 = vmul.f32 %v957, %v1146
    %v1158 = vadd.f32 %v1111, %v1157
    %v1159 = vmul.f32 %v957, %v1156
    %v1160 = vadd.f32 %v1118, %v1159
    %v1161 = vmul.f32 %v1158, %v36
    %v1162 = vmul.f32 %v1160, %v40
    %v1163 = vadd.f32 %v1161, %v1162
    %v1164 = vadd.f32 %v1163, %v44
    %v1165 = vtanh.pop %v1164
    %v1166 = vmul.f32 %v1165, %v48
    %v1167 = vsel %vm92, %v1166, 0.0
    %1168 = vadd.xlane.f32.xlu0 %v1167
    %v1169 = vpop.xlane.xlu0 %1168
    %v1170 = vadd.f32 %v1169, %v51
    %v1171 = vmul.f32 %v1132, 2.0
    %v1172 = vadd.f32 %v1118, %v1171
    %v1173 = vmul.f32 %v1146, 2.0
    %v1174 = vadd.f32 %v1172, %v1173
    %v1175 = vadd.f32 %v1174, %v1160
    %v1176 = vmul.f32 %v977, %v1175
    %v1177 = vadd.f32 %v1111, %v1176
    %v1178 = vmul.f32 %v1142, 2.0
    %v1179 = vadd.f32 %v1128, %v1178
    %v1180 = vmul.f32 %v1156, 2.0
    %v1181 = vadd.f32 %v1179, %v1180
    %v1182 = vadd.f32 %v1181, %v1170
    %v1183 = vmul.f32 %v977, %v1182
    %v1184 = vadd.f32 %v1118, %v1183
    %v1185 = vsel %vm71, %v1177, %v1184
    %v1186 = vsel %vm72, %v1185, %v1177
    %v1187 = vsel %vm74, %v1186, %v1184
    %v1188 = vsel %vm76, %v1187, %v1177
    %v1189 = vsel %vm78, %v1188, %v1184
    %s1190 = sld [smem:[#allocation2 + $0x5]]
    %s1191 = ssub.f32 %s1190, %s913
    %s1192 = smul.f32 %s1191, 0.25
    %s1193 = smul.f32 %s1192, 0.5
    %s1194 = smul.f32 %s1192, 0.16666667
    %v1195 = vmul.f32 %v1177, %v36
    %v1196 = vmul.f32 %v1184, %v40
    %v1197 = vadd.f32 %v1195, %v1196
    %v1198 = vadd.f32 %v1197, %v44
    %v1199 = vtanh.pop %v1198
    %v1200 = vmul.f32 %v1199, %v48
    %v1201 = vsel %vm92, %v1200, 0.0
    %1202 = vadd.xlane.f32.xlu0 %v1201
    %v1203 = vpop.xlane.xlu0 %1202
    %v1204 = vadd.f32 %v1203, %v51
    %v1205 = vstv %s1193
    %v1206 = vmul.f32 %v1205, %v1184
    %v1207 = vadd.f32 %v1177, %v1206
    %v1208 = vmul.f32 %v1205, %v1204
    %v1209 = vadd.f32 %v1184, %v1208
    %v1210 = vmul.f32 %v1207, %v36
    %v1211 = vmul.f32 %v1209, %v40
    %v1212 = vadd.f32 %v1210, %v1211
    %v1213 = vadd.f32 %v1212, %v44
    %v1214 = vtanh.pop %v1213
    %v1215 = vmul.f32 %v1214, %v48
    %v1216 = vsel %vm92, %v1215, 0.0
    %1217 = vadd.xlane.f32.xlu0 %v1216
    %v1218 = vpop.xlane.xlu0 %1217
    %v1219 = vadd.f32 %v1218, %v51
    %v1220 = vmul.f32 %v1205, %v1209
    %v1221 = vadd.f32 %v1177, %v1220
    %v1222 = vmul.f32 %v1205, %v1219
    %v1223 = vadd.f32 %v1184, %v1222
    %v1224 = vmul.f32 %v1221, %v36
    %v1225 = vmul.f32 %v1223, %v40
    %v1226 = vadd.f32 %v1224, %v1225
    %v1227 = vadd.f32 %v1226, %v44
    %v1228 = vtanh.pop %v1227
    %v1229 = vmul.f32 %v1228, %v48
    %v1230 = vsel %vm92, %v1229, 0.0
    %1231 = vadd.xlane.f32.xlu0 %v1230
    %v1232 = vpop.xlane.xlu0 %1231
    %v1233 = vadd.f32 %v1232, %v51
    %v1234 = vstv %s1192
    %v1235 = vmul.f32 %v1234, %v1223
    %v1236 = vadd.f32 %v1177, %v1235
    %v1237 = vmul.f32 %v1234, %v1233
    %v1238 = vadd.f32 %v1184, %v1237
    %v1239 = vmul.f32 %v1236, %v36
    %v1240 = vmul.f32 %v1238, %v40
    %v1241 = vadd.f32 %v1239, %v1240
    %v1242 = vadd.f32 %v1241, %v44
    %v1243 = vtanh.pop %v1242
    %v1244 = vmul.f32 %v1243, %v48
    %v1245 = vsel %vm92, %v1244, 0.0
    %1246 = vadd.xlane.f32.xlu0 %v1245
    %v1247 = vpop.xlane.xlu0 %1246
    %v1248 = vadd.f32 %v1247, %v51
    %v1249 = vmul.f32 %v1209, 2.0
    %v1250 = vadd.f32 %v1184, %v1249
    %v1251 = vmul.f32 %v1223, 2.0
    %v1252 = vadd.f32 %v1250, %v1251
    %v1253 = vadd.f32 %v1252, %v1238
    %v1254 = vstv %s1194
    %v1255 = vmul.f32 %v1254, %v1253
    %v1256 = vadd.f32 %v1177, %v1255
    %v1257 = vmul.f32 %v1219, 2.0
    %v1258 = vadd.f32 %v1204, %v1257
    %v1259 = vmul.f32 %v1233, 2.0
    %v1260 = vadd.f32 %v1258, %v1259
    %v1261 = vadd.f32 %v1260, %v1248
    %v1262 = vmul.f32 %v1254, %v1261
    %v1263 = vadd.f32 %v1184, %v1262
    %v1264 = vmul.f32 %v1256, %v36
    %v1265 = vmul.f32 %v1263, %v40
    %v1266 = vadd.f32 %v1264, %v1265
    %v1267 = vadd.f32 %v1266, %v44
    %v1268 = vtanh.pop %v1267
    %v1269 = vmul.f32 %v1268, %v48
    %v1270 = vsel %vm92, %v1269, 0.0
    %1271 = vadd.xlane.f32.xlu0 %v1270
    %v1272 = vpop.xlane.xlu0 %1271
    %v1273 = vadd.f32 %v1272, %v51
    %v1274 = vmul.f32 %v1205, %v1263
    %v1275 = vadd.f32 %v1256, %v1274
    %v1276 = vmul.f32 %v1205, %v1273
    %v1277 = vadd.f32 %v1263, %v1276
    %v1278 = vmul.f32 %v1275, %v36
    %v1279 = vmul.f32 %v1277, %v40
    %v1280 = vadd.f32 %v1278, %v1279
    %v1281 = vadd.f32 %v1280, %v44
    %v1282 = vtanh.pop %v1281
    %v1283 = vmul.f32 %v1282, %v48
    %v1284 = vsel %vm92, %v1283, 0.0
    %1285 = vadd.xlane.f32.xlu0 %v1284
    %v1286 = vpop.xlane.xlu0 %1285
    %v1287 = vadd.f32 %v1286, %v51
    %v1288 = vmul.f32 %v1205, %v1277
    %v1289 = vadd.f32 %v1256, %v1288
    %v1290 = vmul.f32 %v1205, %v1287
    %v1291 = vadd.f32 %v1263, %v1290
    %v1292 = vmul.f32 %v1289, %v36
    %v1293 = vmul.f32 %v1291, %v40
    %v1294 = vadd.f32 %v1292, %v1293
    %v1295 = vadd.f32 %v1294, %v44
    %v1296 = vtanh.pop %v1295
    %v1297 = vmul.f32 %v1296, %v48
    %v1298 = vsel %vm92, %v1297, 0.0
    %1299 = vadd.xlane.f32.xlu0 %v1298
    %v1300 = vpop.xlane.xlu0 %1299
    %v1301 = vadd.f32 %v1300, %v51
    %v1302 = vmul.f32 %v1234, %v1291
    %v1303 = vadd.f32 %v1256, %v1302
    %v1304 = vmul.f32 %v1234, %v1301
    %v1305 = vadd.f32 %v1263, %v1304
    %v1306 = vmul.f32 %v1303, %v36
    %v1307 = vmul.f32 %v1305, %v40
    %v1308 = vadd.f32 %v1306, %v1307
    %v1309 = vadd.f32 %v1308, %v44
    %v1310 = vtanh.pop %v1309
    %v1311 = vmul.f32 %v1310, %v48
    %v1312 = vsel %vm92, %v1311, 0.0
    %1313 = vadd.xlane.f32.xlu0 %v1312
    %v1314 = vpop.xlane.xlu0 %1313
    %v1315 = vadd.f32 %v1314, %v51
    %v1316 = vmul.f32 %v1277, 2.0
    %v1317 = vadd.f32 %v1263, %v1316
    %v1318 = vmul.f32 %v1291, 2.0
    %v1319 = vadd.f32 %v1317, %v1318
    %v1320 = vadd.f32 %v1319, %v1305
    %v1321 = vmul.f32 %v1254, %v1320
    %v1322 = vadd.f32 %v1256, %v1321
    %v1323 = vmul.f32 %v1287, 2.0
    %v1324 = vadd.f32 %v1273, %v1323
    %v1325 = vmul.f32 %v1301, 2.0
    %v1326 = vadd.f32 %v1324, %v1325
    %v1327 = vadd.f32 %v1326, %v1315
    %v1328 = vmul.f32 %v1254, %v1327
    %v1329 = vadd.f32 %v1263, %v1328
    %v1330 = vmul.f32 %v1322, %v36
    %v1331 = vmul.f32 %v1329, %v40
    %v1332 = vadd.f32 %v1330, %v1331
    %v1333 = vadd.f32 %v1332, %v44
    %v1334 = vtanh.pop %v1333
    %v1335 = vmul.f32 %v1334, %v48
    %v1336 = vsel %vm92, %v1335, 0.0
    %1337 = vadd.xlane.f32.xlu0 %v1336
    %v1338 = vpop.xlane.xlu0 %1337
    %v1339 = vadd.f32 %v1338, %v51
    %v1340 = vmul.f32 %v1205, %v1329
    %v1341 = vadd.f32 %v1322, %v1340
    %v1342 = vmul.f32 %v1205, %v1339
    %v1343 = vadd.f32 %v1329, %v1342
    %v1344 = vmul.f32 %v1341, %v36
    %v1345 = vmul.f32 %v1343, %v40
    %v1346 = vadd.f32 %v1344, %v1345
    %v1347 = vadd.f32 %v1346, %v44
    %v1348 = vtanh.pop %v1347
    %v1349 = vmul.f32 %v1348, %v48
    %v1350 = vsel %vm92, %v1349, 0.0
    %1351 = vadd.xlane.f32.xlu0 %v1350
    %v1352 = vpop.xlane.xlu0 %1351
    %v1353 = vadd.f32 %v1352, %v51
    %v1354 = vmul.f32 %v1205, %v1343
    %v1355 = vadd.f32 %v1322, %v1354
    %v1356 = vmul.f32 %v1205, %v1353
    %v1357 = vadd.f32 %v1329, %v1356
    %v1358 = vmul.f32 %v1355, %v36
    %v1359 = vmul.f32 %v1357, %v40
    %v1360 = vadd.f32 %v1358, %v1359
    %v1361 = vadd.f32 %v1360, %v44
    %v1362 = vtanh.pop %v1361
    %v1363 = vmul.f32 %v1362, %v48
    %v1364 = vsel %vm92, %v1363, 0.0
    %1365 = vadd.xlane.f32.xlu0 %v1364
    %v1366 = vpop.xlane.xlu0 %1365
    %v1367 = vadd.f32 %v1366, %v51
    %v1368 = vmul.f32 %v1234, %v1357
    %v1369 = vadd.f32 %v1322, %v1368
    %v1370 = vmul.f32 %v1234, %v1367
    %v1371 = vadd.f32 %v1329, %v1370
    %v1372 = vmul.f32 %v1369, %v36
    %v1373 = vmul.f32 %v1371, %v40
    %v1374 = vadd.f32 %v1372, %v1373
    %v1375 = vadd.f32 %v1374, %v44
    %v1376 = vtanh.pop %v1375
    %v1377 = vmul.f32 %v1376, %v48
    %v1378 = vsel %vm92, %v1377, 0.0
    %1379 = vadd.xlane.f32.xlu0 %v1378
    %v1380 = vpop.xlane.xlu0 %1379
    %v1381 = vadd.f32 %v1380, %v51
    %v1382 = vmul.f32 %v1343, 2.0
    %v1383 = vadd.f32 %v1329, %v1382
    %v1384 = vmul.f32 %v1357, 2.0
    %v1385 = vadd.f32 %v1383, %v1384
    %v1386 = vadd.f32 %v1385, %v1371
    %v1387 = vmul.f32 %v1254, %v1386
    %v1388 = vadd.f32 %v1322, %v1387
    %v1389 = vmul.f32 %v1353, 2.0
    %v1390 = vadd.f32 %v1339, %v1389
    %v1391 = vmul.f32 %v1367, 2.0
    %v1392 = vadd.f32 %v1390, %v1391
    %v1393 = vadd.f32 %v1392, %v1381
    %v1394 = vmul.f32 %v1254, %v1393
    %v1395 = vadd.f32 %v1329, %v1394
    %v1396 = vmul.f32 %v1388, %v36
    %v1397 = vmul.f32 %v1395, %v40
    %v1398 = vadd.f32 %v1396, %v1397
    %v1399 = vadd.f32 %v1398, %v44
    %v1400 = vtanh.pop %v1399
    %v1401 = vmul.f32 %v1400, %v48
    %v1402 = vsel %vm92, %v1401, 0.0
    %1403 = vadd.xlane.f32.xlu0 %v1402
    %v1404 = vpop.xlane.xlu0 %1403
    %v1405 = vadd.f32 %v1404, %v51
    %v1406 = vmul.f32 %v1205, %v1395
    %v1407 = vadd.f32 %v1388, %v1406
    %v1408 = vmul.f32 %v1205, %v1405
    %v1409 = vadd.f32 %v1395, %v1408
    %v1410 = vmul.f32 %v1407, %v36
    %v1411 = vmul.f32 %v1409, %v40
    %v1412 = vadd.f32 %v1410, %v1411
    %v1413 = vadd.f32 %v1412, %v44
    %v1414 = vtanh.pop %v1413
    %v1415 = vmul.f32 %v1414, %v48
    %v1416 = vsel %vm92, %v1415, 0.0
    %1417 = vadd.xlane.f32.xlu0 %v1416
    %v1418 = vpop.xlane.xlu0 %1417
    %v1419 = vadd.f32 %v1418, %v51
    %v1420 = vmul.f32 %v1205, %v1409
    %v1421 = vadd.f32 %v1388, %v1420
    %v1422 = vmul.f32 %v1205, %v1419
    %v1423 = vadd.f32 %v1395, %v1422
    %v1424 = vmul.f32 %v1421, %v36
    %v1425 = vmul.f32 %v1423, %v40
    %v1426 = vadd.f32 %v1424, %v1425
    %v1427 = vadd.f32 %v1426, %v44
    %v1428 = vtanh.pop %v1427
    %v1429 = vmul.f32 %v1428, %v48
    %v1430 = vsel %vm92, %v1429, 0.0
    %1431 = vadd.xlane.f32.xlu0 %v1430
    %v1432 = vpop.xlane.xlu0 %1431
    %v1433 = vadd.f32 %v1432, %v51
    %v1434 = vmul.f32 %v1234, %v1423
    %v1435 = vadd.f32 %v1388, %v1434
    %v1436 = vmul.f32 %v1234, %v1433
    %v1437 = vadd.f32 %v1395, %v1436
    %v1438 = vmul.f32 %v1435, %v36
    %v1439 = vmul.f32 %v1437, %v40
    %v1440 = vadd.f32 %v1438, %v1439
    %v1441 = vadd.f32 %v1440, %v44
    %v1442 = vtanh.pop %v1441
    %v1443 = vmul.f32 %v1442, %v48
    %v1444 = vsel %vm92, %v1443, 0.0
    %1445 = vadd.xlane.f32.xlu0 %v1444
    %v1446 = vpop.xlane.xlu0 %1445
    %v1447 = vadd.f32 %v1446, %v51
    %v1448 = vmul.f32 %v1409, 2.0
    %v1449 = vadd.f32 %v1395, %v1448
    %v1450 = vmul.f32 %v1423, 2.0
    %v1451 = vadd.f32 %v1449, %v1450
    %v1452 = vadd.f32 %v1451, %v1437
    %v1453 = vmul.f32 %v1254, %v1452
    %v1454 = vadd.f32 %v1388, %v1453
    %v1455 = vmul.f32 %v1419, 2.0
    %v1456 = vadd.f32 %v1405, %v1455
    %v1457 = vmul.f32 %v1433, 2.0
    %v1458 = vadd.f32 %v1456, %v1457
    %v1459 = vadd.f32 %v1458, %v1447
    %v1460 = vmul.f32 %v1254, %v1459
    %v1461 = vadd.f32 %v1395, %v1460
    %v1462 = vsel %vm71, %v1454, %v1461
    %v1463 = vsel %vm72, %v1462, %v1454
    %v1464 = vsel %vm74, %v1463, %v1461
    %v1465 = vsel %vm76, %v1464, %v1454
    %v1466 = vsel %vm78, %v1465, %v1461
    %s1467 = sld [smem:[#allocation2 + $0x6]]
    %s1468 = ssub.f32 %s1467, %s1190
    %s1469 = smul.f32 %s1468, 0.25
    %s1470 = smul.f32 %s1469, 0.5
    %s1471 = smul.f32 %s1469, 0.16666667
    %v1472 = vmul.f32 %v1454, %v36
    %v1473 = vmul.f32 %v1461, %v40
    %v1474 = vadd.f32 %v1472, %v1473
    %v1475 = vadd.f32 %v1474, %v44
    %v1476 = vtanh.pop %v1475
    %v1477 = vmul.f32 %v1476, %v48
    %v1478 = vsel %vm92, %v1477, 0.0
    %1479 = vadd.xlane.f32.xlu0 %v1478
    %v1480 = vpop.xlane.xlu0 %1479
    %v1481 = vadd.f32 %v1480, %v51
    %v1482 = vstv %s1470
    %v1483 = vmul.f32 %v1482, %v1461
    %v1484 = vadd.f32 %v1454, %v1483
    %v1485 = vmul.f32 %v1482, %v1481
    %v1486 = vadd.f32 %v1461, %v1485
    %v1487 = vmul.f32 %v1484, %v36
    %v1488 = vmul.f32 %v1486, %v40
    %v1489 = vadd.f32 %v1487, %v1488
    %v1490 = vadd.f32 %v1489, %v44
    %v1491 = vtanh.pop %v1490
    %v1492 = vmul.f32 %v1491, %v48
    %v1493 = vsel %vm92, %v1492, 0.0
    %1494 = vadd.xlane.f32.xlu0 %v1493
    %v1495 = vpop.xlane.xlu0 %1494
    %v1496 = vadd.f32 %v1495, %v51
    %v1497 = vmul.f32 %v1482, %v1486
    %v1498 = vadd.f32 %v1454, %v1497
    %v1499 = vmul.f32 %v1482, %v1496
    %v1500 = vadd.f32 %v1461, %v1499
    %v1501 = vmul.f32 %v1498, %v36
    %v1502 = vmul.f32 %v1500, %v40
    %v1503 = vadd.f32 %v1501, %v1502
    %v1504 = vadd.f32 %v1503, %v44
    %v1505 = vtanh.pop %v1504
    %v1506 = vmul.f32 %v1505, %v48
    %v1507 = vsel %vm92, %v1506, 0.0
    %1508 = vadd.xlane.f32.xlu0 %v1507
    %v1509 = vpop.xlane.xlu0 %1508
    %v1510 = vadd.f32 %v1509, %v51
    %v1511 = vstv %s1469
    %v1512 = vmul.f32 %v1511, %v1500
    %v1513 = vadd.f32 %v1454, %v1512
    %v1514 = vmul.f32 %v1511, %v1510
    %v1515 = vadd.f32 %v1461, %v1514
    %v1516 = vmul.f32 %v1513, %v36
    %v1517 = vmul.f32 %v1515, %v40
    %v1518 = vadd.f32 %v1516, %v1517
    %v1519 = vadd.f32 %v1518, %v44
    %v1520 = vtanh.pop %v1519
    %v1521 = vmul.f32 %v1520, %v48
    %v1522 = vsel %vm92, %v1521, 0.0
    %1523 = vadd.xlane.f32.xlu0 %v1522
    %v1524 = vpop.xlane.xlu0 %1523
    %v1525 = vadd.f32 %v1524, %v51
    %v1526 = vmul.f32 %v1486, 2.0
    %v1527 = vadd.f32 %v1461, %v1526
    %v1528 = vmul.f32 %v1500, 2.0
    %v1529 = vadd.f32 %v1527, %v1528
    %v1530 = vadd.f32 %v1529, %v1515
    %v1531 = vstv %s1471
    %v1532 = vmul.f32 %v1531, %v1530
    %v1533 = vadd.f32 %v1454, %v1532
    %v1534 = vmul.f32 %v1496, 2.0
    %v1535 = vadd.f32 %v1481, %v1534
    %v1536 = vmul.f32 %v1510, 2.0
    %v1537 = vadd.f32 %v1535, %v1536
    %v1538 = vadd.f32 %v1537, %v1525
    %v1539 = vmul.f32 %v1531, %v1538
    %v1540 = vadd.f32 %v1461, %v1539
    %v1541 = vmul.f32 %v1533, %v36
    %v1542 = vmul.f32 %v1540, %v40
    %v1543 = vadd.f32 %v1541, %v1542
    %v1544 = vadd.f32 %v1543, %v44
    %v1545 = vtanh.pop %v1544
    %v1546 = vmul.f32 %v1545, %v48
    %v1547 = vsel %vm92, %v1546, 0.0
    %1548 = vadd.xlane.f32.xlu0 %v1547
    %v1549 = vpop.xlane.xlu0 %1548
    %v1550 = vadd.f32 %v1549, %v51
    %v1551 = vmul.f32 %v1482, %v1540
    %v1552 = vadd.f32 %v1533, %v1551
    %v1553 = vmul.f32 %v1482, %v1550
    %v1554 = vadd.f32 %v1540, %v1553
    %v1555 = vmul.f32 %v1552, %v36
    %v1556 = vmul.f32 %v1554, %v40
    %v1557 = vadd.f32 %v1555, %v1556
    %v1558 = vadd.f32 %v1557, %v44
    %v1559 = vtanh.pop %v1558
    %v1560 = vmul.f32 %v1559, %v48
    %v1561 = vsel %vm92, %v1560, 0.0
    %1562 = vadd.xlane.f32.xlu0 %v1561
    %v1563 = vpop.xlane.xlu0 %1562
    %v1564 = vadd.f32 %v1563, %v51
    %v1565 = vmul.f32 %v1482, %v1554
    %v1566 = vadd.f32 %v1533, %v1565
    %v1567 = vmul.f32 %v1482, %v1564
    %v1568 = vadd.f32 %v1540, %v1567
    %v1569 = vmul.f32 %v1566, %v36
    %v1570 = vmul.f32 %v1568, %v40
    %v1571 = vadd.f32 %v1569, %v1570
    %v1572 = vadd.f32 %v1571, %v44
    %v1573 = vtanh.pop %v1572
    %v1574 = vmul.f32 %v1573, %v48
    %v1575 = vsel %vm92, %v1574, 0.0
    %1576 = vadd.xlane.f32.xlu0 %v1575
    %v1577 = vpop.xlane.xlu0 %1576
    %v1578 = vadd.f32 %v1577, %v51
    %v1579 = vmul.f32 %v1511, %v1568
    %v1580 = vadd.f32 %v1533, %v1579
    %v1581 = vmul.f32 %v1511, %v1578
    %v1582 = vadd.f32 %v1540, %v1581
    %v1583 = vmul.f32 %v1580, %v36
    %v1584 = vmul.f32 %v1582, %v40
    %v1585 = vadd.f32 %v1583, %v1584
    %v1586 = vadd.f32 %v1585, %v44
    %v1587 = vtanh.pop %v1586
    %v1588 = vmul.f32 %v1587, %v48
    %v1589 = vsel %vm92, %v1588, 0.0
    %1590 = vadd.xlane.f32.xlu0 %v1589
    %v1591 = vpop.xlane.xlu0 %1590
    %v1592 = vadd.f32 %v1591, %v51
    %v1593 = vmul.f32 %v1554, 2.0
    %v1594 = vadd.f32 %v1540, %v1593
    %v1595 = vmul.f32 %v1568, 2.0
    %v1596 = vadd.f32 %v1594, %v1595
    %v1597 = vadd.f32 %v1596, %v1582
    %v1598 = vmul.f32 %v1531, %v1597
    %v1599 = vadd.f32 %v1533, %v1598
    %v1600 = vmul.f32 %v1564, 2.0
    %v1601 = vadd.f32 %v1550, %v1600
    %v1602 = vmul.f32 %v1578, 2.0
    %v1603 = vadd.f32 %v1601, %v1602
    %v1604 = vadd.f32 %v1603, %v1592
    %v1605 = vmul.f32 %v1531, %v1604
    %v1606 = vadd.f32 %v1540, %v1605
    %v1607 = vmul.f32 %v1599, %v36
    %v1608 = vmul.f32 %v1606, %v40
    %v1609 = vadd.f32 %v1607, %v1608
    %v1610 = vadd.f32 %v1609, %v44
    %v1611 = vtanh.pop %v1610
    %v1612 = vmul.f32 %v1611, %v48
    %v1613 = vsel %vm92, %v1612, 0.0
    %1614 = vadd.xlane.f32.xlu0 %v1613
    %v1615 = vpop.xlane.xlu0 %1614
    %v1616 = vadd.f32 %v1615, %v51
    %v1617 = vmul.f32 %v1482, %v1606
    %v1618 = vadd.f32 %v1599, %v1617
    %v1619 = vmul.f32 %v1482, %v1616
    %v1620 = vadd.f32 %v1606, %v1619
    %v1621 = vmul.f32 %v1618, %v36
    %v1622 = vmul.f32 %v1620, %v40
    %v1623 = vadd.f32 %v1621, %v1622
    %v1624 = vadd.f32 %v1623, %v44
    %v1625 = vtanh.pop %v1624
    %v1626 = vmul.f32 %v1625, %v48
    %v1627 = vsel %vm92, %v1626, 0.0
    %1628 = vadd.xlane.f32.xlu0 %v1627
    %v1629 = vpop.xlane.xlu0 %1628
    %v1630 = vadd.f32 %v1629, %v51
    %v1631 = vmul.f32 %v1482, %v1620
    %v1632 = vadd.f32 %v1599, %v1631
    %v1633 = vmul.f32 %v1482, %v1630
    %v1634 = vadd.f32 %v1606, %v1633
    %v1635 = vmul.f32 %v1632, %v36
    %v1636 = vmul.f32 %v1634, %v40
    %v1637 = vadd.f32 %v1635, %v1636
    %v1638 = vadd.f32 %v1637, %v44
    %v1639 = vtanh.pop %v1638
    %v1640 = vmul.f32 %v1639, %v48
    %v1641 = vsel %vm92, %v1640, 0.0
    %1642 = vadd.xlane.f32.xlu0 %v1641
    %v1643 = vpop.xlane.xlu0 %1642
    %v1644 = vadd.f32 %v1643, %v51
    %v1645 = vmul.f32 %v1511, %v1634
    %v1646 = vadd.f32 %v1599, %v1645
    %v1647 = vmul.f32 %v1511, %v1644
    %v1648 = vadd.f32 %v1606, %v1647
    %v1649 = vmul.f32 %v1646, %v36
    %v1650 = vmul.f32 %v1648, %v40
    %v1651 = vadd.f32 %v1649, %v1650
    %v1652 = vadd.f32 %v1651, %v44
    %v1653 = vtanh.pop %v1652
    %v1654 = vmul.f32 %v1653, %v48
    %v1655 = vsel %vm92, %v1654, 0.0
    %1656 = vadd.xlane.f32.xlu0 %v1655
    %v1657 = vpop.xlane.xlu0 %1656
    %v1658 = vadd.f32 %v1657, %v51
    %v1659 = vmul.f32 %v1620, 2.0
    %v1660 = vadd.f32 %v1606, %v1659
    %v1661 = vmul.f32 %v1634, 2.0
    %v1662 = vadd.f32 %v1660, %v1661
    %v1663 = vadd.f32 %v1662, %v1648
    %v1664 = vmul.f32 %v1531, %v1663
    %v1665 = vadd.f32 %v1599, %v1664
    %v1666 = vmul.f32 %v1630, 2.0
    %v1667 = vadd.f32 %v1616, %v1666
    %v1668 = vmul.f32 %v1644, 2.0
    %v1669 = vadd.f32 %v1667, %v1668
    %v1670 = vadd.f32 %v1669, %v1658
    %v1671 = vmul.f32 %v1531, %v1670
    %v1672 = vadd.f32 %v1606, %v1671
    %v1673 = vmul.f32 %v1665, %v36
    %v1674 = vmul.f32 %v1672, %v40
    %v1675 = vadd.f32 %v1673, %v1674
    %v1676 = vadd.f32 %v1675, %v44
    %v1677 = vtanh.pop %v1676
    %v1678 = vmul.f32 %v1677, %v48
    %v1679 = vsel %vm92, %v1678, 0.0
    %1680 = vadd.xlane.f32.xlu0 %v1679
    %v1681 = vpop.xlane.xlu0 %1680
    %v1682 = vadd.f32 %v1681, %v51
    %v1683 = vmul.f32 %v1482, %v1672
    %v1684 = vadd.f32 %v1665, %v1683
    %v1685 = vmul.f32 %v1482, %v1682
    %v1686 = vadd.f32 %v1672, %v1685
    %v1687 = vmul.f32 %v1684, %v36
    %v1688 = vmul.f32 %v1686, %v40
    %v1689 = vadd.f32 %v1687, %v1688
    %v1690 = vadd.f32 %v1689, %v44
    %v1691 = vtanh.pop %v1690
    %v1692 = vmul.f32 %v1691, %v48
    %v1693 = vsel %vm92, %v1692, 0.0
    %1694 = vadd.xlane.f32.xlu0 %v1693
    %v1695 = vpop.xlane.xlu0 %1694
    %v1696 = vadd.f32 %v1695, %v51
    %v1697 = vmul.f32 %v1482, %v1686
    %v1698 = vadd.f32 %v1665, %v1697
    %v1699 = vmul.f32 %v1482, %v1696
    %v1700 = vadd.f32 %v1672, %v1699
    %v1701 = vmul.f32 %v1698, %v36
    %v1702 = vmul.f32 %v1700, %v40
    %v1703 = vadd.f32 %v1701, %v1702
    %v1704 = vadd.f32 %v1703, %v44
    %v1705 = vtanh.pop %v1704
    %v1706 = vmul.f32 %v1705, %v48
    %v1707 = vsel %vm92, %v1706, 0.0
    %1708 = vadd.xlane.f32.xlu0 %v1707
    %v1709 = vpop.xlane.xlu0 %1708
    %v1710 = vadd.f32 %v1709, %v51
    %v1711 = vmul.f32 %v1511, %v1700
    %v1712 = vadd.f32 %v1665, %v1711
    %v1713 = vmul.f32 %v1511, %v1710
    %v1714 = vadd.f32 %v1672, %v1713
    %v1715 = vmul.f32 %v1712, %v36
    %v1716 = vmul.f32 %v1714, %v40
    %v1717 = vadd.f32 %v1715, %v1716
    %v1718 = vadd.f32 %v1717, %v44
    %v1719 = vtanh.pop %v1718
    %v1720 = vmul.f32 %v1719, %v48
    %v1721 = vsel %vm92, %v1720, 0.0
    %1722 = vadd.xlane.f32.xlu0 %v1721
    %v1723 = vpop.xlane.xlu0 %1722
    %v1724 = vadd.f32 %v1723, %v51
    %v1725 = vmul.f32 %v1686, 2.0
    %v1726 = vadd.f32 %v1672, %v1725
    %v1727 = vmul.f32 %v1700, 2.0
    %v1728 = vadd.f32 %v1726, %v1727
    %v1729 = vadd.f32 %v1728, %v1714
    %v1730 = vmul.f32 %v1531, %v1729
    %v1731 = vadd.f32 %v1665, %v1730
    %v1732 = vmul.f32 %v1696, 2.0
    %v1733 = vadd.f32 %v1682, %v1732
    %v1734 = vmul.f32 %v1710, 2.0
    %v1735 = vadd.f32 %v1733, %v1734
    %v1736 = vadd.f32 %v1735, %v1724
    %v1737 = vmul.f32 %v1531, %v1736
    %v1738 = vadd.f32 %v1672, %v1737
    %v1739 = vsel %vm71, %v1731, %v1738
    %v1740 = vsel %vm72, %v1739, %v1731
    %v1741 = vsel %vm74, %v1740, %v1738
    %v1742 = vsel %vm76, %v1741, %v1731
    %v1743 = vsel %vm78, %v1742, %v1738
    %s1744 = sld [smem:[#allocation2 + $0x7]]
    %s1745 = ssub.f32 %s1744, %s1467
    %s1746 = smul.f32 %s1745, 0.25
    %s1747 = smul.f32 %s1746, 0.5
    %s1748 = smul.f32 %s1746, 0.16666667
    %v1749 = vmul.f32 %v1731, %v36
    %v1750 = vmul.f32 %v1738, %v40
    %v1751 = vadd.f32 %v1749, %v1750
    %v1752 = vadd.f32 %v1751, %v44
    %v1753 = vtanh.pop %v1752
    %v1754 = vmul.f32 %v1753, %v48
    %v1755 = vsel %vm92, %v1754, 0.0
    %1756 = vadd.xlane.f32.xlu0 %v1755
    %v1757 = vpop.xlane.xlu0 %1756
    %v1758 = vadd.f32 %v1757, %v51
    %v1759 = vstv %s1747
    %v1760 = vmul.f32 %v1759, %v1738
    %v1761 = vadd.f32 %v1731, %v1760
    %v1762 = vmul.f32 %v1759, %v1758
    %v1763 = vadd.f32 %v1738, %v1762
    %v1764 = vmul.f32 %v1761, %v36
    %v1765 = vmul.f32 %v1763, %v40
    %v1766 = vadd.f32 %v1764, %v1765
    %v1767 = vadd.f32 %v1766, %v44
    %v1768 = vtanh.pop %v1767
    %v1769 = vmul.f32 %v1768, %v48
    %v1770 = vsel %vm92, %v1769, 0.0
    %1771 = vadd.xlane.f32.xlu0 %v1770
    %v1772 = vpop.xlane.xlu0 %1771
    %v1773 = vadd.f32 %v1772, %v51
    %v1774 = vmul.f32 %v1759, %v1763
    %v1775 = vadd.f32 %v1731, %v1774
    %v1776 = vmul.f32 %v1759, %v1773
    %v1777 = vadd.f32 %v1738, %v1776
    %v1778 = vmul.f32 %v1775, %v36
    %v1779 = vmul.f32 %v1777, %v40
    %v1780 = vadd.f32 %v1778, %v1779
    %v1781 = vadd.f32 %v1780, %v44
    %v1782 = vtanh.pop %v1781
    %v1783 = vmul.f32 %v1782, %v48
    %v1784 = vsel %vm92, %v1783, 0.0
    %1785 = vadd.xlane.f32.xlu0 %v1784
    %v1786 = vpop.xlane.xlu0 %1785
    %v1787 = vadd.f32 %v1786, %v51
    %v1788 = vstv %s1746
    %v1789 = vmul.f32 %v1788, %v1777
    %v1790 = vadd.f32 %v1731, %v1789
    %v1791 = vmul.f32 %v1788, %v1787
    %v1792 = vadd.f32 %v1738, %v1791
    %v1793 = vmul.f32 %v1790, %v36
    %v1794 = vmul.f32 %v1792, %v40
    %v1795 = vadd.f32 %v1793, %v1794
    %v1796 = vadd.f32 %v1795, %v44
    %v1797 = vtanh.pop %v1796
    %v1798 = vmul.f32 %v1797, %v48
    %v1799 = vsel %vm92, %v1798, 0.0
    %1800 = vadd.xlane.f32.xlu0 %v1799
    %v1801 = vpop.xlane.xlu0 %1800
    %v1802 = vadd.f32 %v1801, %v51
    %v1803 = vmul.f32 %v1763, 2.0
    %v1804 = vadd.f32 %v1738, %v1803
    %v1805 = vmul.f32 %v1777, 2.0
    %v1806 = vadd.f32 %v1804, %v1805
    %v1807 = vadd.f32 %v1806, %v1792
    %v1808 = vstv %s1748
    %v1809 = vmul.f32 %v1808, %v1807
    %v1810 = vadd.f32 %v1731, %v1809
    %v1811 = vmul.f32 %v1773, 2.0
    %v1812 = vadd.f32 %v1758, %v1811
    %v1813 = vmul.f32 %v1787, 2.0
    %v1814 = vadd.f32 %v1812, %v1813
    %v1815 = vadd.f32 %v1814, %v1802
    %v1816 = vmul.f32 %v1808, %v1815
    %v1817 = vadd.f32 %v1738, %v1816
    %v1818 = vmul.f32 %v1810, %v36
    %v1819 = vmul.f32 %v1817, %v40
    %v1820 = vadd.f32 %v1818, %v1819
    %v1821 = vadd.f32 %v1820, %v44
    %v1822 = vtanh.pop %v1821
    %v1823 = vmul.f32 %v1822, %v48
    %v1824 = vsel %vm92, %v1823, 0.0
    %1825 = vadd.xlane.f32.xlu0 %v1824
    %v1826 = vpop.xlane.xlu0 %1825
    %v1827 = vadd.f32 %v1826, %v51
    %v1828 = vmul.f32 %v1759, %v1817
    %v1829 = vadd.f32 %v1810, %v1828
    %v1830 = vmul.f32 %v1759, %v1827
    %v1831 = vadd.f32 %v1817, %v1830
    %v1832 = vmul.f32 %v1829, %v36
    %v1833 = vmul.f32 %v1831, %v40
    %v1834 = vadd.f32 %v1832, %v1833
    %v1835 = vadd.f32 %v1834, %v44
    %v1836 = vtanh.pop %v1835
    %v1837 = vmul.f32 %v1836, %v48
    %v1838 = vsel %vm92, %v1837, 0.0
    %1839 = vadd.xlane.f32.xlu0 %v1838
    %v1840 = vpop.xlane.xlu0 %1839
    %v1841 = vadd.f32 %v1840, %v51
    %v1842 = vmul.f32 %v1759, %v1831
    %v1843 = vadd.f32 %v1810, %v1842
    %v1844 = vmul.f32 %v1759, %v1841
    %v1845 = vadd.f32 %v1817, %v1844
    %v1846 = vmul.f32 %v1843, %v36
    %v1847 = vmul.f32 %v1845, %v40
    %v1848 = vadd.f32 %v1846, %v1847
    %v1849 = vadd.f32 %v1848, %v44
    %v1850 = vtanh.pop %v1849
    %v1851 = vmul.f32 %v1850, %v48
    %v1852 = vsel %vm92, %v1851, 0.0
    %1853 = vadd.xlane.f32.xlu0 %v1852
    %v1854 = vpop.xlane.xlu0 %1853
    %v1855 = vadd.f32 %v1854, %v51
    %v1856 = vmul.f32 %v1788, %v1845
    %v1857 = vadd.f32 %v1810, %v1856
    %v1858 = vmul.f32 %v1788, %v1855
    %v1859 = vadd.f32 %v1817, %v1858
    %v1860 = vmul.f32 %v1857, %v36
    %v1861 = vmul.f32 %v1859, %v40
    %v1862 = vadd.f32 %v1860, %v1861
    %v1863 = vadd.f32 %v1862, %v44
    %v1864 = vtanh.pop %v1863
    %v1865 = vmul.f32 %v1864, %v48
    %v1866 = vsel %vm92, %v1865, 0.0
    %1867 = vadd.xlane.f32.xlu0 %v1866
    %v1868 = vpop.xlane.xlu0 %1867
    %v1869 = vadd.f32 %v1868, %v51
    %v1870 = vmul.f32 %v1831, 2.0
    %v1871 = vadd.f32 %v1817, %v1870
    %v1872 = vmul.f32 %v1845, 2.0
    %v1873 = vadd.f32 %v1871, %v1872
    %v1874 = vadd.f32 %v1873, %v1859
    %v1875 = vmul.f32 %v1808, %v1874
    %v1876 = vadd.f32 %v1810, %v1875
    %v1877 = vmul.f32 %v1841, 2.0
    %v1878 = vadd.f32 %v1827, %v1877
    %v1879 = vmul.f32 %v1855, 2.0
    %v1880 = vadd.f32 %v1878, %v1879
    %v1881 = vadd.f32 %v1880, %v1869
    %v1882 = vmul.f32 %v1808, %v1881
    %v1883 = vadd.f32 %v1817, %v1882
    %v1884 = vmul.f32 %v1876, %v36
    %v1885 = vmul.f32 %v1883, %v40
    %v1886 = vadd.f32 %v1884, %v1885
    %v1887 = vadd.f32 %v1886, %v44
    %v1888 = vtanh.pop %v1887
    %v1889 = vmul.f32 %v1888, %v48
    %v1890 = vsel %vm92, %v1889, 0.0
    %1891 = vadd.xlane.f32.xlu0 %v1890
    %v1892 = vpop.xlane.xlu0 %1891
    %v1893 = vadd.f32 %v1892, %v51
    %v1894 = vmul.f32 %v1759, %v1883
    %v1895 = vadd.f32 %v1876, %v1894
    %v1896 = vmul.f32 %v1759, %v1893
    %v1897 = vadd.f32 %v1883, %v1896
    %v1898 = vmul.f32 %v1895, %v36
    %v1899 = vmul.f32 %v1897, %v40
    %v1900 = vadd.f32 %v1898, %v1899
    %v1901 = vadd.f32 %v1900, %v44
    %v1902 = vtanh.pop %v1901
    %v1903 = vmul.f32 %v1902, %v48
    %v1904 = vsel %vm92, %v1903, 0.0
    %1905 = vadd.xlane.f32.xlu0 %v1904
    %v1906 = vpop.xlane.xlu0 %1905
    %v1907 = vadd.f32 %v1906, %v51
    %v1908 = vmul.f32 %v1759, %v1897
    %v1909 = vadd.f32 %v1876, %v1908
    %v1910 = vmul.f32 %v1759, %v1907
    %v1911 = vadd.f32 %v1883, %v1910
    %v1912 = vmul.f32 %v1909, %v36
    %v1913 = vmul.f32 %v1911, %v40
    %v1914 = vadd.f32 %v1912, %v1913
    %v1915 = vadd.f32 %v1914, %v44
    %v1916 = vtanh.pop %v1915
    %v1917 = vmul.f32 %v1916, %v48
    %v1918 = vsel %vm92, %v1917, 0.0
    %1919 = vadd.xlane.f32.xlu0 %v1918
    %v1920 = vpop.xlane.xlu0 %1919
    %v1921 = vadd.f32 %v1920, %v51
    %v1922 = vmul.f32 %v1788, %v1911
    %v1923 = vadd.f32 %v1876, %v1922
    %v1924 = vmul.f32 %v1788, %v1921
    %v1925 = vadd.f32 %v1883, %v1924
    %v1926 = vmul.f32 %v1923, %v36
    %v1927 = vmul.f32 %v1925, %v40
    %v1928 = vadd.f32 %v1926, %v1927
    %v1929 = vadd.f32 %v1928, %v44
    %v1930 = vtanh.pop %v1929
    %v1931 = vmul.f32 %v1930, %v48
    %v1932 = vsel %vm92, %v1931, 0.0
    %1933 = vadd.xlane.f32.xlu0 %v1932
    %v1934 = vpop.xlane.xlu0 %1933
    %v1935 = vadd.f32 %v1934, %v51
    %v1936 = vmul.f32 %v1897, 2.0
    %v1937 = vadd.f32 %v1883, %v1936
    %v1938 = vmul.f32 %v1911, 2.0
    %v1939 = vadd.f32 %v1937, %v1938
    %v1940 = vadd.f32 %v1939, %v1925
    %v1941 = vmul.f32 %v1808, %v1940
    %v1942 = vadd.f32 %v1876, %v1941
    %v1943 = vmul.f32 %v1907, 2.0
    %v1944 = vadd.f32 %v1893, %v1943
    %v1945 = vmul.f32 %v1921, 2.0
    %v1946 = vadd.f32 %v1944, %v1945
    %v1947 = vadd.f32 %v1946, %v1935
    %v1948 = vmul.f32 %v1808, %v1947
    %v1949 = vadd.f32 %v1883, %v1948
    %v1950 = vmul.f32 %v1942, %v36
    %v1951 = vmul.f32 %v1949, %v40
    %v1952 = vadd.f32 %v1950, %v1951
    %v1953 = vadd.f32 %v1952, %v44
    %v1954 = vtanh.pop %v1953
    %v1955 = vmul.f32 %v1954, %v48
    %v1956 = vsel %vm92, %v1955, 0.0
    %1957 = vadd.xlane.f32.xlu0 %v1956
    %v1958 = vpop.xlane.xlu0 %1957
    %v1959 = vadd.f32 %v1958, %v51
    %v1960 = vmul.f32 %v1759, %v1949
    %v1961 = vadd.f32 %v1942, %v1960
    %v1962 = vmul.f32 %v1759, %v1959
    %v1963 = vadd.f32 %v1949, %v1962
    %v1964 = vmul.f32 %v1961, %v36
    %v1965 = vmul.f32 %v1963, %v40
    %v1966 = vadd.f32 %v1964, %v1965
    %v1967 = vadd.f32 %v1966, %v44
    %v1968 = vtanh.pop %v1967
    %v1969 = vmul.f32 %v1968, %v48
    %v1970 = vsel %vm92, %v1969, 0.0
    %1971 = vadd.xlane.f32.xlu0 %v1970
    %v1972 = vpop.xlane.xlu0 %1971
    %v1973 = vadd.f32 %v1972, %v51
    %v1974 = vmul.f32 %v1759, %v1963
    %v1975 = vadd.f32 %v1942, %v1974
    %v1976 = vmul.f32 %v1759, %v1973
    %v1977 = vadd.f32 %v1949, %v1976
    %v1978 = vmul.f32 %v1975, %v36
    %v1979 = vmul.f32 %v1977, %v40
    %v1980 = vadd.f32 %v1978, %v1979
    %v1981 = vadd.f32 %v1980, %v44
    %v1982 = vtanh.pop %v1981
    %v1983 = vmul.f32 %v1982, %v48
    %v1984 = vsel %vm92, %v1983, 0.0
    %1985 = vadd.xlane.f32.xlu0 %v1984
    %v1986 = vpop.xlane.xlu0 %1985
    %v1987 = vadd.f32 %v1986, %v51
    %v1988 = vmul.f32 %v1788, %v1977
    %v1989 = vadd.f32 %v1942, %v1988
    %v1990 = vmul.f32 %v1788, %v1987
    %v1991 = vadd.f32 %v1949, %v1990
    %v1992 = vmul.f32 %v1989, %v36
    %v1993 = vmul.f32 %v1991, %v40
    %v1994 = vadd.f32 %v1992, %v1993
    %v1995 = vadd.f32 %v1994, %v44
    %v1996 = vtanh.pop %v1995
    %v1997 = vmul.f32 %v1996, %v48
    %v1998 = vsel %vm92, %v1997, 0.0
    %1999 = vadd.xlane.f32.xlu0 %v1998
    %v2000 = vpop.xlane.xlu0 %1999
    %v2001 = vadd.f32 %v2000, %v51
    %v2002 = vmul.f32 %v1963, 2.0
    %v2003 = vadd.f32 %v1949, %v2002
    %v2004 = vmul.f32 %v1977, 2.0
    %v2005 = vadd.f32 %v2003, %v2004
    %v2006 = vadd.f32 %v2005, %v1991
    %v2007 = vmul.f32 %v1808, %v2006
    %v2008 = vadd.f32 %v1942, %v2007
    %v2009 = vmul.f32 %v1973, 2.0
    %v2010 = vadd.f32 %v1959, %v2009
    %v2011 = vmul.f32 %v1987, 2.0
    %v2012 = vadd.f32 %v2010, %v2011
    %v2013 = vadd.f32 %v2012, %v2001
    %v2014 = vmul.f32 %v1808, %v2013
    %v2015 = vadd.f32 %v1949, %v2014
    %v2016 = vsel %vm71, %v2008, %v2015
    %v2017 = vsel %vm72, %v2016, %v2008
    %v2018 = vsel %vm74, %v2017, %v2015
    %v2019 = vsel %vm76, %v2018, %v2008
    %v2020 = vsel %vm78, %v2019, %v2015
    %2022 = vrot.lane.b32.xlu0 %v358, 6
    %v2023 = vpop.permute.xlu0 %2022
    %2026 = vrot.lane.b32.xlu0 %v635, 12
    %v2027 = vpop.permute.xlu0 %2026
    %2030 = vrot.lane.b32.xlu0 %v912, 18
    %v2031 = vpop.permute.xlu0 %2030
    %2034 = vrot.lane.b32.xlu0 %v1189, 24
    %v2035 = vpop.permute.xlu0 %2034
    %2038 = vrot.lane.b32.xlu0 %v1466, 30
    %v2039 = vpop.permute.xlu0 %2038
    %2042 = vrot.lane.b32.xlu0 %v1743, 36
    %v2043 = vpop.permute.xlu0 %2042
    %2046 = vrot.lane.b32.xlu0 %v2020, 42
    %v2047 = vpop.permute.xlu0 %2046
    %vm2049 = vcmask 48128
    %v2050 = vsel %vm2049, %v79, %v2023
    %vm2051 = vcmask 97280
    %v2052 = vsel %vm2051, %v2050, %v2027
    %vm2053 = vcmask 146432
    %v2054 = vsel %vm2053, %v2052, %v2031
    %vm2055 = vcmask 195584
    %v2056 = vsel %vm2055, %v2054, %v2035
    %vm2057 = vcmask 244736
    %v2058 = vsel %vm2057, %v2056, %v2039
    %vm2059 = vcmask 293888
    %v2060 = vsel %vm2059, %v2058, %v2043
    %vm2061 = vcmask 343040
    %v2062 = vsel %vm2061, %v2060, %v2047
    %v2063 = vld [vmem:[%s2] sm:$0x1]
    %v2064 = vlaneseq
    %v2065 = vshrl.u32 %v2064, 7
    %v2066 = vlaneseq
    %v2067 = vshrl.u32 %v2066, 7
    %v2068 = vsub.s32 0, %v2067
    %v2069 = vrot.slane %v2063, %v2068
    %vm2070 = vcmp.eq.s32.totalorder %v2069, %v2065
    %v2071 = vsel %vm2070, 1, 0
    %v2072 = vcvt.s32.f32 %v2071
    %v2073 = vmul.f32 %v2072, %v2062
    %vm2074 = vcmask 392192
    %v2075 = vsel %vm2074, %v2073, 0.0
    %v2076 = vrot.slane %v2075, 4
    %v2077 = vadd.f32 %v2075, %v2076
    %v2078 = vrot.slane %v2077, 2
    %v2079 = vadd.f32 %v2077, %v2078
    %v2080 = vrot.slane %v2079, 1
    %v2081 = vadd.f32 %v2079, %v2080
    %vm2082 = vcmask 385024
    %2083 = vst.msk [vmem:[%s3] sm:$0x1] %vm2082, %v2081
    // Predicated region
    $region18: #{ode_block_forward.1} parent=1 // pred_check
      _
    $region19: #{ode_block_forward.1} parent=1 // pred_check_branch
      %2085 = sbr.rel (0) target = $region21
    $region20: #{ode_block_forward.1} parent=1 // pred_region
      _
    $region21: #{ode_block_forward.1} parent=1 // pred_fallthru
      _
    // Predicated region
    $region22: #{ode_block_forward.1} parent=1 // pred_check
      _
    $region23: #{ode_block_forward.1} parent=1 // pred_check_branch
      %2087 = sbr.rel (0) target = $region25
    $region24: #{ode_block_forward.1} parent=1 // pred_region
      _
    $region25: #{ode_block_forward.1} parent=1 // pred_fallthru
      _
    %2088 = vsyncpa [#allocation3], 1

</llo_original>
